<compile_context>
chip_gen: v7x
topology: tpu7x:2x2x1
jax: 0.10.0
libtpu: 0.0.40
codegen_flags: <defaults>
</compile_context>

<pallas_src>
import functools

import jax
import jax.numpy as jnp
import numpy as np
from jax.experimental import pallas as pl
from jax.experimental.pallas import tpu as pltpu


def _gcn_kernel(mask_ref, x_ref, w_ref, scale_ref, shift_ref, o_ref,
                s_buf, prev_last, *, width, tile_h, n_tiles, has_relu, precision):
    """Grid step (n, j), j in [0, n_tiles]:
       - j < n_tiles : s_j = W-pooled(ReLU(BN(conv1x1(x tile j)))) written into s_buf[j%2]
       - j > 0       : emit the fully (3x3) pooled output for row tile j-1 using
                       s_{j-1} (other s_buf slot), the carried last row of s_{j-2}
                       (prev_last, zeros at the image top) and the first row of s_j
                       (bottom halo, gated off at the image bottom).
       The pool's 1/9 is pre-folded into scale/shift on the host."""
    j = pl.program_id(1)
    slot = j % 2
    tile_s = tile_h * width

    # ---- top-of-image boundary: the row above tile 0 is zero padding.
    @pl.when(j == 0)
    def _():
        prev_last[...] = jnp.zeros_like(prev_last)

    # ---- conv1x1 (+ folded bias/BN/ReLU/(1/9)) + W-direction pool for tile j.
    #      Skipped on the final emit-only grid step: no wasted matmul.
    @pl.when(j < n_tiles)
    def _():
        z = jnp.dot(w_ref[...], x_ref[0],
                    preferred_element_type=jnp.float32,
                    precision=precision)                          # (Cout, TILE_S) f32
        z = z * scale_ref[...] + shift_ref[...]                   # bias + eval BN + 1/9
        if has_relu:
            z = jnp.maximum(z, 0.0)
        m = mask_ref[...]                                         # (2, TILE_S) 0/1 masks
        # left / right neighbours via lane-shift concatenates; the masks zero both the
        # true image borders and the bogus row-wrap lanes of the flattened layout.
        left = jnp.concatenate([z[:, :1], z[:, :tile_s - 1]], axis=1)
        right = jnp.concatenate([z[:, 1:], z[:, tile_s - 1:]], axis=1)
        s_buf[slot] = z + left * m[0:1] + right * m[1:2]

    # ---- emit row tile j-1 with a single unmasked, lane-dense store.
    @pl.when(j > 0)
    def _():
        sp = s_buf[1 - slot]                                      # s_{j-1}, (Cout, TILE_S)
        top_row = prev_last[...]                                  # last row of s_{j-2} (or 0)
        if n_tiles > 1:
            gate = (j < n_tiles).astype(jnp.float32)              # 0 at the image bottom
            bot_row = s_buf[slot, :, 0:width] * gate              # first row of s_j
        else:
            bot_row = jnp.zeros_like(top_row)
        if tile_h > 1:
            # "row above" / "row below" for every row of the tile, halos included.
            above = jnp.concatenate([top_row, sp[:, :tile_s - width]], axis=1)
            below = jnp.concatenate([sp[:, width:], bot_row], axis=1)
        else:
            above, below = top_row, bot_row
        o_ref[0] = (sp + above + below).astype(o_ref.dtype)
        prev_last[...] = sp[:, tile_s - width:]                   # carry for step j+1


def _pick_tile_h(H, W, cin, cout, in_isz, out_isz, budget_bytes):
    """Largest row count that divides H, keeps the flattened lane dim a multiple of 128
    and keeps the per-step working set (double-buffered x/out tiles, the s carry and
    in-body f32 temporaries) around `budget_bytes`."""
    per_row = W * (2 * cin * in_isz          # x tile (double buffered)
                   + 2 * cout * out_isz      # out tile (double buffered)
                   + 2 * cout * 4            # s_buf carry (2 slots)
                   + 3 * cout * 4)           # z / shifted copies / acc temporaries
    target = max(1, budget_bytes // per_row)
    for cand in range(min(H, target), 0, -1):
        if H % cand == 0 and (cand * W) % 128 == 0:
            return cand
    # nothing admissible under the budget: take the smallest admissible tile above it
    for cand in range(min(H, target) + 1, H + 1):
        if H % cand == 0 and (cand * W) % 128 == 0:
            return cand
    return H  # single full-spatial tile (block == full array dims is always legal)


def gcn_block_forward(x_nchw, conv_w, conv_b, gamma, beta, run_mean, run_var,
                      *, eps=1e-5, has_bn=True, has_relu=True,
                      tile_h=None, out_dtype=None, precision=None,
                      tile_budget_bytes=6 << 20):
    """x_nchw: (N, Cin, H, W).  conv_w: (Cout, Cin, 1, 1) as in nn.Conv2d(ks=1).

    The activation dtype of x is used as the MXU input dtype (pass bf16 data for the
    bf16 path — no wrapper-side casts of x).  out_dtype defaults to x's dtype."""
    N, Cin, H, W = x_nchw.shape
    Cout = conv_w.shape[0]
    S = H * W
    in_dtype = x_nchw.dtype
    if out_dtype is None:
        out_dtype = in_dtype
    in_isz = jnp.dtype(in_dtype).itemsize
    out_isz = jnp.dtype(out_dtype).itemsize

    # Free, contiguous reshape only (no transposes, no activation casts).
    x = x_nchw.reshape(N, Cin, S)
    w = conv_w.reshape(Cout, Cin).astype(in_dtype)

    # Fold conv bias + eval-mode BN + the pool's 1/9 into per-channel scale/shift.
    inv9 = 1.0 / 9.0
    conv_b = conv_b.astype(jnp.float32)
    if has_bn:
        s_bn = gamma.astype(jnp.float32) / jnp.sqrt(run_var.astype(jnp.float32) + eps)
        scale = s_bn * inv9
        shift = ((conv_b - run_mean.astype(jnp.float32)) * s_bn
                 + beta.astype(jnp.float32)) * inv9
    else:
        scale = jnp.full((Cout,), inv9, jnp.float32)
        shift = conv_b * inv9
    scale = scale.reshape(Cout, 1)
    shift = shift.reshape(Cout, 1)

    if tile_h is None:
        tile_h = _pick_tile_h(H, W, Cin, Cout, in_isz, out_isz, tile_budget_bytes)
    assert H % tile_h == 0, "tile_h must divide H"
    n_tiles = H // tile_h
    tile_s = tile_h * W

    # 0/1 masks for the W-direction pool (also zero the flattened row-wrap lanes).
    col = np.arange(tile_s) % W
    masks = jnp.asarray(np.stack([col > 0, col < W - 1]).astype(np.float32))

    kernel = functools.partial(_gcn_kernel, width=W, tile_h=tile_h,
                               n_tiles=n_tiles, has_relu=has_relu,
                               precision=precision)

    per_step = (2 * Cin * tile_s * in_isz            # double-buffered x tile
                + 2 * Cout * tile_s * out_isz        # double-buffered out tile
                + 2 * Cout * tile_s * 4              # s_buf carry (2 slots)
                + 3 * Cout * tile_s * 4              # in-body f32 temporaries
                + Cout * Cin * in_isz                # resident weights
                + Cout * W * 4                       # prev_last carry
                + 2 * tile_s * 4 + 2 * Cout * 4)     # masks + scale/shift
    if per_step > (100 << 20):
        raise ValueError(f"row tile of {tile_h} rows needs ~{per_step >> 20} MiB of VMEM; "
                         "pick a smaller tile_h (or pad W) so a smaller tile is admissible")
    # Generous, but capped below v7x's 64 MiB physical VMEM (headroom for Mosaic scratch).
    vmem_limit = int(min(48 << 20, max(16 << 20, per_step + per_step // 2)))

    cost = pl.CostEstimate(
        flops=2 * N * Cout * Cin * S + 8 * N * Cout * S,
        transcendentals=0,
        bytes_accessed=(N * Cin * S * in_isz + N * Cout * S * out_isz
                        + Cout * Cin * in_isz + 2 * Cout * 4),
    )

    out_flat = pl.pallas_call(
        kernel,
        out_shape=jax.ShapeDtypeStruct((N, Cout, S), out_dtype),
        grid=(N, n_tiles + 1),
        in_specs=[
            pl.BlockSpec((2, tile_s), lambda n, j: (0, 0)),                  # pool masks
            pl.BlockSpec((1, Cin, tile_s),
                         lambda n, j: (n, 0, jnp.minimum(j, n_tiles - 1))),  # x row tile
            pl.BlockSpec((Cout, Cin), lambda n, j: (0, 0)),                  # weights
            pl.BlockSpec((Cout, 1), lambda n, j: (0, 0)),                    # scale (incl. 1/9)
            pl.BlockSpec((Cout, 1), lambda n, j: (0, 0)),                    # shift (incl. 1/9)
        ],
        out_specs=pl.BlockSpec((1, Cout, tile_s),
                               lambda n, j: (n, 0, jnp.maximum(j - 1, 0))),
        scratch_shapes=[pltpu.VMEM((2, Cout, tile_s), jnp.float32),   # s_j / s_{j-1} carry
                        pltpu.VMEM((Cout, W), jnp.float32)],          # last row of s_{j-2}
        compiler_params=pltpu.CompilerParams(
            dimension_semantics=("parallel", "arbitrary"),
            vmem_limit_bytes=vmem_limit),
        cost_estimate=cost,
    )(masks, x, w, scale, shift)

    return out_flat.reshape(N, Cout, H, W)


def _reference_forward(x_nchw, conv_w, conv_b, gamma, beta, run_mean, run_var,
                       eps=1e-5, has_bn=True, has_relu=True):
    # Pure-JAX reference mirroring the PyTorch module (BN in eval mode).
    Cout, Cin = conv_w.shape[0], conv_w.shape[1]
    z = jnp.einsum('nchw,oc->nohw', x_nchw.astype(jnp.float32), conv_w.reshape(Cout, Cin),
                   precision=jax.lax.Precision.HIGHEST)
    z = z + conv_b[None, :, None, None]
    if has_bn:
        z = (z - run_mean[None, :, None, None]) / jnp.sqrt(run_var[None, :, None, None] + eps)
        z = z * gamma[None, :, None, None] + beta[None, :, None, None]
    if has_relu:
        z = jnp.maximum(z, 0.0)
    zp = jnp.pad(z, ((0, 0), (0, 0), (1, 1), (1, 1)))
    N, C, H, W = z.shape
    acc = jnp.zeros_like(z)
    for dh in range(3):
        for dw in range(3):
            acc = acc + zp[:, :, dh:dh + H, dw:dw + W]
    return acc / 9.0


if __name__ == "__main__":
    # Channels from the GCNBlock defaults (146), small spatial/batch for the test.
    N, Cin, Cout, H, W = 2, 146, 146, 16, 16

    key = jax.random.PRNGKey(0)
    k_x, k_w, k_b, k_g, k_be, k_m, k_v = jax.random.split(key, 7)

    x = jax.random.normal(k_x, (N, Cin, H, W), dtype=jnp.float32)
    conv_w = jax.random.normal(k_w, (Cout, Cin, 1, 1), dtype=jnp.float32) * 0.1
    conv_b = jax.random.normal(k_b, (Cout,), dtype=jnp.float32) * 0.1
    gamma = jax.random.uniform(k_g, (Cout,), dtype=jnp.float32, minval=0.5, maxval=1.5)
    beta = jax.random.normal(k_be, (Cout,), dtype=jnp.float32) * 0.1
    run_mean = jax.random.normal(k_m, (Cout,), dtype=jnp.float32) * 0.1
    run_var = jax.random.uniform(k_v, (Cout,), dtype=jnp.float32, minval=0.5, maxval=1.5)

    ref = np.asarray(_reference_forward(x, conv_w, conv_b, gamma, beta, run_mean, run_var))

    # f32, explicit 8-row tiles (2 tiles -> exercises the cross-tile halo carry),
    # full-precision matmul to validate the kernel math tightly.
    out = gcn_block_forward(x, conv_w, conv_b, gamma, beta, run_mean, run_var,
                            tile_h=8, precision=jax.lax.Precision.HIGHEST)
    out = jax.block_until_ready(out)
    np.testing.assert_allclose(np.asarray(out), ref, rtol=1e-3, atol=1e-3)

    # f32, auto-selected tile (single-tile path), default MXU precision.
    out2 = gcn_block_forward(x, conv_w, conv_b, gamma, beta, run_mean, run_var)
    out2 = jax.block_until_ready(out2)
    np.testing.assert_allclose(np.asarray(out2), ref, rtol=2e-2, atol=3e-2)

    # bf16 activations in -> bf16 out (caller's data is already bf16; no wrapper-side cast),
    # f32 accumulation in-kernel.
    x_bf16 = x.astype(jnp.bfloat16)
    out3 = gcn_block_forward(x_bf16, conv_w, conv_b, gamma, beta, run_mean, run_var,
                             tile_h=8)
    out3 = jax.block_until_ready(out3)
    np.testing.assert_allclose(np.asarray(out3).astype(np.float32), ref,
                               rtol=6e-2, atol=6e-2)

    print("KERNEL_OK")
</pallas_src>

<mosaic_0001>
module attributes {stable_mosaic.version = 11 : i64} {
  func.func @_gcn_kernel(%arg0: i32, %arg1: i32, %arg2: memref<2x128xf32, #tpu.memory_space<vmem>>, %arg3: memref<1x146x128xf32, #tpu.memory_space<vmem>>, %arg4: memref<146x146xf32, #tpu.memory_space<vmem>>, %arg5: memref<146x1xf32, #tpu.memory_space<vmem>>, %arg6: memref<146x1xf32, #tpu.memory_space<vmem>>, %arg7: memref<1x146x128xf32, #tpu.memory_space<vmem>>, %arg8: memref<2x146x128xf32, #tpu.memory_space<vmem>>, %arg9: memref<146x16xf32, #tpu.memory_space<vmem>>) attributes {dimension_semantics = [#tpu.dimension_semantics<parallel>, #tpu.dimension_semantics<arbitrary>], iteration_bounds = array<i64: 2, 3>, scalar_prefetch = 0 : i64, scratch_operands = 2 : i64, tpu.core_type = #tpu.core_type<tc>, window_params = [{pipeline_mode = #tpu.pipeline_mode<synchronous>, transform_indices = @transform_0, window_bounds = array<i64: 2, 128>}, {transform_indices = @transform_1, window_bounds = array<i64: 1, 146, 128>}, {pipeline_mode = #tpu.pipeline_mode<synchronous>, transform_indices = @transform_2, window_bounds = array<i64: 146, 146>}, {pipeline_mode = #tpu.pipeline_mode<synchronous>, transform_indices = @transform_3, window_bounds = array<i64: 146, 1>}, {pipeline_mode = #tpu.pipeline_mode<synchronous>, transform_indices = @transform_4, window_bounds = array<i64: 146, 1>}, {transform_indices = @transform_5, window_bounds = array<i64: 1, 146, 128>}]} {
    %c2_i32 = arith.constant 2 : i32
    %c0_i32 = arith.constant 0 : i32
    %0 = arith.cmpi eq, %c2_i32, %c0_i32 : i32
    %c1_i32 = arith.constant 1 : i32
    %1 = arith.select %0, %c1_i32, %c2_i32 : i32
    %2 = arith.remsi %arg1, %1 : i32
    %c0_i32_0 = arith.constant 0 : i32
    %3 = arith.cmpi ne, %2, %c0_i32_0 : i32
    %c0_i32_1 = arith.constant 0 : i32
    %4 = arith.cmpi slt, %2, %c0_i32_1 : i32
    %c0_i32_2 = arith.constant 0 : i32
    %5 = arith.cmpi slt, %1, %c0_i32_2 : i32
    %6 = arith.xori %4, %5 : i1
    %7 = arith.andi %6, %3 : i1
    %8 = arith.addi %2, %1 : i32
    %9 = arith.select %7, %8, %2 : i32
    %c0_i32_3 = arith.constant 0 : i32
    %10 = arith.cmpi eq, %arg1, %c0_i32_3 : i32
    %11 = arith.extui %10 : i1 to i32
    %c0_i32_4 = arith.constant 0 : i32
    %12 = arith.cmpi ne, %11, %c0_i32_4 : i32
    scf.if %12 {
      %cst = arith.constant 0.000000e+00 : f32
      %19 = vector.broadcast %cst : f32 to vector<146x16xf32>
      %c0 = arith.constant 0 : index
      %c0_9 = arith.constant 0 : index
      %20 = vector.load %arg9[%c0, %c0_9] : memref<146x16xf32, #tpu.memory_space<vmem>>, vector<146x16xf32>
      tpu.vector_store %arg9[%c0, %c0_9], %19 {strides = array<i32>} : memref<146x16xf32, #tpu.memory_space<vmem>>, vector<146x16xf32>,
    } else {
    }
    %c2_i32_5 = arith.constant 2 : i32
    %13 = arith.cmpi slt, %arg1, %c2_i32_5 : i32
    %14 = arith.extui %13 : i1 to i32
    %c0_i32_6 = arith.constant 0 : i32
    %15 = arith.cmpi ne, %14, %c0_i32_6 : i32
    scf.if %15 {
      %c0 = arith.constant 0 : index
      %c0_9 = arith.constant 0 : index
      %19 = vector.load %arg4[%c0, %c0_9] : memref<146x146xf32, #tpu.memory_space<vmem>>, vector<146x146xf32>
      %c0_10 = arith.constant 0 : index
      %c0_11 = arith.constant 0 : index
      %c0_12 = arith.constant 0 : index
      %20 = vector.load %arg3[%c0_10, %c0_11, %c0_12] : memref<1x146x128xf32, #tpu.memory_space<vmem>>, vector<1x146x128xf32>
      %21 = vector.shape_cast %20 : vector<1x146x128xf32> to vector<146x128xf32>
      %cst = arith.constant dense<0.000000e+00> : vector<146x128xf32>
      %22 = tpu.matmul %19, %21, %cst {dimension_numbers = #tpu.dot_dimension_numbers<[1], [0], [0], [1], [0, 0, 1, 1], [], []>, precision = #tpu.contract_precision<fp32>} : vector<146x146xf32>, vector<146x128xf32>, vector<146x128xf32> -> vector<146x128xf32>
      %c0_13 = arith.constant 0 : index
      %c0_14 = arith.constant 0 : index
      %23 = vector.load %arg5[%c0_13, %c0_14] : memref<146x1xf32, #tpu.memory_space<vmem>>, vector<146x1xf32>
      %24 = vector.broadcast %23 : vector<146x1xf32> to vector<146x128xf32>
      %25 = arith.mulf %22, %24 : vector<146x128xf32>
      %c0_15 = arith.constant 0 : index
      %c0_16 = arith.constant 0 : index
      %26 = vector.load %arg6[%c0_15, %c0_16] : memref<146x1xf32, #tpu.memory_space<vmem>>, vector<146x1xf32>
      %27 = vector.broadcast %26 : vector<146x1xf32> to vector<146x128xf32>
      %28 = arith.addf %25, %27 : vector<146x128xf32>
      %cst_17 = arith.constant 0.000000e+00 : f32
      %29 = vector.broadcast %cst_17 : f32 to vector<146x128xf32>
      %30 = arith.maximumf %28, %29 : vector<146x128xf32>
      %c0_18 = arith.constant 0 : index
      %c0_19 = arith.constant 0 : index
      %31 = vector.load %arg2[%c0_18, %c0_19] : memref<2x128xf32, #tpu.memory_space<vmem>>, vector<2x128xf32>
      %32 = vector.extract_strided_slice %30 {offsets = [0, 0], sizes = [146, 1], strides = [1, 1]} : vector<146x128xf32> to vector<146x1xf32>
      %33 = vector.extract_strided_slice %30 {offsets = [0, 0], sizes = [146, 127], strides = [1, 1]} : vector<146x128xf32> to vector<146x127xf32>
      %34 = tpu.concatenate %32, %33 in 1 : vector<146x1xf32>, vector<146x127xf32> -> vector<146x128xf32>
      %35 = vector.extract_strided_slice %30 {offsets = [0, 1], sizes = [146, 127], strides = [1, 1]} : vector<146x128xf32> to vector<146x127xf32>
      %36 = vector.extract_strided_slice %30 {offsets = [0, 127], sizes = [146, 1], strides = [1, 1]} : vector<146x128xf32> to vector<146x1xf32>
      %37 = tpu.concatenate %35, %36 in 1 : vector<146x127xf32>, vector<146x1xf32> -> vector<146x128xf32>
      %38 = vector.extract_strided_slice %31 {offsets = [0, 0], sizes = [1, 128], strides = [1, 1]} : vector<2x128xf32> to vector<1x128xf32>
      %39 = vector.broadcast %38 : vector<1x128xf32> to vector<146x128xf32>
      %40 = arith.mulf %34, %39 : vector<146x128xf32>
      %41 = arith.addf %30, %40 : vector<146x128xf32>
      %42 = vector.extract_strided_slice %31 {offsets = [1, 0], sizes = [1, 128], strides = [1, 1]} : vector<2x128xf32> to vector<1x128xf32>
      %43 = vector.broadcast %42 : vector<1x128xf32> to vector<146x128xf32>
      %44 = arith.mulf %37, %43 : vector<146x128xf32>
      %45 = arith.addf %41, %44 : vector<146x128xf32>
      %46 = arith.index_cast %9 : i32 to index
      %c0_20 = arith.constant 0 : index
      %c0_21 = arith.constant 0 : index
      %47 = vector.load %arg8[%46, %c0_20, %c0_21] : memref<2x146x128xf32, #tpu.memory_space<vmem>>, vector<1x146x128xf32>
      %48 = vector.shape_cast %47 : vector<1x146x128xf32> to vector<146x128xf32>
      %49 = vector.shape_cast %45 : vector<146x128xf32> to vector<1x146x128xf32>
      tpu.vector_store %arg8[%46, %c0_20, %c0_21], %49 {strides = array<i32>} : memref<2x146x128xf32, #tpu.memory_space<vmem>>, vector<1x146x128xf32>,
    } else {
    }
    %c0_i32_7 = arith.constant 0 : i32
    %16 = arith.cmpi sgt, %arg1, %c0_i32_7 : i32
    %17 = arith.extui %16 : i1 to i32
    %c0_i32_8 = arith.constant 0 : i32
    %18 = arith.cmpi ne, %17, %c0_i32_8 : i32
    scf.if %18 {
      %c1_i32_9 = arith.constant 1 : i32
      %19 = arith.subi %c1_i32_9, %9 : i32
      %20 = arith.index_cast %19 : i32 to index
      %c0 = arith.constant 0 : index
      %c0_10 = arith.constant 0 : index
      %21 = vector.load %arg8[%20, %c0, %c0_10] : memref<2x146x128xf32, #tpu.memory_space<vmem>>, vector<1x146x128xf32>
      %22 = vector.shape_cast %21 : vector<1x146x128xf32> to vector<146x128xf32>
      %c0_11 = arith.constant 0 : index
      %c0_12 = arith.constant 0 : index
      %23 = vector.load %arg9[%c0_11, %c0_12] : memref<146x16xf32, #tpu.memory_space<vmem>>, vector<146x16xf32>
      %c2_i32_13 = arith.constant 2 : i32
      %24 = arith.cmpi slt, %arg1, %c2_i32_13 : i32
      %25 = arith.extui %24 : i1 to i32
      %26 = arith.sitofp %25 : i32 to f32
      %27 = arith.index_cast %9 : i32 to index
      %c0_14 = arith.constant 0 : index
      %c0_15 = arith.constant 0 : index
      %28 = vector.load %arg8[%27, %c0_14, %c0_15] : memref<2x146x128xf32, #tpu.memory_space<vmem>>, vector<1x146x16xf32>
      %29 = vector.shape_cast %28 : vector<1x146x16xf32> to vector<146x16xf32>
      %30 = vector.broadcast %26 : f32 to vector<146x16xf32>
      %31 = arith.mulf %29, %30 : vector<146x16xf32>
      %32 = vector.extract_strided_slice %22 {offsets = [0, 0], sizes = [146, 112], strides = [1, 1]} : vector<146x128xf32> to vector<146x112xf32>
      %33 = tpu.concatenate %23, %32 in 1 : vector<146x16xf32>, vector<146x112xf32> -> vector<146x128xf32>
      %34 = vector.extract_strided_slice %22 {offsets = [0, 16], sizes = [146, 112], strides = [1, 1]} : vector<146x128xf32> to vector<146x112xf32>
      %35 = tpu.concatenate %34, %31 in 1 : vector<146x112xf32>, vector<146x16xf32> -> vector<146x128xf32>
      %36 = arith.addf %22, %33 : vector<146x128xf32>
      %37 = arith.addf %36, %35 : vector<146x128xf32>
      %c0_16 = arith.constant 0 : index
      %c0_17 = arith.constant 0 : index
      %c0_18 = arith.constant 0 : index
      %38 = vector.load %arg7[%c0_16, %c0_17, %c0_18] : memref<1x146x128xf32, #tpu.memory_space<vmem>>, vector<1x146x128xf32>
      %39 = vector.shape_cast %38 : vector<1x146x128xf32> to vector<146x128xf32>
      %40 = vector.shape_cast %37 : vector<146x128xf32> to vector<1x146x128xf32>
      tpu.vector_store %arg7[%c0_16, %c0_17, %c0_18], %40 {strides = array<i32>} : memref<1x146x128xf32, #tpu.memory_space<vmem>>, vector<1x146x128xf32>,
      %41 = vector.extract_strided_slice %22 {offsets = [0, 112], sizes = [146, 16], strides = [1, 1]} : vector<146x128xf32> to vector<146x16xf32>
      %c0_19 = arith.constant 0 : index
      %c0_20 = arith.constant 0 : index
      %42 = vector.load %arg9[%c0_19, %c0_20] : memref<146x16xf32, #tpu.memory_space<vmem>>, vector<146x16xf32>
      tpu.vector_store %arg9[%c0_19, %c0_20], %41 {strides = array<i32>} : memref<146x16xf32, #tpu.memory_space<vmem>>, vector<146x16xf32>,
    } else {
    }
    return
  }
  func.func @transform_0(%arg0: i32, %arg1: i32) -> (i32, i32) {
    %c0_i32 = arith.constant 0 : i32
    %c0_i32_0 = arith.constant 0 : i32
    %c0_i32_1 = arith.constant 0 : i32
    return %c0_i32, %c0_i32_0 : i32, i32
  }
  func.func @transform_1(%arg0: i32, %arg1: i32) -> (i32, i32, i32) {
    %c1_i32 = arith.constant 1 : i32
    %0 = arith.minsi %arg1, %c1_i32 : i32
    %c0_i32 = arith.constant 0 : i32
    %c0_i32_0 = arith.constant 0 : i32
    return %arg0, %c0_i32, %0 : i32, i32, i32
  }
  func.func @transform_2(%arg0: i32, %arg1: i32) -> (i32, i32) {
    %c0_i32 = arith.constant 0 : i32
    %c0_i32_0 = arith.constant 0 : i32
    %c0_i32_1 = arith.constant 0 : i32
    return %c0_i32, %c0_i32_0 : i32, i32
  }
  func.func @transform_3(%arg0: i32, %arg1: i32) -> (i32, i32) {
    %c0_i32 = arith.constant 0 : i32
    %c0_i32_0 = arith.constant 0 : i32
    %c0_i32_1 = arith.constant 0 : i32
    return %c0_i32, %c0_i32_0 : i32, i32
  }
  func.func @transform_4(%arg0: i32, %arg1: i32) -> (i32, i32) {
    %c0_i32 = arith.constant 0 : i32
    %c0_i32_0 = arith.constant 0 : i32
    %c0_i32_1 = arith.constant 0 : i32
    return %c0_i32, %c0_i32_0 : i32, i32
  }
  func.func @transform_5(%arg0: i32, %arg1: i32) -> (i32, i32, i32) {
    %c1_i32 = arith.constant 1 : i32
    %0 = arith.subi %arg1, %c1_i32 : i32
    %c0_i32 = arith.constant 0 : i32
    %1 = arith.maxsi %0, %c0_i32 : i32
    %c0_i32_0 = arith.constant 0 : i32
    %c0_i32_1 = arith.constant 0 : i32
    return %arg0, %c0_i32_0, %1 : i32, i32, i32
  }
}

</mosaic_0001>

<llo_original>
// kernel: tpu_custom_call.1
$region0: #{tpu_custom_call.1}
  #allocation0 [shape = 'u32[]', space=smem, size = 0x4, offset = 0x4, fixed_abs, tag = 'smem constant byte address 0x4 - core index']
  #allocation1 [shape = 'u32[144,128]{1,0:T(1,128)}', space=vmem, size = 0x12000, scoped, tag = 'internal scratch']
  #allocation2 [shape = 'f32[2,146,128]{2,1,0:T(8,128)}', space=vmem, size = 0x26000, scoped, tag = 'scratch operand']
  #allocation3 [shape = 'f32[146,16]{1,0:T(8,128)}', space=vmem, size = 0x13000, scoped, tag = 'scratch operand']
  %s0 = inlined_call_operand.vmem [shape: f32[2,128], index: 0, kind: input, shape index: {}]
  %s1 = inlined_call_operand.vmem [shape: f32[2,146,256], index: 1, kind: input, shape index: {}]
  %s2 = inlined_call_operand.vmem [shape: f32[146,146], index: 2, kind: input, shape index: {}]
  %s3 = inlined_call_operand.vmem [shape: f32[146,1], index: 3, kind: input, shape index: {}]
  %s4 = inlined_call_operand.vmem [shape: f32[146,1], index: 4, kind: input, shape index: {}]
  %s5 = inlined_call_operand.vmem [shape: f32[2,146,256], index: 5, kind: output, shape index: {}]
  %s6 = sld [smem:[#allocation0]]
  $region137: #{tpu_custom_call.1} parent=0
    _
  %s8 = ssub.s32 1, %s6
  %s9 = scalar_select 0, %s8, %s6
  $region1: #{tpu_custom_call.1} parent=0
    #allocation4 [shape = 'u8[155648]{0}', space=vmem, size = 0x26000, scoped, tag = 'input window, operand 1']
    #allocation5 [shape = 'u8[155648]{0}', space=vmem, size = 0x26000, scoped, tag = 'output window, operand 0']
    loop: start=0, step=1, limit=8
    $region2: #{tpu_custom_call.1} parent=1 // loop_pre_header
      _
    $region3: #{tpu_custom_call.1} parent=1 // loop_header
      %s11 = sphi 0, %s15
      %p12 = scmp.ge.s32.totalorder %s11, 8
      %s18 = sphi 0, %s30
      %s19 = sphi 0, %s26
      %s20 = sphi 0, %s18
      %s21 = sphi 0, %s19
      %s22 = sphi 0, %s20
      %s23 = sphi 0, %s21
      %s31 = sphi 0, %s31
      %s33 = sphi 0, %s31
      %s34 = sphi 0, %s33
      %s48 = sphi 0, %s34
      %s60 = sphi 0, %s62
      %s63 = sphi 0, %s60
      %s64 = sphi 0, %s63
      %s80 = sphi 0, %s64
      %s84 = sphi 0, %s84
      %s86 = sphi 0, %s84
      %s87 = sphi 0, %s86
      %s101 = sphi 0, %s87
      %s105 = sphi 0, %s105
      %s107 = sphi 0, %s105
      %s108 = sphi 0, %s107
      %s122 = sphi 0, %s108
      %s126 = sphi 0, %s126
      %s128 = sphi 0, %s126
      %s129 = sphi 0, %s128
      %s143 = sphi 0, %s129
      %s157 = sphi 0, %s159
      %s160 = sphi 0, %s157
      %s161 = sphi 0, %s160
      %s177 = sphi 0, %s161
    $region4: #{tpu_custom_call.1} parent=1 // loop_header_branch
      %14 = sbr.rel (%p12) target = $region8
    $region5: #{tpu_custom_call.1} parent=1 // loop_body
      %s16 = ssub.s32 %s11, 1
      %s17 = ssub.s32 %s11, 2
      %s24 = sadd.s32 1, %s19
      %p25 = scmp.ge.s32.totalorder %s24, 3
      %s26 = scalar_select %p25, 0, %s24
      %s27 = sadd.s32 1, %s18
      %s28 = scalar_select %p25, %s27, %s18
      %p29 = scmp.ge.s32.totalorder %s28, 2
      %s30 = scalar_select %p29, 0, %s28
      %s32 = sadd.s32 %s31, 1
      %p35 = scmp.eq.s32.totalorder %s11, 5
      %p36 = scmp.ne.s32.totalorder %s31, %s33
      %p37 = scmp.eq.s32.totalorder %s11, 0
      %p38 = por %p36, %p37
      %p39 = scmp.ne.s32.totalorder %s31, %s33
      %p40 = scmp.eq.s32.totalorder %s16, 5
      %p41 = por %p39, %p40
      %p42 = scmp.ne.s32.totalorder %s33, %s34
      %p43 = scmp.eq.s32.totalorder %s16, 0
      %p44 = por %p42, %p43
      %p45 = scmp.ne.s32.totalorder %s33, %s34
      %p46 = scmp.eq.s32.totalorder %s17, 5
      %p47 = por %p45, %p46
      %p49 = scmp.ne.s32.totalorder %s34, %s48
      %p50 = scmp.eq.s32.totalorder %s17, 0
      %p51 = por %p49, %p50
      %p52 = scmp.lt.s32.totalorder %s19, 1
      %s53 = scalar_select %p52, %s19, 1
      %p54 = scmp.lt.s32.totalorder %s26, 1
      %s55 = scalar_select %p54, %s26, 1
      %s56 = ssub.s32 %s18, %s30
      %s57 = ssub.s32 %s53, %s55
      %s58 = sor.u32 %s56, %s57
      %p59 = scmp.eq.s32.totalorder %s58, 0
      %s61 = sadd.s32 %s60, 1
      %s62 = scalar_select %p59, %s60, %s61
      %p65 = pneg %p59
      %p66 = scmp.eq.s32.totalorder %s11, 5
      %p67 = por %p65, %p66
      %p68 = scmp.ne.s32.totalorder %s60, %s63
      %p69 = scmp.eq.s32.totalorder %s11, 0
      %p70 = por %p68, %p69
      %p71 = scmp.ne.s32.totalorder %s60, %s63
      %p72 = scmp.eq.s32.totalorder %s16, 5
      %p73 = por %p71, %p72
      %p74 = scmp.ne.s32.totalorder %s63, %s64
      %p75 = scmp.eq.s32.totalorder %s16, 0
      %p76 = por %p74, %p75
      %p77 = scmp.ne.s32.totalorder %s63, %s64
      %p78 = scmp.eq.s32.totalorder %s17, 5
      %p79 = por %p77, %p78
      %p81 = scmp.ne.s32.totalorder %s64, %s80
      %p82 = scmp.eq.s32.totalorder %s17, 0
      %p83 = por %p81, %p82
      %s85 = sadd.s32 %s84, 1
      %p88 = scmp.eq.s32.totalorder %s11, 5
      %p89 = scmp.ne.s32.totalorder %s84, %s86
      %p90 = scmp.eq.s32.totalorder %s11, 0
      %p91 = por %p89, %p90
      %p92 = scmp.ne.s32.totalorder %s84, %s86
      %p93 = scmp.eq.s32.totalorder %s16, 5
      %p94 = por %p92, %p93
      %p95 = scmp.ne.s32.totalorder %s86, %s87
      %p96 = scmp.eq.s32.totalorder %s16, 0
      %p97 = por %p95, %p96
      %p98 = scmp.ne.s32.totalorder %s86, %s87
      %p99 = scmp.eq.s32.totalorder %s17, 5
      %p100 = por %p98, %p99
      %p102 = scmp.ne.s32.totalorder %s87, %s101
      %p103 = scmp.eq.s32.totalorder %s17, 0
      %p104 = por %p102, %p103
      %s106 = sadd.s32 %s105, 1
      %p109 = scmp.eq.s32.totalorder %s11, 5
      %p110 = scmp.ne.s32.totalorder %s105, %s107
      %p111 = scmp.eq.s32.totalorder %s11, 0
      %p112 = por %p110, %p111
      %p113 = scmp.ne.s32.totalorder %s105, %s107
      %p114 = scmp.eq.s32.totalorder %s16, 5
      %p115 = por %p113, %p114
      %p116 = scmp.ne.s32.totalorder %s107, %s108
      %p117 = scmp.eq.s32.totalorder %s16, 0
      %p118 = por %p116, %p117
      %p119 = scmp.ne.s32.totalorder %s107, %s108
      %p120 = scmp.eq.s32.totalorder %s17, 5
      %p121 = por %p119, %p120
      %p123 = scmp.ne.s32.totalorder %s108, %s122
      %p124 = scmp.eq.s32.totalorder %s17, 0
      %p125 = por %p123, %p124
      %s127 = sadd.s32 %s126, 1
      %p130 = scmp.eq.s32.totalorder %s11, 5
      %p131 = scmp.ne.s32.totalorder %s126, %s128
      %p132 = scmp.eq.s32.totalorder %s11, 0
      %p133 = por %p131, %p132
      %p134 = scmp.ne.s32.totalorder %s126, %s128
      %p135 = scmp.eq.s32.totalorder %s16, 5
      %p136 = por %p134, %p135
      %p137 = scmp.ne.s32.totalorder %s128, %s129
      %p138 = scmp.eq.s32.totalorder %s16, 0
      %p139 = por %p137, %p138
      %p140 = scmp.ne.s32.totalorder %s128, %s129
      %p141 = scmp.eq.s32.totalorder %s17, 5
      %p142 = por %p140, %p141
      %p144 = scmp.ne.s32.totalorder %s129, %s143
      %p145 = scmp.eq.s32.totalorder %s17, 0
      %p146 = por %p144, %p145
      %s147 = ssub.s32 %s19, 1
      %p148 = scmp.gt.s32.totalorder %s147, 0
      %s149 = scalar_select %p148, %s147, 0
      %s150 = ssub.s32 %s26, 1
      %p151 = scmp.gt.s32.totalorder %s150, 0
      %s152 = scalar_select %p151, %s150, 0
      %s153 = ssub.s32 %s18, %s30
      %s154 = ssub.s32 %s149, %s152
      %s155 = sor.u32 %s153, %s154
      %p156 = scmp.eq.s32.totalorder %s155, 0
      %s158 = sadd.s32 %s157, 1
      %s159 = scalar_select %p156, %s157, %s158
      %p162 = pneg %p156
      %p163 = scmp.eq.s32.totalorder %s11, 5
      %p164 = por %p162, %p163
      %p165 = scmp.ne.s32.totalorder %s157, %s160
      %p166 = scmp.eq.s32.totalorder %s11, 0
      %p167 = por %p165, %p166
      %p168 = scmp.ne.s32.totalorder %s157, %s160
      %p169 = scmp.eq.s32.totalorder %s16, 5
      %p170 = por %p168, %p169
      %p171 = scmp.ne.s32.totalorder %s160, %s161
      %p172 = scmp.eq.s32.totalorder %s16, 0
      %p173 = por %p171, %p172
      %p174 = scmp.ne.s32.totalorder %s160, %s161
      %p175 = scmp.eq.s32.totalorder %s17, 5
      %p176 = por %p174, %p175
      %p178 = scmp.ne.s32.totalorder %s161, %s177
      %p179 = scmp.eq.s32.totalorder %s17, 0
      %p180 = por %p178, %p179
      %p181 = scmp.le.s32.totalorder 1, %s11
      %p182 = scmp.lt.s32.totalorder %s11, 7
      %p183 = pnand %p181, %p182
      %p184 = pneg %p183
      // Predicated region
      $region9: #{tpu_custom_call.1} parent=5 // pred_check
        _
      $region10: #{tpu_custom_call.1} parent=5 // pred_check_branch
        %186 = sbr.rel (%p183) target = $region12
      $region11: #{tpu_custom_call.1} parent=5 // pred_region
        %s187 = ssub.s32 %s11, 1
        // Predicated region
        $region13: #{tpu_custom_call.1} parent=11 // pred_check
          %p188 = pneg %p44
        $region14: #{tpu_custom_call.1} parent=11 // pred_check_branch
          %190 = sbr.rel (%p188) target = $region16
        $region15: #{tpu_custom_call.1} parent=11 // pred_region
          _
        $region16: #{tpu_custom_call.1} parent=11 // pred_fallthru
          _
        // Predicated region
        $region17: #{tpu_custom_call.1} parent=11 // pred_check
          %p191 = pneg %p97
        $region18: #{tpu_custom_call.1} parent=11 // pred_check_branch
          %193 = sbr.rel (%p191) target = $region20
        $region19: #{tpu_custom_call.1} parent=11 // pred_region
          _
        $region20: #{tpu_custom_call.1} parent=11 // pred_fallthru
          _
        // Predicated region
        $region21: #{tpu_custom_call.1} parent=11 // pred_check
          %p194 = pneg %p118
        $region22: #{tpu_custom_call.1} parent=11 // pred_check_branch
          %196 = sbr.rel (%p194) target = $region24
        $region23: #{tpu_custom_call.1} parent=11 // pred_region
          _
        $region24: #{tpu_custom_call.1} parent=11 // pred_fallthru
          _
        // Predicated region
        $region25: #{tpu_custom_call.1} parent=11 // pred_check
          %p197 = pneg %p139
        $region26: #{tpu_custom_call.1} parent=11 // pred_check_branch
          %199 = sbr.rel (%p197) target = $region28
        $region27: #{tpu_custom_call.1} parent=11 // pred_region
          _
        $region28: #{tpu_custom_call.1} parent=11 // pred_fallthru
          _
      $region12: #{tpu_custom_call.1} parent=5 // pred_fallthru
        _
      %p200 = scmp.lt.s32.totalorder %s11, 6
      // Predicated region
      $region29: #{tpu_custom_call.1} parent=5 // pred_check
        %p201 = pneg %p200
      $region30: #{tpu_custom_call.1} parent=5 // pred_check_branch
        %203 = sbr.rel (%p201) target = $region32
      $region31: #{tpu_custom_call.1} parent=5 // pred_region
        // Predicated region
        $region33: #{tpu_custom_call.1} parent=31 // pred_check
          %p204 = pneg %p70
        $region34: #{tpu_custom_call.1} parent=31 // pred_check_branch
          %206 = sbr.rel (%p204) target = $region36
        $region35: #{tpu_custom_call.1} parent=31 // pred_region
          %s207 = sand.u32 %s60, 1
          %s208 = sand.u32 %s60, 1
          %s209 = smul.addr %s208, 152
          %s210 = scalar_lea.vmem [#allocation4], %s209
          %p211 = scmp.lt.s32.totalorder %s19, 1
          %s212 = scalar_select %p211, %s19, 1
          %s213 = smul.addr %s18, 38
          %s214 = sadd.s32 %s212, %s213
          %s215 = smul.addr %s214, 8
          %s216 = scalar_lea.vmem %s1, %s215
          // Predicated region
          $region37: #{tpu_custom_call.1} parent=35 // pred_check
            _
          $region38: #{tpu_custom_call.1} parent=35 // pred_check_branch
            %218 = sbr.rel (0) target = $region40
          $region39: #{tpu_custom_call.1} parent=35 // pred_region
            // Predicated region
            $region41: #{tpu_custom_call.1} parent=39 // pred_check
              _
            $region42: #{tpu_custom_call.1} parent=39 // pred_check_branch
              %220 = sbr.rel (0) target = $region44
            $region43: #{tpu_custom_call.1} parent=39 // pred_region
              // Predicated region
              $region56: #{tpu_custom_call.1} parent=43 // pred_check
                _
              $region57: #{tpu_custom_call.1} parent=43 // pred_check_branch
                %271 = sbr.rel (0) target = $region59
              $region58: #{tpu_custom_call.1} parent=43 // pred_region
                loop: start=0, step=1, limit=1
                $region60: #{tpu_custom_call.1} parent=58 // loop_pre_header
                  _
                $region61: #{tpu_custom_call.1} parent=58 // loop_header
                  %s273 = sphi 0, %s277
                  %p274 = scmp.ge.s32.totalorder %s273, 1
                  %s278 = sphi %s216, %s216
                  %s279 = sphi %s210, %s210
                $region62: #{tpu_custom_call.1} parent=58 // loop_header_branch
                  %276 = sbr.rel (%p274) target = $region66
                $region63: #{tpu_custom_call.1} parent=58 // loop_body
                  %v280 = vld [vmem:[%s278] sm:$0xff]
                  %281 = vst [vmem:[%s279] sm:$0xff] %v280
                  %v282 = vld [vmem:[%s278 + $0x10] sm:$0xff]
                  %283 = vst [vmem:[%s279 + $0x8] sm:$0xff] %v282
                  %v284 = vld [vmem:[%s278 + $0x20] sm:$0xff]
                  %285 = vst [vmem:[%s279 + $0x10] sm:$0xff] %v284
                  %v286 = vld [vmem:[%s278 + $0x30] sm:$0xff]
                  %287 = vst [vmem:[%s279 + $0x18] sm:$0xff] %v286
                  %v288 = vld [vmem:[%s278 + $0x40] sm:$0xff]
                  %289 = vst [vmem:[%s279 + $0x20] sm:$0xff] %v288
                  %v290 = vld [vmem:[%s278 + $0x50] sm:$0xff]
                  %291 = vst [vmem:[%s279 + $0x28] sm:$0xff] %v290
                  %v292 = vld [vmem:[%s278 + $0x60] sm:$0xff]
                  %293 = vst [vmem:[%s279 + $0x30] sm:$0xff] %v292
                  %v294 = vld [vmem:[%s278 + $0x70] sm:$0xff]
                  %295 = vst [vmem:[%s279 + $0x38] sm:$0xff] %v294
                  %v296 = vld [vmem:[%s278 + $0x80] sm:$0xff]
                  %297 = vst [vmem:[%s279 + $0x40] sm:$0xff] %v296
                  %v298 = vld [vmem:[%s278 + $0x90] sm:$0xff]
                  %299 = vst [vmem:[%s279 + $0x48] sm:$0xff] %v298
                  %v300 = vld [vmem:[%s278 + $0xa0] sm:$0xff]
                  %301 = vst [vmem:[%s279 + $0x50] sm:$0xff] %v300
                  %v302 = vld [vmem:[%s278 + $0xb0] sm:$0xff]
                  %303 = vst [vmem:[%s279 + $0x58] sm:$0xff] %v302
                  %v304 = vld [vmem:[%s278 + $0xc0] sm:$0xff]
                  %305 = vst [vmem:[%s279 + $0x60] sm:$0xff] %v304
                  %v306 = vld [vmem:[%s278 + $0xd0] sm:$0xff]
                  %307 = vst [vmem:[%s279 + $0x68] sm:$0xff] %v306
                  %v308 = vld [vmem:[%s278 + $0xe0] sm:$0xff]
                  %309 = vst [vmem:[%s279 + $0x70] sm:$0xff] %v308
                  %v310 = vld [vmem:[%s278 + $0xf0] sm:$0xff]
                  %311 = vst [vmem:[%s279 + $0x78] sm:$0xff] %v310
                  %v312 = vld [vmem:[%s278 + $0x100] sm:$0xff]
                  %313 = vst [vmem:[%s279 + $0x80] sm:$0xff] %v312
                  %v314 = vld [vmem:[%s278 + $0x110] sm:$0xff]
                  %315 = vst [vmem:[%s279 + $0x88] sm:$0xff] %v314
                  %v316 = vld [vmem:[%s278 + $0x120] sm:$0xff]
                  %317 = vst [vmem:[%s279 + $0x90] sm:$0xff] %v316
                $region64: #{tpu_custom_call.1} parent=58 // loop_footer
                  %s277 = sadd.s32 1, %s273
                $region65: #{tpu_custom_call.1} parent=58 // loop_footer_branch
                  %272 = sbr.rel target = $region61
                $region66: #{tpu_custom_call.1} parent=58 // loop_exit
                  _
              $region59: #{tpu_custom_call.1} parent=43 // pred_fallthru
                _
              // Predicated region
              $region67: #{tpu_custom_call.1} parent=43 // pred_check
                _
              $region68: #{tpu_custom_call.1} parent=43 // pred_check_branch
                %319 = sbr.rel target = $region70
              $region69: #{tpu_custom_call.1} parent=43 // pred_region
                _
              $region70: #{tpu_custom_call.1} parent=43 // pred_fallthru
                _
            $region44: #{tpu_custom_call.1} parent=39 // pred_fallthru
              _
            // Predicated region
            $region45: #{tpu_custom_call.1} parent=39 // pred_check
              _
            $region46: #{tpu_custom_call.1} parent=39 // pred_check_branch
              %222 = sbr.rel target = $region48
            $region47: #{tpu_custom_call.1} parent=39 // pred_region
              loop: start=0, step=1, limit=1
              $region49: #{tpu_custom_call.1} parent=47 // loop_pre_header
                _
              $region50: #{tpu_custom_call.1} parent=47 // loop_header
                %s225 = sphi 0, %s229
                %p226 = scmp.ge.s32.totalorder %s225, 1
                %s230 = sphi %s216, %s216
                %s231 = sphi %s210, %s210
              $region51: #{tpu_custom_call.1} parent=47 // loop_header_branch
                %228 = sbr.rel (%p226) target = $region55
              $region52: #{tpu_custom_call.1} parent=47 // loop_body
                %v232 = vld [vmem:[%s230] sm:$0xff]
                %233 = vst [vmem:[%s231] sm:$0xff] %v232
                %v234 = vld [vmem:[%s230 + $0x10] sm:$0xff]
                %235 = vst [vmem:[%s231 + $0x8] sm:$0xff] %v234
                %v236 = vld [vmem:[%s230 + $0x20] sm:$0xff]
                %237 = vst [vmem:[%s231 + $0x10] sm:$0xff] %v236
                %v238 = vld [vmem:[%s230 + $0x30] sm:$0xff]
                %239 = vst [vmem:[%s231 + $0x18] sm:$0xff] %v238
                %v240 = vld [vmem:[%s230 + $0x40] sm:$0xff]
                %241 = vst [vmem:[%s231 + $0x20] sm:$0xff] %v240
                %v242 = vld [vmem:[%s230 + $0x50] sm:$0xff]
                %243 = vst [vmem:[%s231 + $0x28] sm:$0xff] %v242
                %v244 = vld [vmem:[%s230 + $0x60] sm:$0xff]
                %245 = vst [vmem:[%s231 + $0x30] sm:$0xff] %v244
                %v246 = vld [vmem:[%s230 + $0x70] sm:$0xff]
                %247 = vst [vmem:[%s231 + $0x38] sm:$0xff] %v246
                %v248 = vld [vmem:[%s230 + $0x80] sm:$0xff]
                %249 = vst [vmem:[%s231 + $0x40] sm:$0xff] %v248
                %v250 = vld [vmem:[%s230 + $0x90] sm:$0xff]
                %251 = vst [vmem:[%s231 + $0x48] sm:$0xff] %v250
                %v252 = vld [vmem:[%s230 + $0xa0] sm:$0xff]
                %253 = vst [vmem:[%s231 + $0x50] sm:$0xff] %v252
                %v254 = vld [vmem:[%s230 + $0xb0] sm:$0xff]
                %255 = vst [vmem:[%s231 + $0x58] sm:$0xff] %v254
                %v256 = vld [vmem:[%s230 + $0xc0] sm:$0xff]
                %257 = vst [vmem:[%s231 + $0x60] sm:$0xff] %v256
                %v258 = vld [vmem:[%s230 + $0xd0] sm:$0xff]
                %259 = vst [vmem:[%s231 + $0x68] sm:$0xff] %v258
                %v260 = vld [vmem:[%s230 + $0xe0] sm:$0xff]
                %261 = vst [vmem:[%s231 + $0x70] sm:$0xff] %v260
                %v262 = vld [vmem:[%s230 + $0xf0] sm:$0xff]
                %263 = vst [vmem:[%s231 + $0x78] sm:$0xff] %v262
                %v264 = vld [vmem:[%s230 + $0x100] sm:$0xff]
                %265 = vst [vmem:[%s231 + $0x80] sm:$0xff] %v264
                %v266 = vld [vmem:[%s230 + $0x110] sm:$0xff]
                %267 = vst [vmem:[%s231 + $0x88] sm:$0xff] %v266
                %v268 = vld [vmem:[%s230 + $0x120] sm:$0xff]
                %269 = vst [vmem:[%s231 + $0x90] sm:$0xff] %v268
              $region53: #{tpu_custom_call.1} parent=47 // loop_footer
                %s229 = sadd.s32 1, %s225
              $region54: #{tpu_custom_call.1} parent=47 // loop_footer_branch
                %224 = sbr.rel target = $region50
              $region55: #{tpu_custom_call.1} parent=47 // loop_exit
                _
            $region48: #{tpu_custom_call.1} parent=39 // pred_fallthru
              _
          $region40: #{tpu_custom_call.1} parent=35 // pred_fallthru
            _
          %320 = vnop
        $region36: #{tpu_custom_call.1} parent=31 // pred_fallthru
          _
      $region32: #{tpu_custom_call.1} parent=5 // pred_fallthru
        _
      %p321 = scmp.le.s32.totalorder 1, %s11
      %p322 = scmp.lt.s32.totalorder %s11, 7
      %p323 = pnand %p321, %p322
      %p324 = pneg %p323
      // Predicated region
      $region71: #{tpu_custom_call.1} parent=5 // pred_check
        _
      $region72: #{tpu_custom_call.1} parent=5 // pred_check_branch
        %326 = sbr.rel (%p323) target = $region74
      $region73: #{tpu_custom_call.1} parent=5 // pred_region
        %s327 = ssub.s32 %s11, 1
        %s328 = sand.u32 %s63, 1
        %s329 = sand.u32 %s63, 1
        %s330 = smul.addr %s329, 152
        %s331 = scalar_lea.vmem [#allocation4], %s330
        // Predicated region
        $region75: #{tpu_custom_call.1} parent=73 // pred_check
          %p332 = pneg %p76
        $region76: #{tpu_custom_call.1} parent=73 // pred_check_branch
          %334 = sbr.rel (%p332) target = $region78
        $region77: #{tpu_custom_call.1} parent=73 // pred_region
          _
        $region78: #{tpu_custom_call.1} parent=73 // pred_fallthru
          _
        %p335 = pneg %p44
        %p336 = pneg %p41
        %s337 = sand.u32 %s63, 1
        %s338 = sand.u32 %s63, 1
        %s339 = smul.addr %s338, 152
        %s340 = scalar_lea.vmem [#allocation4], %s339
        %p341 = pneg %p76
        %p342 = pneg %p73
        %p343 = pneg %p97
        %p344 = pneg %p94
        %p345 = pneg %p118
        %p346 = pneg %p115
        %p347 = pneg %p139
        %p348 = pneg %p136
        %p349 = pneg %p173
        %p350 = pneg %p170
        %s351 = sand.u32 %s160, 1
        %s352 = sand.u32 %s160, 1
        %s353 = smul.addr %s352, 152
        %s354 = scalar_lea.vmem [#allocation5], %s353
        %p355 = scmp.lt.s32.totalorder %s21, 1
        %s356 = scalar_select %p355, %s21, 1
        %s357 = ssub.s32 %s21, 1
        %p358 = scmp.gt.s32.totalorder %s357, 0
        %s359 = scalar_select %p358, %s357, 0
        %p360 = scmp.lt.s32.totalorder %s21, 0
        %s361 = ssub.s32 0, %s21
        %s362 = scalar_select %p360, %s361, %s21
        %s363 = sand.u32 %s362, 1
        %s364 = ssub.s32 0, %s363
        %s365 = scalar_select %p360, %s364, %s363
        %p366 = scmp.ne.s32.totalorder %s365, 0
        %p367 = scmp.lt.s32.totalorder %s365, 0
        %p368 = pnand %p367, %p366
        %p369 = pneg %p368
        %s370 = sadd.s32 %s365, 2
        %s371 = scalar_select %p369, %s370, %s365
        %p372 = scmp.eq.s32.totalorder %s21, 0
        // Predicated region
        $region79: #{tpu_custom_call.1} parent=73 // pred_check
          %p373 = pneg %p372
        $region80: #{tpu_custom_call.1} parent=73 // pred_check_branch
          %375 = sbr.rel (%p373) target = $region82
        $region81: #{tpu_custom_call.1} parent=73 // pred_region
          %vm376 = vcmask 130048
          %377 = vst.msk [vmem:[#allocation3] sm:$0xff] %vm376, 0.0
          %378 = vst.msk [vmem:[#allocation3 + $0x8] sm:$0xff] %vm376, 0.0
          %379 = vst.msk [vmem:[#allocation3 + $0x10] sm:$0xff] %vm376, 0.0
          %380 = vst.msk [vmem:[#allocation3 + $0x18] sm:$0xff] %vm376, 0.0
          %381 = vst.msk [vmem:[#allocation3 + $0x20] sm:$0xff] %vm376, 0.0
          %382 = vst.msk [vmem:[#allocation3 + $0x28] sm:$0xff] %vm376, 0.0
          %383 = vst.msk [vmem:[#allocation3 + $0x30] sm:$0xff] %vm376, 0.0
          %384 = vst.msk [vmem:[#allocation3 + $0x38] sm:$0xff] %vm376, 0.0
          %385 = vst.msk [vmem:[#allocation3 + $0x40] sm:$0xff] %vm376, 0.0
          %386 = vst.msk [vmem:[#allocation3 + $0x48] sm:$0xff] %vm376, 0.0
          %387 = vst.msk [vmem:[#allocation3 + $0x50] sm:$0xff] %vm376, 0.0
          %388 = vst.msk [vmem:[#allocation3 + $0x58] sm:$0xff] %vm376, 0.0
          %389 = vst.msk [vmem:[#allocation3 + $0x60] sm:$0xff] %vm376, 0.0
          %390 = vst.msk [vmem:[#allocation3 + $0x68] sm:$0xff] %vm376, 0.0
          %391 = vst.msk [vmem:[#allocation3 + $0x70] sm:$0xff] %vm376, 0.0
          %392 = vst.msk [vmem:[#allocation3 + $0x78] sm:$0xff] %vm376, 0.0
          %393 = vst.msk [vmem:[#allocation3 + $0x80] sm:$0xff] %vm376, 0.0
          %394 = vst.msk [vmem:[#allocation3 + $0x88] sm:$0xff] %vm376, 0.0
          %vm395 = vcmask 123904
          %396 = vst.msk [vmem:[#allocation3 + $0x90] sm:$0x3] %vm395, 0.0
        $region82: #{tpu_custom_call.1} parent=73 // pred_fallthru
          _
        %p397 = scmp.lt.s32.totalorder %s21, 2
        // Predicated region
        $region83: #{tpu_custom_call.1} parent=73 // pred_check
          %p398 = pneg %p397
        $region84: #{tpu_custom_call.1} parent=73 // pred_check_branch
          %400 = sbr.rel (%p398) target = $region86
        $region85: #{tpu_custom_call.1} parent=73 // pred_region
          %v401 = vld [vmem:[%s2] sm:$0xff]
          %v402 = vld [vmem:[%s2 + $0x8] sm:$0xff]
          %v403 = vld [vmem:[%s2 + $0x10] sm:$0xff]
          %v404 = vld [vmem:[%s2 + $0x18] sm:$0xff]
          %v405 = vld [vmem:[%s2 + $0x20] sm:$0xff]
          %v406 = vld [vmem:[%s2 + $0x28] sm:$0xff]
          %v407 = vld [vmem:[%s2 + $0x30] sm:$0xff]
          %v408 = vld [vmem:[%s2 + $0x38] sm:$0xff]
          %v409 = vld [vmem:[%s2 + $0x40] sm:$0xff]
          %v410 = vld [vmem:[%s2 + $0x48] sm:$0xff]
          %v411 = vld [vmem:[%s2 + $0x50] sm:$0xff]
          %v412 = vld [vmem:[%s2 + $0x58] sm:$0xff]
          %v413 = vld [vmem:[%s2 + $0x60] sm:$0xff]
          %v414 = vld [vmem:[%s2 + $0x68] sm:$0xff]
          %v415 = vld [vmem:[%s2 + $0x70] sm:$0xff]
          %v416 = vld [vmem:[%s2 + $0x78] sm:$0xff]
          %v417 = vld [vmem:[%s2 + $0x80] sm:$0xff]
          %v418 = vld [vmem:[%s2 + $0x88] sm:$0xff]
          %v419 = vld [vmem:[%s2 + $0x90] sm:$0xff]
          %v420 = vld [vmem:[%s2 + $0x98] sm:$0xff]
          %v421 = vld [vmem:[%s2 + $0xa0] sm:$0xff]
          %v422 = vld [vmem:[%s2 + $0xa8] sm:$0xff]
          %v423 = vld [vmem:[%s2 + $0xb0] sm:$0xff]
          %v424 = vld [vmem:[%s2 + $0xb8] sm:$0xff]
          %v425 = vld [vmem:[%s2 + $0xc0] sm:$0xff]
          %v426 = vld [vmem:[%s2 + $0xc8] sm:$0xff]
          %v427 = vld [vmem:[%s2 + $0xd0] sm:$0xff]
          %v428 = vld [vmem:[%s2 + $0xd8] sm:$0xff]
          %v429 = vld [vmem:[%s2 + $0xe0] sm:$0xff]
          %v430 = vld [vmem:[%s2 + $0xe8] sm:$0xff]
          %v431 = vld [vmem:[%s2 + $0xf0] sm:$0xff]
          %v432 = vld [vmem:[%s2 + $0xf8] sm:$0xff]
          %v433 = vld [vmem:[%s2 + $0x100] sm:$0xff]
          %v434 = vld [vmem:[%s2 + $0x108] sm:$0xff]
          %v435 = vld [vmem:[%s2 + $0x110] sm:$0xff]
          %v436 = vld [vmem:[%s2 + $0x118] sm:$0xff]
          %v437 = vld [vmem:[%s2 + $0x120] sm:$0x3]
          %v438 = vld [vmem:[%s2 + $0x128] sm:$0x3]
          %v439 = vld [vmem:[%s331] sm:$0xff]
          %v440 = vld [vmem:[%s331 + $0x8] sm:$0xff]
          %v441 = vld [vmem:[%s331 + $0x10] sm:$0xff]
          %v442 = vld [vmem:[%s331 + $0x18] sm:$0xff]
          %v443 = vld [vmem:[%s331 + $0x20] sm:$0xff]
          %v444 = vld [vmem:[%s331 + $0x28] sm:$0xff]
          %v445 = vld [vmem:[%s331 + $0x30] sm:$0xff]
          %v446 = vld [vmem:[%s331 + $0x38] sm:$0xff]
          %v447 = vld [vmem:[%s331 + $0x40] sm:$0xff]
          %v448 = vld [vmem:[%s331 + $0x48] sm:$0xff]
          %v449 = vld [vmem:[%s331 + $0x50] sm:$0xff]
          %v450 = vld [vmem:[%s331 + $0x58] sm:$0xff]
          %v451 = vld [vmem:[%s331 + $0x60] sm:$0xff]
          %v452 = vld [vmem:[%s331 + $0x68] sm:$0xff]
          %v453 = vld [vmem:[%s331 + $0x70] sm:$0xff]
          %v454 = vld [vmem:[%s331 + $0x78] sm:$0xff]
          %v455 = vld [vmem:[%s331 + $0x80] sm:$0xff]
          %v456 = vld [vmem:[%s331 + $0x88] sm:$0xff]
          %v457 = vld [vmem:[%s331 + $0x90] sm:$0x3]
          %vm458 = vcmask 146432
          %v460 = vsel %vm458, %v402, 0
          %v463 = vsel %vm458, %v404, 0
          %v466 = vsel %vm458, %v406, 0
          %v469 = vsel %vm458, %v408, 0
          %v472 = vsel %vm458, %v410, 0
          %v475 = vsel %vm458, %v412, 0
          %v478 = vsel %vm458, %v414, 0
          %v481 = vsel %vm458, %v416, 0
          %v484 = vsel %vm458, %v418, 0
          %v487 = vsel %vm458, %v420, 0
          %v490 = vsel %vm458, %v422, 0
          %v493 = vsel %vm458, %v424, 0
          %v496 = vsel %vm458, %v426, 0
          %v499 = vsel %vm458, %v428, 0
          %v502 = vsel %vm458, %v430, 0
          %v505 = vsel %vm458, %v432, 0
          %v508 = vsel %vm458, %v434, 0
          %v511 = vsel %vm458, %v436, 0
          %v514 = vsel %vm458, %v438, 0
          %vm516 = vcmask 1041408
          %v518 = vsel %vm516, %v457, 0
          %520 = vmatprep.subr.mxu0 0.0
          %v521 = vand.u32 %v439, 4294901760
          %522 = vmatpush1.msra.mxu0 %v521
          %523 = vmatprep.subr.mxu0 0.0
          %v524 = vand.u32 %v440, 4294901760
          %525 = vmatpush1.msra.mxu0 %v524
          %526 = vmatprep.subr.mxu0 0.0
          %v527 = vand.u32 %v441, 4294901760
          %528 = vmatpush1.msra.mxu0 %v527
          %529 = vmatprep.subr.mxu0 0.0
          %v530 = vand.u32 %v442, 4294901760
          %531 = vmatpush1.msra.mxu0 %v530
          %532 = vmatprep.subr.mxu0 0.0
          %v533 = vand.u32 %v443, 4294901760
          %534 = vmatpush1.msra.mxu0 %v533
          %535 = vmatprep.subr.mxu0 0.0
          %v536 = vand.u32 %v444, 4294901760
          %537 = vmatpush1.msra.mxu0 %v536
          %538 = vmatprep.subr.mxu0 0.0
          %v539 = vand.u32 %v445, 4294901760
          %540 = vmatpush1.msra.mxu0 %v539
          %541 = vmatprep.subr.mxu0 0.0
          %v542 = vand.u32 %v446, 4294901760
          %543 = vmatpush1.msra.mxu0 %v542
          %544 = vmatprep.subr.mxu0 0.0
          %v545 = vand.u32 %v447, 4294901760
          %546 = vmatpush1.msra.mxu0 %v545
          %547 = vmatprep.subr.mxu0 0.0
          %v548 = vand.u32 %v448, 4294901760
          %549 = vmatpush1.msra.mxu0 %v548
          %550 = vmatprep.subr.mxu0 0.0
          %v551 = vand.u32 %v449, 4294901760
          %552 = vmatpush1.msra.mxu0 %v551
          %553 = vmatprep.subr.mxu0 0.0
          %v554 = vand.u32 %v450, 4294901760
          %555 = vmatpush1.msra.mxu0 %v554
          %556 = vmatprep.subr.mxu0 0.0
          %v557 = vand.u32 %v451, 4294901760
          %558 = vmatpush1.msra.mxu0 %v557
          %559 = vmatprep.subr.mxu0 0.0
          %v560 = vand.u32 %v452, 4294901760
          %561 = vmatpush1.msra.mxu0 %v560
          %562 = vmatprep.subr.mxu0 0.0
          %v563 = vand.u32 %v453, 4294901760
          %564 = vmatpush1.msra.mxu0 %v563
          %565 = vmatprep.subr.mxu0 0.0
          %v566 = vand.u32 %v454, 4294901760
          %567 = vmatpush1.msra.mxu0 %v566
          %568 = vmatprep.subr.mxu0 0.0
          %v569 = vand.u32 %v455, 4294901760
          %570 = vmatpush1.msra.mxu0 %v569
          %571 = vmatprep.subr.mxu0 0.0
          %v572 = vand.u32 %v456, 4294901760
          %573 = vmatpush1.msra.mxu0 %v572
          %574 = vmatprep.subr.mxu0 0.0
          %v575 = vand.u32 %v518, 4294901760
          %576 = vmatpush1.msra.mxu0 %v575
          %577 = vmatprep.subr.mxu0 0.0
          %578 = vmatpush1.msra.mxu0 0.0
          %579 = vmatprep.subr.mxu0 0.0
          %580 = vmatpush1.msra.mxu0 0.0
          %581 = vmatprep.subr.mxu0 0.0
          %582 = vmatpush1.msra.mxu0 0.0
          %583 = vmatprep.subr.mxu0 0.0
          %584 = vmatpush1.msra.mxu0 0.0
          %585 = vmatprep.subr.mxu0 0.0
          %586 = vmatpush1.msra.mxu0 0.0
          %587 = vmatprep.subr.mxu0 0.0
          %588 = vmatpush1.msra.mxu0 0.0
          %589 = vmatprep.subr.mxu0 0.0
          %590 = vmatpush1.msra.mxu0 0.0
          %591 = vmatprep.subr.mxu0 0.0
          %592 = vmatpush1.msra.mxu0 0.0
          %593 = vmatprep.subr.mxu0 0.0
          %594 = vmatpush1.msra.mxu0 0.0
          %595 = vmatprep.subr.mxu0 0.0
          %596 = vmatpush1.msra.mxu0 0.0
          %597 = vmatprep.subr.mxu0 0.0
          %598 = vmatpush1.msra.mxu0 0.0
          %599 = vmatprep.subr.mxu0 0.0
          %600 = vmatpush1.msra.mxu0 0.0
          %601 = vmatprep.subr.mxu0 0.0
          %602 = vmatpush1.msra.mxu0 0.0
          %v603 = vand.u32 %v460, 4294901760
          %v604 = vsub.f32 %v460, %v603
          %v605 = vand.u32 %v604, 4294901760
          %v606 = vsub.f32 %v604, %v605
          %v607 = vand.u32 %v606, 4294901760
          %608 = vmatprep.mubr.f32.mxu0 %v607
          %v609 = vand.u32 %v401, 4294901760
          %v610 = vsub.f32 %v401, %v609
          %v611 = vand.u32 %v610, 4294901760
          %v612 = vsub.f32 %v610, %v611
          %v613 = vand.u32 %v612, 4294901760
          %614 = vmatmul.mubr.f32.gmra.mrb[0].mxu0 %v613
          %v615 = vpop.f32.mrb[0].mxu0
          %v616 = vadd.f32 0.0, %v615
          %v617 = vpop.f32.mrb[0].mxu0
          %v618 = vand.u32 %v463, 4294901760
          %v619 = vsub.f32 %v463, %v618
          %v620 = vand.u32 %v619, 4294901760
          %v621 = vsub.f32 %v619, %v620
          %v622 = vand.u32 %v621, 4294901760
          %623 = vmatprep.mubr.f32.mxu0 %v622
          %v624 = vand.u32 %v403, 4294901760
          %v625 = vsub.f32 %v403, %v624
          %v626 = vand.u32 %v625, 4294901760
          %v627 = vsub.f32 %v625, %v626
          %v628 = vand.u32 %v627, 4294901760
          %629 = vmatmul.mubr.f32.gmra.mrb[0].mxu0 %v628
          %v630 = vpop.f32.mrb[0].mxu0
          %v631 = vadd.f32 0.0, %v630
          %v632 = vpop.f32.mrb[0].mxu0
          %v633 = vand.u32 %v466, 4294901760
          %v634 = vsub.f32 %v466, %v633
          %v635 = vand.u32 %v634, 4294901760
          %v636 = vsub.f32 %v634, %v635
          %v637 = vand.u32 %v636, 4294901760
          %638 = vmatprep.mubr.f32.mxu0 %v637
          %v639 = vand.u32 %v405, 4294901760
          %v640 = vsub.f32 %v405, %v639
          %v641 = vand.u32 %v640, 4294901760
          %v642 = vsub.f32 %v640, %v641
          %v643 = vand.u32 %v642, 4294901760
          %644 = vmatmul.mubr.f32.gmra.mrb[0].mxu0 %v643
          %v645 = vpop.f32.mrb[0].mxu0
          %v646 = vadd.f32 0.0, %v645
          %v647 = vpop.f32.mrb[0].mxu0
          %v648 = vand.u32 %v469, 4294901760
          %v649 = vsub.f32 %v469, %v648
          %v650 = vand.u32 %v649, 4294901760
          %v651 = vsub.f32 %v649, %v650
          %v652 = vand.u32 %v651, 4294901760
          %653 = vmatprep.mubr.f32.mxu0 %v652
          %v654 = vand.u32 %v407, 4294901760
          %v655 = vsub.f32 %v407, %v654
          %v656 = vand.u32 %v655, 4294901760
          %v657 = vsub.f32 %v655, %v656
          %v658 = vand.u32 %v657, 4294901760
          %659 = vmatmul.mubr.f32.gmra.mrb[0].mxu0 %v658
          %v660 = vpop.f32.mrb[0].mxu0
          %v661 = vadd.f32 0.0, %v660
          %v662 = vpop.f32.mrb[0].mxu0
          %v663 = vand.u32 %v472, 4294901760
          %v664 = vsub.f32 %v472, %v663
          %v665 = vand.u32 %v664, 4294901760
          %v666 = vsub.f32 %v664, %v665
          %v667 = vand.u32 %v666, 4294901760
          %668 = vmatprep.mubr.f32.mxu0 %v667
          %v669 = vand.u32 %v409, 4294901760
          %v670 = vsub.f32 %v409, %v669
          %v671 = vand.u32 %v670, 4294901760
          %v672 = vsub.f32 %v670, %v671
          %v673 = vand.u32 %v672, 4294901760
          %674 = vmatmul.mubr.f32.gmra.mrb[0].mxu0 %v673
          %v675 = vpop.f32.mrb[0].mxu0
          %v676 = vadd.f32 0.0, %v675
          %v677 = vpop.f32.mrb[0].mxu0
          %v678 = vand.u32 %v475, 4294901760
          %v679 = vsub.f32 %v475, %v678
          %v680 = vand.u32 %v679, 4294901760
          %v681 = vsub.f32 %v679, %v680
          %v682 = vand.u32 %v681, 4294901760
          %683 = vmatprep.mubr.f32.mxu0 %v682
          %v684 = vand.u32 %v411, 4294901760
          %v685 = vsub.f32 %v411, %v684
          %v686 = vand.u32 %v685, 4294901760
          %v687 = vsub.f32 %v685, %v686
          %v688 = vand.u32 %v687, 4294901760
          %689 = vmatmul.mubr.f32.gmra.mrb[0].mxu0 %v688
          %v690 = vpop.f32.mrb[0].mxu0
          %v691 = vadd.f32 0.0, %v690
          %v692 = vpop.f32.mrb[0].mxu0
          %v693 = vand.u32 %v478, 4294901760
          %v694 = vsub.f32 %v478, %v693
          %v695 = vand.u32 %v694, 4294901760
          %v696 = vsub.f32 %v694, %v695
          %v697 = vand.u32 %v696, 4294901760
          %698 = vmatprep.mubr.f32.mxu0 %v697
          %v699 = vand.u32 %v413, 4294901760
          %v700 = vsub.f32 %v413, %v699
          %v701 = vand.u32 %v700, 4294901760
          %v702 = vsub.f32 %v700, %v701
          %v703 = vand.u32 %v702, 4294901760
          %704 = vmatmul.mubr.f32.gmra.mrb[0].mxu0 %v703
          %v705 = vpop.f32.mrb[0].mxu0
          %v706 = vadd.f32 0.0, %v705
          %v707 = vpop.f32.mrb[0].mxu0
          %v708 = vand.u32 %v481, 4294901760
          %v709 = vsub.f32 %v481, %v708
          %v710 = vand.u32 %v709, 4294901760
          %v711 = vsub.f32 %v709, %v710
          %v712 = vand.u32 %v711, 4294901760
          %713 = vmatprep.mubr.f32.mxu0 %v712
          %v714 = vand.u32 %v415, 4294901760
          %v715 = vsub.f32 %v415, %v714
          %v716 = vand.u32 %v715, 4294901760
          %v717 = vsub.f32 %v715, %v716
          %v718 = vand.u32 %v717, 4294901760
          %719 = vmatmul.mubr.f32.gmra.mrb[0].mxu0 %v718
          %v720 = vpop.f32.mrb[0].mxu0
          %v721 = vadd.f32 0.0, %v720
          %v722 = vpop.f32.mrb[0].mxu0
          %v723 = vand.u32 %v484, 4294901760
          %v724 = vsub.f32 %v484, %v723
          %v725 = vand.u32 %v724, 4294901760
          %v726 = vsub.f32 %v724, %v725
          %v727 = vand.u32 %v726, 4294901760
          %728 = vmatprep.mubr.f32.mxu0 %v727
          %v729 = vand.u32 %v417, 4294901760
          %v730 = vsub.f32 %v417, %v729
          %v731 = vand.u32 %v730, 4294901760
          %v732 = vsub.f32 %v730, %v731
          %v733 = vand.u32 %v732, 4294901760
          %734 = vmatmul.mubr.f32.gmra.mrb[0].mxu0 %v733
          %v735 = vpop.f32.mrb[0].mxu0
          %v736 = vadd.f32 0.0, %v735
          %v737 = vpop.f32.mrb[0].mxu0
          %v738 = vand.u32 %v487, 4294901760
          %v739 = vsub.f32 %v487, %v738
          %v740 = vand.u32 %v739, 4294901760
          %v741 = vsub.f32 %v739, %v740
          %v742 = vand.u32 %v741, 4294901760
          %743 = vmatprep.mubr.f32.mxu0 %v742
          %v744 = vand.u32 %v419, 4294901760
          %v745 = vsub.f32 %v419, %v744
          %v746 = vand.u32 %v745, 4294901760
          %v747 = vsub.f32 %v745, %v746
          %v748 = vand.u32 %v747, 4294901760
          %749 = vmatmul.mubr.f32.gmra.mrb[0].mxu0 %v748
          %v750 = vpop.f32.mrb[0].mxu0
          %v751 = vadd.f32 0.0, %v750
          %v752 = vpop.f32.mrb[0].mxu0
          %v753 = vand.u32 %v490, 4294901760
          %v754 = vsub.f32 %v490, %v753
          %v755 = vand.u32 %v754, 4294901760
          %v756 = vsub.f32 %v754, %v755
          %v757 = vand.u32 %v756, 4294901760
          %758 = vmatprep.mubr.f32.mxu0 %v757
          %v759 = vand.u32 %v421, 4294901760
          %v760 = vsub.f32 %v421, %v759
          %v761 = vand.u32 %v760, 4294901760
          %v762 = vsub.f32 %v760, %v761
          %v763 = vand.u32 %v762, 4294901760
          %764 = vmatmul.mubr.f32.gmra.mrb[0].mxu0 %v763
          %v765 = vpop.f32.mrb[0].mxu0
          %v766 = vadd.f32 0.0, %v765
          %v767 = vpop.f32.mrb[0].mxu0
          %v768 = vand.u32 %v493, 4294901760
          %v769 = vsub.f32 %v493, %v768
          %v770 = vand.u32 %v769, 4294901760
          %v771 = vsub.f32 %v769, %v770
          %v772 = vand.u32 %v771, 4294901760
          %773 = vmatprep.mubr.f32.mxu0 %v772
          %v774 = vand.u32 %v423, 4294901760
          %v775 = vsub.f32 %v423, %v774
          %v776 = vand.u32 %v775, 4294901760
          %v777 = vsub.f32 %v775, %v776
          %v778 = vand.u32 %v777, 4294901760
          %779 = vmatmul.mubr.f32.gmra.mrb[0].mxu0 %v778
          %v780 = vpop.f32.mrb[0].mxu0
          %v781 = vadd.f32 0.0, %v780
          %v782 = vpop.f32.mrb[0].mxu0
          %v783 = vand.u32 %v496, 4294901760
          %v784 = vsub.f32 %v496, %v783
          %v785 = vand.u32 %v784, 4294901760
          %v786 = vsub.f32 %v784, %v785
          %v787 = vand.u32 %v786, 4294901760
          %788 = vmatprep.mubr.f32.mxu0 %v787
          %v789 = vand.u32 %v425, 4294901760
          %v790 = vsub.f32 %v425, %v789
          %v791 = vand.u32 %v790, 4294901760
          %v792 = vsub.f32 %v790, %v791
          %v793 = vand.u32 %v792, 4294901760
          %794 = vmatmul.mubr.f32.gmra.mrb[0].mxu0 %v793
          %v795 = vpop.f32.mrb[0].mxu0
          %v796 = vadd.f32 0.0, %v795
          %v797 = vpop.f32.mrb[0].mxu0
          %v798 = vand.u32 %v499, 4294901760
          %v799 = vsub.f32 %v499, %v798
          %v800 = vand.u32 %v799, 4294901760
          %v801 = vsub.f32 %v799, %v800
          %v802 = vand.u32 %v801, 4294901760
          %803 = vmatprep.mubr.f32.mxu0 %v802
          %v804 = vand.u32 %v427, 4294901760
          %v805 = vsub.f32 %v427, %v804
          %v806 = vand.u32 %v805, 4294901760
          %v807 = vsub.f32 %v805, %v806
          %v808 = vand.u32 %v807, 4294901760
          %809 = vmatmul.mubr.f32.gmra.mrb[0].mxu0 %v808
          %v810 = vpop.f32.mrb[0].mxu0
          %v811 = vadd.f32 0.0, %v810
          %v812 = vpop.f32.mrb[0].mxu0
          %v813 = vand.u32 %v502, 4294901760
          %v814 = vsub.f32 %v502, %v813
          %v815 = vand.u32 %v814, 4294901760
          %v816 = vsub.f32 %v814, %v815
          %v817 = vand.u32 %v816, 4294901760
          %818 = vmatprep.mubr.f32.mxu0 %v817
          %v819 = vand.u32 %v429, 4294901760
          %v820 = vsub.f32 %v429, %v819
          %v821 = vand.u32 %v820, 4294901760
          %v822 = vsub.f32 %v820, %v821
          %v823 = vand.u32 %v822, 4294901760
          %824 = vmatmul.mubr.f32.gmra.mrb[0].mxu0 %v823
          %v825 = vpop.f32.mrb[0].mxu0
          %v826 = vadd.f32 0.0, %v825
          %v827 = vpop.f32.mrb[0].mxu0
          %v828 = vand.u32 %v505, 4294901760
          %v829 = vsub.f32 %v505, %v828
          %v830 = vand.u32 %v829, 4294901760
          %v831 = vsub.f32 %v829, %v830
          %v832 = vand.u32 %v831, 4294901760
          %833 = vmatprep.mubr.f32.mxu0 %v832
          %v834 = vand.u32 %v431, 4294901760
          %v835 = vsub.f32 %v431, %v834
          %v836 = vand.u32 %v835, 4294901760
          %v837 = vsub.f32 %v835, %v836
          %v838 = vand.u32 %v837, 4294901760
          %839 = vmatmul.mubr.f32.gmra.mrb[0].mxu0 %v838
          %v840 = vpop.f32.mrb[0].mxu0
          %v841 = vadd.f32 0.0, %v840
          %v842 = vpop.f32.mrb[0].mxu0
          %v843 = vand.u32 %v508, 4294901760
          %v844 = vsub.f32 %v508, %v843
          %v845 = vand.u32 %v844, 4294901760
          %v846 = vsub.f32 %v844, %v845
          %v847 = vand.u32 %v846, 4294901760
          %848 = vmatprep.mubr.f32.mxu0 %v847
          %v849 = vand.u32 %v433, 4294901760
          %v850 = vsub.f32 %v433, %v849
          %v851 = vand.u32 %v850, 4294901760
          %v852 = vsub.f32 %v850, %v851
          %v853 = vand.u32 %v852, 4294901760
          %854 = vmatmul.mubr.f32.gmra.mrb[0].mxu0 %v853
          %v855 = vpop.f32.mrb[0].mxu0
          %v856 = vadd.f32 0.0, %v855
          %v857 = vpop.f32.mrb[0].mxu0
          %v858 = vand.u32 %v511, 4294901760
          %v859 = vsub.f32 %v511, %v858
          %v860 = vand.u32 %v859, 4294901760
          %v861 = vsub.f32 %v859, %v860
          %v862 = vand.u32 %v861, 4294901760
          %863 = vmatprep.mubr.f32.mxu0 %v862
          %v864 = vand.u32 %v435, 4294901760
          %v865 = vsub.f32 %v435, %v864
          %v866 = vand.u32 %v865, 4294901760
          %v867 = vsub.f32 %v865, %v866
          %v868 = vand.u32 %v867, 4294901760
          %869 = vmatmul.mubr.f32.gmra.mrb[0].mxu0 %v868
          %v870 = vpop.f32.mrb[0].mxu0
          %v871 = vadd.f32 0.0, %v870
          %v872 = vpop.f32.mrb[0].mxu0
          %v873 = vand.u32 %v514, 4294901760
          %v874 = vsub.f32 %v514, %v873
          %v875 = vand.u32 %v874, 4294901760
          %v876 = vsub.f32 %v874, %v875
          %v877 = vand.u32 %v876, 4294901760
          %878 = vmatprep.mubr.f32.mxu0 %v877
          %v879 = vand.u32 %v437, 4294901760
          %v880 = vsub.f32 %v437, %v879
          %v881 = vand.u32 %v880, 4294901760
          %v882 = vsub.f32 %v880, %v881
          %v883 = vand.u32 %v882, 4294901760
          %884 = vmatmul.mubr.f32.gmra.mrb[0].mxu0 %v883
          %v885 = vpop.f32.mrb[0].mxu0
          %v886 = vadd.f32 0.0, %v885
          %v887 = vpop.f32.mrb[0].mxu0
          %888 = vdwg.mxu0
          %889 = vmatprep.subr.mxu0 0.0
          %v890 = vand.u32 %v439, 4294901760
          %v891 = vsub.f32 %v439, %v890
          %v892 = vand.u32 %v891, 4294901760
          %v893 = vsub.f32 %v891, %v892
          %v894 = vand.u32 %v893, 4294901760
          %895 = vmatpush1.msra.mxu0 %v894
          %896 = vmatprep.subr.mxu0 0.0
          %v897 = vand.u32 %v440, 4294901760
          %v898 = vsub.f32 %v440, %v897
          %v899 = vand.u32 %v898, 4294901760
          %v900 = vsub.f32 %v898, %v899
          %v901 = vand.u32 %v900, 4294901760
          %902 = vmatpush1.msra.mxu0 %v901
          %903 = vmatprep.subr.mxu0 0.0
          %v904 = vand.u32 %v441, 4294901760
          %v905 = vsub.f32 %v441, %v904
          %v906 = vand.u32 %v905, 4294901760
          %v907 = vsub.f32 %v905, %v906
          %v908 = vand.u32 %v907, 4294901760
          %909 = vmatpush1.msra.mxu0 %v908
          %910 = vmatprep.subr.mxu0 0.0
          %v911 = vand.u32 %v442, 4294901760
          %v912 = vsub.f32 %v442, %v911
          %v913 = vand.u32 %v912, 4294901760
          %v914 = vsub.f32 %v912, %v913
          %v915 = vand.u32 %v914, 4294901760
          %916 = vmatpush1.msra.mxu0 %v915
          %917 = vmatprep.subr.mxu0 0.0
          %v918 = vand.u32 %v443, 4294901760
          %v919 = vsub.f32 %v443, %v918
          %v920 = vand.u32 %v919, 4294901760
          %v921 = vsub.f32 %v919, %v920
          %v922 = vand.u32 %v921, 4294901760
          %923 = vmatpush1.msra.mxu0 %v922
          %924 = vmatprep.subr.mxu0 0.0
          %v925 = vand.u32 %v444, 4294901760
          %v926 = vsub.f32 %v444, %v925
          %v927 = vand.u32 %v926, 4294901760
          %v928 = vsub.f32 %v926, %v927
          %v929 = vand.u32 %v928, 4294901760
          %930 = vmatpush1.msra.mxu0 %v929
          %931 = vmatprep.subr.mxu0 0.0
          %v932 = vand.u32 %v445, 4294901760
          %v933 = vsub.f32 %v445, %v932
          %v934 = vand.u32 %v933, 4294901760
          %v935 = vsub.f32 %v933, %v934
          %v936 = vand.u32 %v935, 4294901760
          %937 = vmatpush1.msra.mxu0 %v936
          %938 = vmatprep.subr.mxu0 0.0
          %v939 = vand.u32 %v446, 4294901760
          %v940 = vsub.f32 %v446, %v939
          %v941 = vand.u32 %v940, 4294901760
          %v942 = vsub.f32 %v940, %v941
          %v943 = vand.u32 %v942, 4294901760
          %944 = vmatpush1.msra.mxu0 %v943
          %945 = vmatprep.subr.mxu0 0.0
          %v946 = vand.u32 %v447, 4294901760
          %v947 = vsub.f32 %v447, %v946
          %v948 = vand.u32 %v947, 4294901760
          %v949 = vsub.f32 %v947, %v948
          %v950 = vand.u32 %v949, 4294901760
          %951 = vmatpush1.msra.mxu0 %v950
          %952 = vmatprep.subr.mxu0 0.0
          %v953 = vand.u32 %v448, 4294901760
          %v954 = vsub.f32 %v448, %v953
          %v955 = vand.u32 %v954, 4294901760
          %v956 = vsub.f32 %v954, %v955
          %v957 = vand.u32 %v956, 4294901760
          %958 = vmatpush1.msra.mxu0 %v957
          %959 = vmatprep.subr.mxu0 0.0
          %v960 = vand.u32 %v449, 4294901760
          %v961 = vsub.f32 %v449, %v960
          %v962 = vand.u32 %v961, 4294901760
          %v963 = vsub.f32 %v961, %v962
          %v964 = vand.u32 %v963, 4294901760
          %965 = vmatpush1.msra.mxu0 %v964
          %966 = vmatprep.subr.mxu0 0.0
          %v967 = vand.u32 %v450, 4294901760
          %v968 = vsub.f32 %v450, %v967
          %v969 = vand.u32 %v968, 4294901760
          %v970 = vsub.f32 %v968, %v969
          %v971 = vand.u32 %v970, 4294901760
          %972 = vmatpush1.msra.mxu0 %v971
          %973 = vmatprep.subr.mxu0 0.0
          %v974 = vand.u32 %v451, 4294901760
          %v975 = vsub.f32 %v451, %v974
          %v976 = vand.u32 %v975, 4294901760
          %v977 = vsub.f32 %v975, %v976
          %v978 = vand.u32 %v977, 4294901760
          %979 = vmatpush1.msra.mxu0 %v978
          %980 = vmatprep.subr.mxu0 0.0
          %v981 = vand.u32 %v452, 4294901760
          %v982 = vsub.f32 %v452, %v981
          %v983 = vand.u32 %v982, 4294901760
          %v984 = vsub.f32 %v982, %v983
          %v985 = vand.u32 %v984, 4294901760
          %986 = vmatpush1.msra.mxu0 %v985
          %987 = vmatprep.subr.mxu0 0.0
          %v988 = vand.u32 %v453, 4294901760
          %v989 = vsub.f32 %v453, %v988
          %v990 = vand.u32 %v989, 4294901760
          %v991 = vsub.f32 %v989, %v990
          %v992 = vand.u32 %v991, 4294901760
          %993 = vmatpush1.msra.mxu0 %v992
          %994 = vmatprep.subr.mxu0 0.0
          %v995 = vand.u32 %v454, 4294901760
          %v996 = vsub.f32 %v454, %v995
          %v997 = vand.u32 %v996, 4294901760
          %v998 = vsub.f32 %v996, %v997
          %v999 = vand.u32 %v998, 4294901760
          %1000 = vmatpush1.msra.mxu0 %v999
          %1001 = vmatprep.subr.mxu0 0.0
          %v1002 = vand.u32 %v455, 4294901760
          %v1003 = vsub.f32 %v455, %v1002
          %v1004 = vand.u32 %v1003, 4294901760
          %v1005 = vsub.f32 %v1003, %v1004
          %v1006 = vand.u32 %v1005, 4294901760
          %1007 = vmatpush1.msra.mxu0 %v1006
          %1008 = vmatprep.subr.mxu0 0.0
          %v1009 = vand.u32 %v456, 4294901760
          %v1010 = vsub.f32 %v456, %v1009
          %v1011 = vand.u32 %v1010, 4294901760
          %v1012 = vsub.f32 %v1010, %v1011
          %v1013 = vand.u32 %v1012, 4294901760
          %1014 = vmatpush1.msra.mxu0 %v1013
          %1015 = vmatprep.subr.mxu0 0.0
          %v1016 = vand.u32 %v518, 4294901760
          %v1017 = vsub.f32 %v518, %v1016
          %v1018 = vand.u32 %v1017, 4294901760
          %v1019 = vsub.f32 %v1017, %v1018
          %v1020 = vand.u32 %v1019, 4294901760
          %1021 = vmatpush1.msra.mxu0 %v1020
          %1022 = vmatprep.subr.mxu0 0.0
          %1023 = vmatpush1.msra.mxu0 0.0
          %1024 = vmatprep.subr.mxu0 0.0
          %1025 = vmatpush1.msra.mxu0 0.0
          %1026 = vmatprep.subr.mxu0 0.0
          %1027 = vmatpush1.msra.mxu0 0.0
          %1028 = vmatprep.subr.mxu0 0.0
          %1029 = vmatpush1.msra.mxu0 0.0
          %1030 = vmatprep.subr.mxu0 0.0
          %1031 = vmatpush1.msra.mxu0 0.0
          %1032 = vmatprep.subr.mxu0 0.0
          %1033 = vmatpush1.msra.mxu0 0.0
          %1034 = vmatprep.subr.mxu0 0.0
          %1035 = vmatpush1.msra.mxu0 0.0
          %1036 = vmatprep.subr.mxu0 0.0
          %1037 = vmatpush1.msra.mxu0 0.0
          %1038 = vmatprep.subr.mxu0 0.0
          %1039 = vmatpush1.msra.mxu0 0.0
          %1040 = vmatprep.subr.mxu0 0.0
          %1041 = vmatpush1.msra.mxu0 0.0
          %1042 = vmatprep.subr.mxu0 0.0
          %1043 = vmatpush1.msra.mxu0 0.0
          %1044 = vmatprep.subr.mxu0 0.0
          %1045 = vmatpush1.msra.mxu0 0.0
          %1046 = vmatprep.subr.mxu0 0.0
          %1047 = vmatpush1.msra.mxu0 0.0
          %v1048 = vand.u32 %v460, 4294901760
          %1049 = vmatprep.mubr.f32.mxu0 %v1048
          %v1050 = vand.u32 %v401, 4294901760
          %1051 = vmatmul.mubr.f32.gmra.mrb[0].mxu0 %v1050
          %v1052 = vpop.f32.mrb[0].mxu0
          %v1053 = vadd.f32 %v616, %v1052
          %v1054 = vpop.f32.mrb[0].mxu0
          %v1055 = vand.u32 %v463, 4294901760
          %1056 = vmatprep.mubr.f32.mxu0 %v1055
          %v1057 = vand.u32 %v403, 4294901760
          %1058 = vmatmul.mubr.f32.gmra.mrb[0].mxu0 %v1057
          %v1059 = vpop.f32.mrb[0].mxu0
          %v1060 = vadd.f32 %v631, %v1059
          %v1061 = vpop.f32.mrb[0].mxu0
          %v1062 = vand.u32 %v466, 4294901760
          %1063 = vmatprep.mubr.f32.mxu0 %v1062
          %v1064 = vand.u32 %v405, 4294901760
          %1065 = vmatmul.mubr.f32.gmra.mrb[0].mxu0 %v1064
          %v1066 = vpop.f32.mrb[0].mxu0
          %v1067 = vadd.f32 %v646, %v1066
          %v1068 = vpop.f32.mrb[0].mxu0
          %v1069 = vand.u32 %v469, 4294901760
          %1070 = vmatprep.mubr.f32.mxu0 %v1069
          %v1071 = vand.u32 %v407, 4294901760
          %1072 = vmatmul.mubr.f32.gmra.mrb[0].mxu0 %v1071
          %v1073 = vpop.f32.mrb[0].mxu0
          %v1074 = vadd.f32 %v661, %v1073
          %v1075 = vpop.f32.mrb[0].mxu0
          %v1076 = vand.u32 %v472, 4294901760
          %1077 = vmatprep.mubr.f32.mxu0 %v1076
          %v1078 = vand.u32 %v409, 4294901760
          %1079 = vmatmul.mubr.f32.gmra.mrb[0].mxu0 %v1078
          %v1080 = vpop.f32.mrb[0].mxu0
          %v1081 = vadd.f32 %v676, %v1080
          %v1082 = vpop.f32.mrb[0].mxu0
          %v1083 = vand.u32 %v475, 4294901760
          %1084 = vmatprep.mubr.f32.mxu0 %v1083
          %v1085 = vand.u32 %v411, 4294901760
          %1086 = vmatmul.mubr.f32.gmra.mrb[0].mxu0 %v1085
          %v1087 = vpop.f32.mrb[0].mxu0
          %v1088 = vadd.f32 %v691, %v1087
          %v1089 = vpop.f32.mrb[0].mxu0
          %v1090 = vand.u32 %v478, 4294901760
          %1091 = vmatprep.mubr.f32.mxu0 %v1090
          %v1092 = vand.u32 %v413, 4294901760
          %1093 = vmatmul.mubr.f32.gmra.mrb[0].mxu0 %v1092
          %v1094 = vpop.f32.mrb[0].mxu0
          %v1095 = vadd.f32 %v706, %v1094
          %v1096 = vpop.f32.mrb[0].mxu0
          %v1097 = vand.u32 %v481, 4294901760
          %1098 = vmatprep.mubr.f32.mxu0 %v1097
          %v1099 = vand.u32 %v415, 4294901760
          %1100 = vmatmul.mubr.f32.gmra.mrb[0].mxu0 %v1099
          %v1101 = vpop.f32.mrb[0].mxu0
          %v1102 = vadd.f32 %v721, %v1101
          %v1103 = vpop.f32.mrb[0].mxu0
          %v1104 = vand.u32 %v484, 4294901760
          %1105 = vmatprep.mubr.f32.mxu0 %v1104
          %v1106 = vand.u32 %v417, 4294901760
          %1107 = vmatmul.mubr.f32.gmra.mrb[0].mxu0 %v1106
          %v1108 = vpop.f32.mrb[0].mxu0
          %v1109 = vadd.f32 %v736, %v1108
          %v1110 = vpop.f32.mrb[0].mxu0
          %v1111 = vand.u32 %v487, 4294901760
          %1112 = vmatprep.mubr.f32.mxu0 %v1111
          %v1113 = vand.u32 %v419, 4294901760
          %1114 = vmatmul.mubr.f32.gmra.mrb[0].mxu0 %v1113
          %v1115 = vpop.f32.mrb[0].mxu0
          %v1116 = vadd.f32 %v751, %v1115
          %v1117 = vpop.f32.mrb[0].mxu0
          %v1118 = vand.u32 %v490, 4294901760
          %1119 = vmatprep.mubr.f32.mxu0 %v1118
          %v1120 = vand.u32 %v421, 4294901760
          %1121 = vmatmul.mubr.f32.gmra.mrb[0].mxu0 %v1120
          %v1122 = vpop.f32.mrb[0].mxu0
          %v1123 = vadd.f32 %v766, %v1122
          %v1124 = vpop.f32.mrb[0].mxu0
          %v1125 = vand.u32 %v493, 4294901760
          %1126 = vmatprep.mubr.f32.mxu0 %v1125
          %v1127 = vand.u32 %v423, 4294901760
          %1128 = vmatmul.mubr.f32.gmra.mrb[0].mxu0 %v1127
          %v1129 = vpop.f32.mrb[0].mxu0
          %v1130 = vadd.f32 %v781, %v1129
          %v1131 = vpop.f32.mrb[0].mxu0
          %v1132 = vand.u32 %v496, 4294901760
          %1133 = vmatprep.mubr.f32.mxu0 %v1132
          %v1134 = vand.u32 %v425, 4294901760
          %1135 = vmatmul.mubr.f32.gmra.mrb[0].mxu0 %v1134
          %v1136 = vpop.f32.mrb[0].mxu0
          %v1137 = vadd.f32 %v796, %v1136
          %v1138 = vpop.f32.mrb[0].mxu0
          %v1139 = vand.u32 %v499, 4294901760
          %1140 = vmatprep.mubr.f32.mxu0 %v1139
          %v1141 = vand.u32 %v427, 4294901760
          %1142 = vmatmul.mubr.f32.gmra.mrb[0].mxu0 %v1141
          %v1143 = vpop.f32.mrb[0].mxu0
          %v1144 = vadd.f32 %v811, %v1143
          %v1145 = vpop.f32.mrb[0].mxu0
          %v1146 = vand.u32 %v502, 4294901760
          %1147 = vmatprep.mubr.f32.mxu0 %v1146
          %v1148 = vand.u32 %v429, 4294901760
          %1149 = vmatmul.mubr.f32.gmra.mrb[0].mxu0 %v1148
          %v1150 = vpop.f32.mrb[0].mxu0
          %v1151 = vadd.f32 %v826, %v1150
          %v1152 = vpop.f32.mrb[0].mxu0
          %v1153 = vand.u32 %v505, 4294901760
          %1154 = vmatprep.mubr.f32.mxu0 %v1153
          %v1155 = vand.u32 %v431, 4294901760
          %1156 = vmatmul.mubr.f32.gmra.mrb[0].mxu0 %v1155
          %v1157 = vpop.f32.mrb[0].mxu0
          %v1158 = vadd.f32 %v841, %v1157
          %v1159 = vpop.f32.mrb[0].mxu0
          %v1160 = vand.u32 %v508, 4294901760
          %1161 = vmatprep.mubr.f32.mxu0 %v1160
          %v1162 = vand.u32 %v433, 4294901760
          %1163 = vmatmul.mubr.f32.gmra.mrb[0].mxu0 %v1162
          %v1164 = vpop.f32.mrb[0].mxu0
          %v1165 = vadd.f32 %v856, %v1164
          %v1166 = vpop.f32.mrb[0].mxu0
          %v1167 = vand.u32 %v511, 4294901760
          %1168 = vmatprep.mubr.f32.mxu0 %v1167
          %v1169 = vand.u32 %v435, 4294901760
          %1170 = vmatmul.mubr.f32.gmra.mrb[0].mxu0 %v1169
          %v1171 = vpop.f32.mrb[0].mxu0
          %v1172 = vadd.f32 %v871, %v1171
          %v1173 = vpop.f32.mrb[0].mxu0
          %v1174 = vand.u32 %v514, 4294901760
          %1175 = vmatprep.mubr.f32.mxu0 %v1174
          %v1176 = vand.u32 %v437, 4294901760
          %1177 = vmatmul.mubr.f32.gmra.mrb[0].mxu0 %v1176
          %v1178 = vpop.f32.mrb[0].mxu0
          %v1179 = vadd.f32 %v886, %v1178
          %v1180 = vpop.f32.mrb[0].mxu0
          %1181 = vdwg.mxu0
          %1182 = vmatprep.subr.mxu0 0.0
          %v1183 = vand.u32 %v439, 4294901760
          %v1184 = vsub.f32 %v439, %v1183
          %1185 = vmatpush1.msra.mxu0 %v1184
          %1186 = vmatprep.subr.mxu0 0.0
          %v1187 = vand.u32 %v440, 4294901760
          %v1188 = vsub.f32 %v440, %v1187
          %1189 = vmatpush1.msra.mxu0 %v1188
          %1190 = vmatprep.subr.mxu0 0.0
          %v1191 = vand.u32 %v441, 4294901760
          %v1192 = vsub.f32 %v441, %v1191
          %1193 = vmatpush1.msra.mxu0 %v1192
          %1194 = vmatprep.subr.mxu0 0.0
          %v1195 = vand.u32 %v442, 4294901760
          %v1196 = vsub.f32 %v442, %v1195
          %1197 = vmatpush1.msra.mxu0 %v1196
          %1198 = vmatprep.subr.mxu0 0.0
          %v1199 = vand.u32 %v443, 4294901760
          %v1200 = vsub.f32 %v443, %v1199
          %1201 = vmatpush1.msra.mxu0 %v1200
          %1202 = vmatprep.subr.mxu0 0.0
          %v1203 = vand.u32 %v444, 4294901760
          %v1204 = vsub.f32 %v444, %v1203
          %1205 = vmatpush1.msra.mxu0 %v1204
          %1206 = vmatprep.subr.mxu0 0.0
          %v1207 = vand.u32 %v445, 4294901760
          %v1208 = vsub.f32 %v445, %v1207
          %1209 = vmatpush1.msra.mxu0 %v1208
          %1210 = vmatprep.subr.mxu0 0.0
          %v1211 = vand.u32 %v446, 4294901760
          %v1212 = vsub.f32 %v446, %v1211
          %1213 = vmatpush1.msra.mxu0 %v1212
          %1214 = vmatprep.subr.mxu0 0.0
          %v1215 = vand.u32 %v447, 4294901760
          %v1216 = vsub.f32 %v447, %v1215
          %1217 = vmatpush1.msra.mxu0 %v1216
          %1218 = vmatprep.subr.mxu0 0.0
          %v1219 = vand.u32 %v448, 4294901760
          %v1220 = vsub.f32 %v448, %v1219
          %1221 = vmatpush1.msra.mxu0 %v1220
          %1222 = vmatprep.subr.mxu0 0.0
          %v1223 = vand.u32 %v449, 4294901760
          %v1224 = vsub.f32 %v449, %v1223
          %1225 = vmatpush1.msra.mxu0 %v1224
          %1226 = vmatprep.subr.mxu0 0.0
          %v1227 = vand.u32 %v450, 4294901760
          %v1228 = vsub.f32 %v450, %v1227
          %1229 = vmatpush1.msra.mxu0 %v1228
          %1230 = vmatprep.subr.mxu0 0.0
          %v1231 = vand.u32 %v451, 4294901760
          %v1232 = vsub.f32 %v451, %v1231
          %1233 = vmatpush1.msra.mxu0 %v1232
          %1234 = vmatprep.subr.mxu0 0.0
          %v1235 = vand.u32 %v452, 4294901760
          %v1236 = vsub.f32 %v452, %v1235
          %1237 = vmatpush1.msra.mxu0 %v1236
          %1238 = vmatprep.subr.mxu0 0.0
          %v1239 = vand.u32 %v453, 4294901760
          %v1240 = vsub.f32 %v453, %v1239
          %1241 = vmatpush1.msra.mxu0 %v1240
          %1242 = vmatprep.subr.mxu0 0.0
          %v1243 = vand.u32 %v454, 4294901760
          %v1244 = vsub.f32 %v454, %v1243
          %1245 = vmatpush1.msra.mxu0 %v1244
          %1246 = vmatprep.subr.mxu0 0.0
          %v1247 = vand.u32 %v455, 4294901760
          %v1248 = vsub.f32 %v455, %v1247
          %1249 = vmatpush1.msra.mxu0 %v1248
          %1250 = vmatprep.subr.mxu0 0.0
          %v1251 = vand.u32 %v456, 4294901760
          %v1252 = vsub.f32 %v456, %v1251
          %1253 = vmatpush1.msra.mxu0 %v1252
          %1254 = vmatprep.subr.mxu0 0.0
          %v1255 = vand.u32 %v518, 4294901760
          %v1256 = vsub.f32 %v518, %v1255
          %1257 = vmatpush1.msra.mxu0 %v1256
          %1258 = vmatprep.subr.mxu0 0.0
          %1259 = vmatpush1.msra.mxu0 0.0
          %1260 = vmatprep.subr.mxu0 0.0
          %1261 = vmatpush1.msra.mxu0 0.0
          %1262 = vmatprep.subr.mxu0 0.0
          %1263 = vmatpush1.msra.mxu0 0.0
          %1264 = vmatprep.subr.mxu0 0.0
          %1265 = vmatpush1.msra.mxu0 0.0
          %1266 = vmatprep.subr.mxu0 0.0
          %1267 = vmatpush1.msra.mxu0 0.0
          %1268 = vmatprep.subr.mxu0 0.0
          %1269 = vmatpush1.msra.mxu0 0.0
          %1270 = vmatprep.subr.mxu0 0.0
          %1271 = vmatpush1.msra.mxu0 0.0
          %1272 = vmatprep.subr.mxu0 0.0
          %1273 = vmatpush1.msra.mxu0 0.0
          %1274 = vmatprep.subr.mxu0 0.0
          %1275 = vmatpush1.msra.mxu0 0.0
          %1276 = vmatprep.subr.mxu0 0.0
          %1277 = vmatpush1.msra.mxu0 0.0
          %1278 = vmatprep.subr.mxu0 0.0
          %1279 = vmatpush1.msra.mxu0 0.0
          %1280 = vmatprep.subr.mxu0 0.0
          %1281 = vmatpush1.msra.mxu0 0.0
          %1282 = vmatprep.subr.mxu0 0.0
          %1283 = vmatpush1.msra.mxu0 0.0
          %v1284 = vand.u32 %v460, 4294901760
          %v1285 = vsub.f32 %v460, %v1284
          %1286 = vmatprep.mubr.f32.mxu0 %v1285
          %v1287 = vand.u32 %v401, 4294901760
          %v1288 = vsub.f32 %v401, %v1287
          %1289 = vmatmul.mubr.f32.gmra.mrb[0].mxu0 %v1288
          %v1290 = vpop.f32.mrb[0].mxu0
          %v1291 = vadd.f32 %v1053, %v1290
          %v1292 = vpop.f32.mrb[0].mxu0
          %v1293 = vand.u32 %v463, 4294901760
          %v1294 = vsub.f32 %v463, %v1293
          %1295 = vmatprep.mubr.f32.mxu0 %v1294
          %v1296 = vand.u32 %v403, 4294901760
          %v1297 = vsub.f32 %v403, %v1296
          %1298 = vmatmul.mubr.f32.gmra.mrb[0].mxu0 %v1297
          %v1299 = vpop.f32.mrb[0].mxu0
          %v1300 = vadd.f32 %v1060, %v1299
          %v1301 = vpop.f32.mrb[0].mxu0
          %v1302 = vand.u32 %v466, 4294901760
          %v1303 = vsub.f32 %v466, %v1302
          %1304 = vmatprep.mubr.f32.mxu0 %v1303
          %v1305 = vand.u32 %v405, 4294901760
          %v1306 = vsub.f32 %v405, %v1305
          %1307 = vmatmul.mubr.f32.gmra.mrb[0].mxu0 %v1306
          %v1308 = vpop.f32.mrb[0].mxu0
          %v1309 = vadd.f32 %v1067, %v1308
          %v1310 = vpop.f32.mrb[0].mxu0
          %v1311 = vand.u32 %v469, 4294901760
          %v1312 = vsub.f32 %v469, %v1311
          %1313 = vmatprep.mubr.f32.mxu0 %v1312
          %v1314 = vand.u32 %v407, 4294901760
          %v1315 = vsub.f32 %v407, %v1314
          %1316 = vmatmul.mubr.f32.gmra.mrb[0].mxu0 %v1315
          %v1317 = vpop.f32.mrb[0].mxu0
          %v1318 = vadd.f32 %v1074, %v1317
          %v1319 = vpop.f32.mrb[0].mxu0
          %v1320 = vand.u32 %v472, 4294901760
          %v1321 = vsub.f32 %v472, %v1320
          %1322 = vmatprep.mubr.f32.mxu0 %v1321
          %v1323 = vand.u32 %v409, 4294901760
          %v1324 = vsub.f32 %v409, %v1323
          %1325 = vmatmul.mubr.f32.gmra.mrb[0].mxu0 %v1324
          %v1326 = vpop.f32.mrb[0].mxu0
          %v1327 = vadd.f32 %v1081, %v1326
          %v1328 = vpop.f32.mrb[0].mxu0
          %v1329 = vand.u32 %v475, 4294901760
          %v1330 = vsub.f32 %v475, %v1329
          %1331 = vmatprep.mubr.f32.mxu0 %v1330
          %v1332 = vand.u32 %v411, 4294901760
          %v1333 = vsub.f32 %v411, %v1332
          %1334 = vmatmul.mubr.f32.gmra.mrb[0].mxu0 %v1333
          %v1335 = vpop.f32.mrb[0].mxu0
          %v1336 = vadd.f32 %v1088, %v1335
          %v1337 = vpop.f32.mrb[0].mxu0
          %v1338 = vand.u32 %v478, 4294901760
          %v1339 = vsub.f32 %v478, %v1338
          %1340 = vmatprep.mubr.f32.mxu0 %v1339
          %v1341 = vand.u32 %v413, 4294901760
          %v1342 = vsub.f32 %v413, %v1341
          %1343 = vmatmul.mubr.f32.gmra.mrb[0].mxu0 %v1342
          %v1344 = vpop.f32.mrb[0].mxu0
          %v1345 = vadd.f32 %v1095, %v1344
          %v1346 = vpop.f32.mrb[0].mxu0
          %v1347 = vand.u32 %v481, 4294901760
          %v1348 = vsub.f32 %v481, %v1347
          %1349 = vmatprep.mubr.f32.mxu0 %v1348
          %v1350 = vand.u32 %v415, 4294901760
          %v1351 = vsub.f32 %v415, %v1350
          %1352 = vmatmul.mubr.f32.gmra.mrb[0].mxu0 %v1351
          %v1353 = vpop.f32.mrb[0].mxu0
          %v1354 = vadd.f32 %v1102, %v1353
          %v1355 = vpop.f32.mrb[0].mxu0
          %v1356 = vand.u32 %v484, 4294901760
          %v1357 = vsub.f32 %v484, %v1356
          %1358 = vmatprep.mubr.f32.mxu0 %v1357
          %v1359 = vand.u32 %v417, 4294901760
          %v1360 = vsub.f32 %v417, %v1359
          %1361 = vmatmul.mubr.f32.gmra.mrb[0].mxu0 %v1360
          %v1362 = vpop.f32.mrb[0].mxu0
          %v1363 = vadd.f32 %v1109, %v1362
          %v1364 = vpop.f32.mrb[0].mxu0
          %v1365 = vand.u32 %v487, 4294901760
          %v1366 = vsub.f32 %v487, %v1365
          %1367 = vmatprep.mubr.f32.mxu0 %v1366
          %v1368 = vand.u32 %v419, 4294901760
          %v1369 = vsub.f32 %v419, %v1368
          %1370 = vmatmul.mubr.f32.gmra.mrb[0].mxu0 %v1369
          %v1371 = vpop.f32.mrb[0].mxu0
          %v1372 = vadd.f32 %v1116, %v1371
          %v1373 = vpop.f32.mrb[0].mxu0
          %v1374 = vand.u32 %v490, 4294901760
          %v1375 = vsub.f32 %v490, %v1374
          %1376 = vmatprep.mubr.f32.mxu0 %v1375
          %v1377 = vand.u32 %v421, 4294901760
          %v1378 = vsub.f32 %v421, %v1377
          %1379 = vmatmul.mubr.f32.gmra.mrb[0].mxu0 %v1378
          %v1380 = vpop.f32.mrb[0].mxu0
          %v1381 = vadd.f32 %v1123, %v1380
          %v1382 = vpop.f32.mrb[0].mxu0
          %v1383 = vand.u32 %v493, 4294901760
          %v1384 = vsub.f32 %v493, %v1383
          %1385 = vmatprep.mubr.f32.mxu0 %v1384
          %v1386 = vand.u32 %v423, 4294901760
          %v1387 = vsub.f32 %v423, %v1386
          %1388 = vmatmul.mubr.f32.gmra.mrb[0].mxu0 %v1387
          %v1389 = vpop.f32.mrb[0].mxu0
          %v1390 = vadd.f32 %v1130, %v1389
          %v1391 = vpop.f32.mrb[0].mxu0
          %v1392 = vand.u32 %v496, 4294901760
          %v1393 = vsub.f32 %v496, %v1392
          %1394 = vmatprep.mubr.f32.mxu0 %v1393
          %v1395 = vand.u32 %v425, 4294901760
          %v1396 = vsub.f32 %v425, %v1395
          %1397 = vmatmul.mubr.f32.gmra.mrb[0].mxu0 %v1396
          %v1398 = vpop.f32.mrb[0].mxu0
          %v1399 = vadd.f32 %v1137, %v1398
          %v1400 = vpop.f32.mrb[0].mxu0
          %v1401 = vand.u32 %v499, 4294901760
          %v1402 = vsub.f32 %v499, %v1401
          %1403 = vmatprep.mubr.f32.mxu0 %v1402
          %v1404 = vand.u32 %v427, 4294901760
          %v1405 = vsub.f32 %v427, %v1404
          %1406 = vmatmul.mubr.f32.gmra.mrb[0].mxu0 %v1405
          %v1407 = vpop.f32.mrb[0].mxu0
          %v1408 = vadd.f32 %v1144, %v1407
          %v1409 = vpop.f32.mrb[0].mxu0
          %v1410 = vand.u32 %v502, 4294901760
          %v1411 = vsub.f32 %v502, %v1410
          %1412 = vmatprep.mubr.f32.mxu0 %v1411
          %v1413 = vand.u32 %v429, 4294901760
          %v1414 = vsub.f32 %v429, %v1413
          %1415 = vmatmul.mubr.f32.gmra.mrb[0].mxu0 %v1414
          %v1416 = vpop.f32.mrb[0].mxu0
          %v1417 = vadd.f32 %v1151, %v1416
          %v1418 = vpop.f32.mrb[0].mxu0
          %v1419 = vand.u32 %v505, 4294901760
          %v1420 = vsub.f32 %v505, %v1419
          %1421 = vmatprep.mubr.f32.mxu0 %v1420
          %v1422 = vand.u32 %v431, 4294901760
          %v1423 = vsub.f32 %v431, %v1422
          %1424 = vmatmul.mubr.f32.gmra.mrb[0].mxu0 %v1423
          %v1425 = vpop.f32.mrb[0].mxu0
          %v1426 = vadd.f32 %v1158, %v1425
          %v1427 = vpop.f32.mrb[0].mxu0
          %v1428 = vand.u32 %v508, 4294901760
          %v1429 = vsub.f32 %v508, %v1428
          %1430 = vmatprep.mubr.f32.mxu0 %v1429
          %v1431 = vand.u32 %v433, 4294901760
          %v1432 = vsub.f32 %v433, %v1431
          %1433 = vmatmul.mubr.f32.gmra.mrb[0].mxu0 %v1432
          %v1434 = vpop.f32.mrb[0].mxu0
          %v1435 = vadd.f32 %v1165, %v1434
          %v1436 = vpop.f32.mrb[0].mxu0
          %v1437 = vand.u32 %v511, 4294901760
          %v1438 = vsub.f32 %v511, %v1437
          %1439 = vmatprep.mubr.f32.mxu0 %v1438
          %v1440 = vand.u32 %v435, 4294901760
          %v1441 = vsub.f32 %v435, %v1440
          %1442 = vmatmul.mubr.f32.gmra.mrb[0].mxu0 %v1441
          %v1443 = vpop.f32.mrb[0].mxu0
          %v1444 = vadd.f32 %v1172, %v1443
          %v1445 = vpop.f32.mrb[0].mxu0
          %v1446 = vand.u32 %v514, 4294901760
          %v1447 = vsub.f32 %v514, %v1446
          %1448 = vmatprep.mubr.f32.mxu0 %v1447
          %v1449 = vand.u32 %v437, 4294901760
          %v1450 = vsub.f32 %v437, %v1449
          %1451 = vmatmul.mubr.f32.gmra.mrb[0].mxu0 %v1450
          %v1452 = vpop.f32.mrb[0].mxu0
          %v1453 = vadd.f32 %v1179, %v1452
          %v1454 = vpop.f32.mrb[0].mxu0
          %1455 = vdwg.mxu0
          %1456 = vmatprep.subr.mxu0 0.0
          %v1457 = vand.u32 %v439, 4294901760
          %1458 = vmatpush1.msra.mxu0 %v1457
          %1459 = vmatprep.subr.mxu0 0.0
          %v1460 = vand.u32 %v440, 4294901760
          %1461 = vmatpush1.msra.mxu0 %v1460
          %1462 = vmatprep.subr.mxu0 0.0
          %v1463 = vand.u32 %v441, 4294901760
          %1464 = vmatpush1.msra.mxu0 %v1463
          %1465 = vmatprep.subr.mxu0 0.0
          %v1466 = vand.u32 %v442, 4294901760
          %1467 = vmatpush1.msra.mxu0 %v1466
          %1468 = vmatprep.subr.mxu0 0.0
          %v1469 = vand.u32 %v443, 4294901760
          %1470 = vmatpush1.msra.mxu0 %v1469
          %1471 = vmatprep.subr.mxu0 0.0
          %v1472 = vand.u32 %v444, 4294901760
          %1473 = vmatpush1.msra.mxu0 %v1472
          %1474 = vmatprep.subr.mxu0 0.0
          %v1475 = vand.u32 %v445, 4294901760
          %1476 = vmatpush1.msra.mxu0 %v1475
          %1477 = vmatprep.subr.mxu0 0.0
          %v1478 = vand.u32 %v446, 4294901760
          %1479 = vmatpush1.msra.mxu0 %v1478
          %1480 = vmatprep.subr.mxu0 0.0
          %v1481 = vand.u32 %v447, 4294901760
          %1482 = vmatpush1.msra.mxu0 %v1481
          %1483 = vmatprep.subr.mxu0 0.0
          %v1484 = vand.u32 %v448, 4294901760
          %1485 = vmatpush1.msra.mxu0 %v1484
          %1486 = vmatprep.subr.mxu0 0.0
          %v1487 = vand.u32 %v449, 4294901760
          %1488 = vmatpush1.msra.mxu0 %v1487
          %1489 = vmatprep.subr.mxu0 0.0
          %v1490 = vand.u32 %v450, 4294901760
          %1491 = vmatpush1.msra.mxu0 %v1490
          %1492 = vmatprep.subr.mxu0 0.0
          %v1493 = vand.u32 %v451, 4294901760
          %1494 = vmatpush1.msra.mxu0 %v1493
          %1495 = vmatprep.subr.mxu0 0.0
          %v1496 = vand.u32 %v452, 4294901760
          %1497 = vmatpush1.msra.mxu0 %v1496
          %1498 = vmatprep.subr.mxu0 0.0
          %v1499 = vand.u32 %v453, 4294901760
          %1500 = vmatpush1.msra.mxu0 %v1499
          %1501 = vmatprep.subr.mxu0 0.0
          %v1502 = vand.u32 %v454, 4294901760
          %1503 = vmatpush1.msra.mxu0 %v1502
          %1504 = vmatprep.subr.mxu0 0.0
          %v1505 = vand.u32 %v455, 4294901760
          %1506 = vmatpush1.msra.mxu0 %v1505
          %1507 = vmatprep.subr.mxu0 0.0
          %v1508 = vand.u32 %v456, 4294901760
          %1509 = vmatpush1.msra.mxu0 %v1508
          %1510 = vmatprep.subr.mxu0 0.0
          %v1511 = vand.u32 %v518, 4294901760
          %1512 = vmatpush1.msra.mxu0 %v1511
          %1513 = vmatprep.subr.mxu0 0.0
          %1514 = vmatpush1.msra.mxu0 0.0
          %1515 = vmatprep.subr.mxu0 0.0
          %1516 = vmatpush1.msra.mxu0 0.0
          %1517 = vmatprep.subr.mxu0 0.0
          %1518 = vmatpush1.msra.mxu0 0.0
          %1519 = vmatprep.subr.mxu0 0.0
          %1520 = vmatpush1.msra.mxu0 0.0
          %1521 = vmatprep.subr.mxu0 0.0
          %1522 = vmatpush1.msra.mxu0 0.0
          %1523 = vmatprep.subr.mxu0 0.0
          %1524 = vmatpush1.msra.mxu0 0.0
          %1525 = vmatprep.subr.mxu0 0.0
          %1526 = vmatpush1.msra.mxu0 0.0
          %1527 = vmatprep.subr.mxu0 0.0
          %1528 = vmatpush1.msra.mxu0 0.0
          %1529 = vmatprep.subr.mxu0 0.0
          %1530 = vmatpush1.msra.mxu0 0.0
          %1531 = vmatprep.subr.mxu0 0.0
          %1532 = vmatpush1.msra.mxu0 0.0
          %1533 = vmatprep.subr.mxu0 0.0
          %1534 = vmatpush1.msra.mxu0 0.0
          %1535 = vmatprep.subr.mxu0 0.0
          %1536 = vmatpush1.msra.mxu0 0.0
          %1537 = vmatprep.subr.mxu0 0.0
          %1538 = vmatpush1.msra.mxu0 0.0
          %v1539 = vand.u32 %v460, 4294901760
          %v1540 = vsub.f32 %v460, %v1539
          %v1541 = vand.u32 %v1540, 4294901760
          %1542 = vmatprep.mubr.f32.mxu0 %v1541
          %v1543 = vand.u32 %v401, 4294901760
          %v1544 = vsub.f32 %v401, %v1543
          %v1545 = vand.u32 %v1544, 4294901760
          %1546 = vmatmul.mubr.f32.gmra.mrb[0].mxu0 %v1545
          %v1547 = vpop.f32.mrb[0].mxu0
          %v1548 = vadd.f32 %v1291, %v1547
          %v1549 = vpop.f32.mrb[0].mxu0
          %v1550 = vand.u32 %v463, 4294901760
          %v1551 = vsub.f32 %v463, %v1550
          %v1552 = vand.u32 %v1551, 4294901760
          %1553 = vmatprep.mubr.f32.mxu0 %v1552
          %v1554 = vand.u32 %v403, 4294901760
          %v1555 = vsub.f32 %v403, %v1554
          %v1556 = vand.u32 %v1555, 4294901760
          %1557 = vmatmul.mubr.f32.gmra.mrb[0].mxu0 %v1556
          %v1558 = vpop.f32.mrb[0].mxu0
          %v1559 = vadd.f32 %v1300, %v1558
          %v1560 = vpop.f32.mrb[0].mxu0
          %v1561 = vand.u32 %v466, 4294901760
          %v1562 = vsub.f32 %v466, %v1561
          %v1563 = vand.u32 %v1562, 4294901760
          %1564 = vmatprep.mubr.f32.mxu0 %v1563
          %v1565 = vand.u32 %v405, 4294901760
          %v1566 = vsub.f32 %v405, %v1565
          %v1567 = vand.u32 %v1566, 4294901760
          %1568 = vmatmul.mubr.f32.gmra.mrb[0].mxu0 %v1567
          %v1569 = vpop.f32.mrb[0].mxu0
          %v1570 = vadd.f32 %v1309, %v1569
          %v1571 = vpop.f32.mrb[0].mxu0
          %v1572 = vand.u32 %v469, 4294901760
          %v1573 = vsub.f32 %v469, %v1572
          %v1574 = vand.u32 %v1573, 4294901760
          %1575 = vmatprep.mubr.f32.mxu0 %v1574
          %v1576 = vand.u32 %v407, 4294901760
          %v1577 = vsub.f32 %v407, %v1576
          %v1578 = vand.u32 %v1577, 4294901760
          %1579 = vmatmul.mubr.f32.gmra.mrb[0].mxu0 %v1578
          %v1580 = vpop.f32.mrb[0].mxu0
          %v1581 = vadd.f32 %v1318, %v1580
          %v1582 = vpop.f32.mrb[0].mxu0
          %v1583 = vand.u32 %v472, 4294901760
          %v1584 = vsub.f32 %v472, %v1583
          %v1585 = vand.u32 %v1584, 4294901760
          %1586 = vmatprep.mubr.f32.mxu0 %v1585
          %v1587 = vand.u32 %v409, 4294901760
          %v1588 = vsub.f32 %v409, %v1587
          %v1589 = vand.u32 %v1588, 4294901760
          %1590 = vmatmul.mubr.f32.gmra.mrb[0].mxu0 %v1589
          %v1591 = vpop.f32.mrb[0].mxu0
          %v1592 = vadd.f32 %v1327, %v1591
          %v1593 = vpop.f32.mrb[0].mxu0
          %v1594 = vand.u32 %v475, 4294901760
          %v1595 = vsub.f32 %v475, %v1594
          %v1596 = vand.u32 %v1595, 4294901760
          %1597 = vmatprep.mubr.f32.mxu0 %v1596
          %v1598 = vand.u32 %v411, 4294901760
          %v1599 = vsub.f32 %v411, %v1598
          %v1600 = vand.u32 %v1599, 4294901760
          %1601 = vmatmul.mubr.f32.gmra.mrb[0].mxu0 %v1600
          %v1602 = vpop.f32.mrb[0].mxu0
          %v1603 = vadd.f32 %v1336, %v1602
          %v1604 = vpop.f32.mrb[0].mxu0
          %v1605 = vand.u32 %v478, 4294901760
          %v1606 = vsub.f32 %v478, %v1605
          %v1607 = vand.u32 %v1606, 4294901760
          %1608 = vmatprep.mubr.f32.mxu0 %v1607
          %v1609 = vand.u32 %v413, 4294901760
          %v1610 = vsub.f32 %v413, %v1609
          %v1611 = vand.u32 %v1610, 4294901760
          %1612 = vmatmul.mubr.f32.gmra.mrb[0].mxu0 %v1611
          %v1613 = vpop.f32.mrb[0].mxu0
          %v1614 = vadd.f32 %v1345, %v1613
          %v1615 = vpop.f32.mrb[0].mxu0
          %v1616 = vand.u32 %v481, 4294901760
          %v1617 = vsub.f32 %v481, %v1616
          %v1618 = vand.u32 %v1617, 4294901760
          %1619 = vmatprep.mubr.f32.mxu0 %v1618
          %v1620 = vand.u32 %v415, 4294901760
          %v1621 = vsub.f32 %v415, %v1620
          %v1622 = vand.u32 %v1621, 4294901760
          %1623 = vmatmul.mubr.f32.gmra.mrb[0].mxu0 %v1622
          %v1624 = vpop.f32.mrb[0].mxu0
          %v1625 = vadd.f32 %v1354, %v1624
          %v1626 = vpop.f32.mrb[0].mxu0
          %v1627 = vand.u32 %v484, 4294901760
          %v1628 = vsub.f32 %v484, %v1627
          %v1629 = vand.u32 %v1628, 4294901760
          %1630 = vmatprep.mubr.f32.mxu0 %v1629
          %v1631 = vand.u32 %v417, 4294901760
          %v1632 = vsub.f32 %v417, %v1631
          %v1633 = vand.u32 %v1632, 4294901760
          %1634 = vmatmul.mubr.f32.gmra.mrb[0].mxu0 %v1633
          %v1635 = vpop.f32.mrb[0].mxu0
          %v1636 = vadd.f32 %v1363, %v1635
          %v1637 = vpop.f32.mrb[0].mxu0
          %v1638 = vand.u32 %v487, 4294901760
          %v1639 = vsub.f32 %v487, %v1638
          %v1640 = vand.u32 %v1639, 4294901760
          %1641 = vmatprep.mubr.f32.mxu0 %v1640
          %v1642 = vand.u32 %v419, 4294901760
          %v1643 = vsub.f32 %v419, %v1642
          %v1644 = vand.u32 %v1643, 4294901760
          %1645 = vmatmul.mubr.f32.gmra.mrb[0].mxu0 %v1644
          %v1646 = vpop.f32.mrb[0].mxu0
          %v1647 = vadd.f32 %v1372, %v1646
          %v1648 = vpop.f32.mrb[0].mxu0
          %v1649 = vand.u32 %v490, 4294901760
          %v1650 = vsub.f32 %v490, %v1649
          %v1651 = vand.u32 %v1650, 4294901760
          %1652 = vmatprep.mubr.f32.mxu0 %v1651
          %v1653 = vand.u32 %v421, 4294901760
          %v1654 = vsub.f32 %v421, %v1653
          %v1655 = vand.u32 %v1654, 4294901760
          %1656 = vmatmul.mubr.f32.gmra.mrb[0].mxu0 %v1655
          %v1657 = vpop.f32.mrb[0].mxu0
          %v1658 = vadd.f32 %v1381, %v1657
          %v1659 = vpop.f32.mrb[0].mxu0
          %v1660 = vand.u32 %v493, 4294901760
          %v1661 = vsub.f32 %v493, %v1660
          %v1662 = vand.u32 %v1661, 4294901760
          %1663 = vmatprep.mubr.f32.mxu0 %v1662
          %v1664 = vand.u32 %v423, 4294901760
          %v1665 = vsub.f32 %v423, %v1664
          %v1666 = vand.u32 %v1665, 4294901760
          %1667 = vmatmul.mubr.f32.gmra.mrb[0].mxu0 %v1666
          %v1668 = vpop.f32.mrb[0].mxu0
          %v1669 = vadd.f32 %v1390, %v1668
          %v1670 = vpop.f32.mrb[0].mxu0
          %v1671 = vand.u32 %v496, 4294901760
          %v1672 = vsub.f32 %v496, %v1671
          %v1673 = vand.u32 %v1672, 4294901760
          %1674 = vmatprep.mubr.f32.mxu0 %v1673
          %v1675 = vand.u32 %v425, 4294901760
          %v1676 = vsub.f32 %v425, %v1675
          %v1677 = vand.u32 %v1676, 4294901760
          %1678 = vmatmul.mubr.f32.gmra.mrb[0].mxu0 %v1677
          %v1679 = vpop.f32.mrb[0].mxu0
          %v1680 = vadd.f32 %v1399, %v1679
          %v1681 = vpop.f32.mrb[0].mxu0
          %v1682 = vand.u32 %v499, 4294901760
          %v1683 = vsub.f32 %v499, %v1682
          %v1684 = vand.u32 %v1683, 4294901760
          %1685 = vmatprep.mubr.f32.mxu0 %v1684
          %v1686 = vand.u32 %v427, 4294901760
          %v1687 = vsub.f32 %v427, %v1686
          %v1688 = vand.u32 %v1687, 4294901760
          %1689 = vmatmul.mubr.f32.gmra.mrb[0].mxu0 %v1688
          %v1690 = vpop.f32.mrb[0].mxu0
          %v1691 = vadd.f32 %v1408, %v1690
          %v1692 = vpop.f32.mrb[0].mxu0
          %v1693 = vand.u32 %v502, 4294901760
          %v1694 = vsub.f32 %v502, %v1693
          %v1695 = vand.u32 %v1694, 4294901760
          %1696 = vmatprep.mubr.f32.mxu0 %v1695
          %v1697 = vand.u32 %v429, 4294901760
          %v1698 = vsub.f32 %v429, %v1697
          %v1699 = vand.u32 %v1698, 4294901760
          %1700 = vmatmul.mubr.f32.gmra.mrb[0].mxu0 %v1699
          %v1701 = vpop.f32.mrb[0].mxu0
          %v1702 = vadd.f32 %v1417, %v1701
          %v1703 = vpop.f32.mrb[0].mxu0
          %v1704 = vand.u32 %v505, 4294901760
          %v1705 = vsub.f32 %v505, %v1704
          %v1706 = vand.u32 %v1705, 4294901760
          %1707 = vmatprep.mubr.f32.mxu0 %v1706
          %v1708 = vand.u32 %v431, 4294901760
          %v1709 = vsub.f32 %v431, %v1708
          %v1710 = vand.u32 %v1709, 4294901760
          %1711 = vmatmul.mubr.f32.gmra.mrb[0].mxu0 %v1710
          %v1712 = vpop.f32.mrb[0].mxu0
          %v1713 = vadd.f32 %v1426, %v1712
          %v1714 = vpop.f32.mrb[0].mxu0
          %v1715 = vand.u32 %v508, 4294901760
          %v1716 = vsub.f32 %v508, %v1715
          %v1717 = vand.u32 %v1716, 4294901760
          %1718 = vmatprep.mubr.f32.mxu0 %v1717
          %v1719 = vand.u32 %v433, 4294901760
          %v1720 = vsub.f32 %v433, %v1719
          %v1721 = vand.u32 %v1720, 4294901760
          %1722 = vmatmul.mubr.f32.gmra.mrb[0].mxu0 %v1721
          %v1723 = vpop.f32.mrb[0].mxu0
          %v1724 = vadd.f32 %v1435, %v1723
          %v1725 = vpop.f32.mrb[0].mxu0
          %v1726 = vand.u32 %v511, 4294901760
          %v1727 = vsub.f32 %v511, %v1726
          %v1728 = vand.u32 %v1727, 4294901760
          %1729 = vmatprep.mubr.f32.mxu0 %v1728
          %v1730 = vand.u32 %v435, 4294901760
          %v1731 = vsub.f32 %v435, %v1730
          %v1732 = vand.u32 %v1731, 4294901760
          %1733 = vmatmul.mubr.f32.gmra.mrb[0].mxu0 %v1732
          %v1734 = vpop.f32.mrb[0].mxu0
          %v1735 = vadd.f32 %v1444, %v1734
          %v1736 = vpop.f32.mrb[0].mxu0
          %v1737 = vand.u32 %v514, 4294901760
          %v1738 = vsub.f32 %v514, %v1737
          %v1739 = vand.u32 %v1738, 4294901760
          %1740 = vmatprep.mubr.f32.mxu0 %v1739
          %v1741 = vand.u32 %v437, 4294901760
          %v1742 = vsub.f32 %v437, %v1741
          %v1743 = vand.u32 %v1742, 4294901760
          %1744 = vmatmul.mubr.f32.gmra.mrb[0].mxu0 %v1743
          %v1745 = vpop.f32.mrb[0].mxu0
          %v1746 = vadd.f32 %v1453, %v1745
          %v1747 = vpop.f32.mrb[0].mxu0
          %1748 = vdwg.mxu0
          %1749 = vmatprep.subr.mxu0 0.0
          %v1750 = vand.u32 %v439, 4294901760
          %v1751 = vsub.f32 %v439, %v1750
          %v1752 = vand.u32 %v1751, 4294901760
          %1753 = vmatpush1.msra.mxu0 %v1752
          %1754 = vmatprep.subr.mxu0 0.0
          %v1755 = vand.u32 %v440, 4294901760
          %v1756 = vsub.f32 %v440, %v1755
          %v1757 = vand.u32 %v1756, 4294901760
          %1758 = vmatpush1.msra.mxu0 %v1757
          %1759 = vmatprep.subr.mxu0 0.0
          %v1760 = vand.u32 %v441, 4294901760
          %v1761 = vsub.f32 %v441, %v1760
          %v1762 = vand.u32 %v1761, 4294901760
          %1763 = vmatpush1.msra.mxu0 %v1762
          %1764 = vmatprep.subr.mxu0 0.0
          %v1765 = vand.u32 %v442, 4294901760
          %v1766 = vsub.f32 %v442, %v1765
          %v1767 = vand.u32 %v1766, 4294901760
          %1768 = vmatpush1.msra.mxu0 %v1767
          %1769 = vmatprep.subr.mxu0 0.0
          %v1770 = vand.u32 %v443, 4294901760
          %v1771 = vsub.f32 %v443, %v1770
          %v1772 = vand.u32 %v1771, 4294901760
          %1773 = vmatpush1.msra.mxu0 %v1772
          %1774 = vmatprep.subr.mxu0 0.0
          %v1775 = vand.u32 %v444, 4294901760
          %v1776 = vsub.f32 %v444, %v1775
          %v1777 = vand.u32 %v1776, 4294901760
          %1778 = vmatpush1.msra.mxu0 %v1777
          %1779 = vmatprep.subr.mxu0 0.0
          %v1780 = vand.u32 %v445, 4294901760
          %v1781 = vsub.f32 %v445, %v1780
          %v1782 = vand.u32 %v1781, 4294901760
          %1783 = vmatpush1.msra.mxu0 %v1782
          %1784 = vmatprep.subr.mxu0 0.0
          %v1785 = vand.u32 %v446, 4294901760
          %v1786 = vsub.f32 %v446, %v1785
          %v1787 = vand.u32 %v1786, 4294901760
          %1788 = vmatpush1.msra.mxu0 %v1787
          %1789 = vmatprep.subr.mxu0 0.0
          %v1790 = vand.u32 %v447, 4294901760
          %v1791 = vsub.f32 %v447, %v1790
          %v1792 = vand.u32 %v1791, 4294901760
          %1793 = vmatpush1.msra.mxu0 %v1792
          %1794 = vmatprep.subr.mxu0 0.0
          %v1795 = vand.u32 %v448, 4294901760
          %v1796 = vsub.f32 %v448, %v1795
          %v1797 = vand.u32 %v1796, 4294901760
          %1798 = vmatpush1.msra.mxu0 %v1797
          %1799 = vmatprep.subr.mxu0 0.0
          %v1800 = vand.u32 %v449, 4294901760
          %v1801 = vsub.f32 %v449, %v1800
          %v1802 = vand.u32 %v1801, 4294901760
          %1803 = vmatpush1.msra.mxu0 %v1802
          %1804 = vmatprep.subr.mxu0 0.0
          %v1805 = vand.u32 %v450, 4294901760
          %v1806 = vsub.f32 %v450, %v1805
          %v1807 = vand.u32 %v1806, 4294901760
          %1808 = vmatpush1.msra.mxu0 %v1807
          %1809 = vmatprep.subr.mxu0 0.0
          %v1810 = vand.u32 %v451, 4294901760
          %v1811 = vsub.f32 %v451, %v1810
          %v1812 = vand.u32 %v1811, 4294901760
          %1813 = vmatpush1.msra.mxu0 %v1812
          %1814 = vmatprep.subr.mxu0 0.0
          %v1815 = vand.u32 %v452, 4294901760
          %v1816 = vsub.f32 %v452, %v1815
          %v1817 = vand.u32 %v1816, 4294901760
          %1818 = vmatpush1.msra.mxu0 %v1817
          %1819 = vmatprep.subr.mxu0 0.0
          %v1820 = vand.u32 %v453, 4294901760
          %v1821 = vsub.f32 %v453, %v1820
          %v1822 = vand.u32 %v1821, 4294901760
          %1823 = vmatpush1.msra.mxu0 %v1822
          %1824 = vmatprep.subr.mxu0 0.0
          %v1825 = vand.u32 %v454, 4294901760
          %v1826 = vsub.f32 %v454, %v1825
          %v1827 = vand.u32 %v1826, 4294901760
          %1828 = vmatpush1.msra.mxu0 %v1827
          %1829 = vmatprep.subr.mxu0 0.0
          %v1830 = vand.u32 %v455, 4294901760
          %v1831 = vsub.f32 %v455, %v1830
          %v1832 = vand.u32 %v1831, 4294901760
          %1833 = vmatpush1.msra.mxu0 %v1832
          %1834 = vmatprep.subr.mxu0 0.0
          %v1835 = vand.u32 %v456, 4294901760
          %v1836 = vsub.f32 %v456, %v1835
          %v1837 = vand.u32 %v1836, 4294901760
          %1838 = vmatpush1.msra.mxu0 %v1837
          %1839 = vmatprep.subr.mxu0 0.0
          %v1840 = vand.u32 %v518, 4294901760
          %v1841 = vsub.f32 %v518, %v1840
          %v1842 = vand.u32 %v1841, 4294901760
          %1843 = vmatpush1.msra.mxu0 %v1842
          %1844 = vmatprep.subr.mxu0 0.0
          %1845 = vmatpush1.msra.mxu0 0.0
          %1846 = vmatprep.subr.mxu0 0.0
          %1847 = vmatpush1.msra.mxu0 0.0
          %1848 = vmatprep.subr.mxu0 0.0
          %1849 = vmatpush1.msra.mxu0 0.0
          %1850 = vmatprep.subr.mxu0 0.0
          %1851 = vmatpush1.msra.mxu0 0.0
          %1852 = vmatprep.subr.mxu0 0.0
          %1853 = vmatpush1.msra.mxu0 0.0
          %1854 = vmatprep.subr.mxu0 0.0
          %1855 = vmatpush1.msra.mxu0 0.0
          %1856 = vmatprep.subr.mxu0 0.0
          %1857 = vmatpush1.msra.mxu0 0.0
          %1858 = vmatprep.subr.mxu0 0.0
          %1859 = vmatpush1.msra.mxu0 0.0
          %1860 = vmatprep.subr.mxu0 0.0
          %1861 = vmatpush1.msra.mxu0 0.0
          %1862 = vmatprep.subr.mxu0 0.0
          %1863 = vmatpush1.msra.mxu0 0.0
          %1864 = vmatprep.subr.mxu0 0.0
          %1865 = vmatpush1.msra.mxu0 0.0
          %1866 = vmatprep.subr.mxu0 0.0
          %1867 = vmatpush1.msra.mxu0 0.0
          %1868 = vmatprep.subr.mxu0 0.0
          %1869 = vmatpush1.msra.mxu0 0.0
          %v1870 = vand.u32 %v460, 4294901760
          %1871 = vmatprep.mubr.f32.mxu0 %v1870
          %v1872 = vand.u32 %v401, 4294901760
          %1873 = vmatmul.mubr.f32.gmra.mrb[0].mxu0 %v1872
          %v1874 = vpop.f32.mrb[0].mxu0
          %v1875 = vadd.f32 %v1548, %v1874
          %v1876 = vpop.f32.mrb[0].mxu0
          %v1877 = vand.u32 %v463, 4294901760
          %1878 = vmatprep.mubr.f32.mxu0 %v1877
          %v1879 = vand.u32 %v403, 4294901760
          %1880 = vmatmul.mubr.f32.gmra.mrb[0].mxu0 %v1879
          %v1881 = vpop.f32.mrb[0].mxu0
          %v1882 = vadd.f32 %v1559, %v1881
          %v1883 = vpop.f32.mrb[0].mxu0
          %v1884 = vand.u32 %v466, 4294901760
          %1885 = vmatprep.mubr.f32.mxu0 %v1884
          %v1886 = vand.u32 %v405, 4294901760
          %1887 = vmatmul.mubr.f32.gmra.mrb[0].mxu0 %v1886
          %v1888 = vpop.f32.mrb[0].mxu0
          %v1889 = vadd.f32 %v1570, %v1888
          %v1890 = vpop.f32.mrb[0].mxu0
          %v1891 = vand.u32 %v469, 4294901760
          %1892 = vmatprep.mubr.f32.mxu0 %v1891
          %v1893 = vand.u32 %v407, 4294901760
          %1894 = vmatmul.mubr.f32.gmra.mrb[0].mxu0 %v1893
          %v1895 = vpop.f32.mrb[0].mxu0
          %v1896 = vadd.f32 %v1581, %v1895
          %v1897 = vpop.f32.mrb[0].mxu0
          %v1898 = vand.u32 %v472, 4294901760
          %1899 = vmatprep.mubr.f32.mxu0 %v1898
          %v1900 = vand.u32 %v409, 4294901760
          %1901 = vmatmul.mubr.f32.gmra.mrb[0].mxu0 %v1900
          %v1902 = vpop.f32.mrb[0].mxu0
          %v1903 = vadd.f32 %v1592, %v1902
          %v1904 = vpop.f32.mrb[0].mxu0
          %v1905 = vand.u32 %v475, 4294901760
          %1906 = vmatprep.mubr.f32.mxu0 %v1905
          %v1907 = vand.u32 %v411, 4294901760
          %1908 = vmatmul.mubr.f32.gmra.mrb[0].mxu0 %v1907
          %v1909 = vpop.f32.mrb[0].mxu0
          %v1910 = vadd.f32 %v1603, %v1909
          %v1911 = vpop.f32.mrb[0].mxu0
          %v1912 = vand.u32 %v478, 4294901760
          %1913 = vmatprep.mubr.f32.mxu0 %v1912
          %v1914 = vand.u32 %v413, 4294901760
          %1915 = vmatmul.mubr.f32.gmra.mrb[0].mxu0 %v1914
          %v1916 = vpop.f32.mrb[0].mxu0
          %v1917 = vadd.f32 %v1614, %v1916
          %v1918 = vpop.f32.mrb[0].mxu0
          %v1919 = vand.u32 %v481, 4294901760
          %1920 = vmatprep.mubr.f32.mxu0 %v1919
          %v1921 = vand.u32 %v415, 4294901760
          %1922 = vmatmul.mubr.f32.gmra.mrb[0].mxu0 %v1921
          %v1923 = vpop.f32.mrb[0].mxu0
          %v1924 = vadd.f32 %v1625, %v1923
          %v1925 = vpop.f32.mrb[0].mxu0
          %v1926 = vand.u32 %v484, 4294901760
          %1927 = vmatprep.mubr.f32.mxu0 %v1926
          %v1928 = vand.u32 %v417, 4294901760
          %1929 = vmatmul.mubr.f32.gmra.mrb[0].mxu0 %v1928
          %v1930 = vpop.f32.mrb[0].mxu0
          %v1931 = vadd.f32 %v1636, %v1930
          %v1932 = vpop.f32.mrb[0].mxu0
          %v1933 = vand.u32 %v487, 4294901760
          %1934 = vmatprep.mubr.f32.mxu0 %v1933
          %v1935 = vand.u32 %v419, 4294901760
          %1936 = vmatmul.mubr.f32.gmra.mrb[0].mxu0 %v1935
          %v1937 = vpop.f32.mrb[0].mxu0
          %v1938 = vadd.f32 %v1647, %v1937
          %v1939 = vpop.f32.mrb[0].mxu0
          %v1940 = vand.u32 %v490, 4294901760
          %1941 = vmatprep.mubr.f32.mxu0 %v1940
          %v1942 = vand.u32 %v421, 4294901760
          %1943 = vmatmul.mubr.f32.gmra.mrb[0].mxu0 %v1942
          %v1944 = vpop.f32.mrb[0].mxu0
          %v1945 = vadd.f32 %v1658, %v1944
          %v1946 = vpop.f32.mrb[0].mxu0
          %v1947 = vand.u32 %v493, 4294901760
          %1948 = vmatprep.mubr.f32.mxu0 %v1947
          %v1949 = vand.u32 %v423, 4294901760
          %1950 = vmatmul.mubr.f32.gmra.mrb[0].mxu0 %v1949
          %v1951 = vpop.f32.mrb[0].mxu0
          %v1952 = vadd.f32 %v1669, %v1951
          %v1953 = vpop.f32.mrb[0].mxu0
          %v1954 = vand.u32 %v496, 4294901760
          %1955 = vmatprep.mubr.f32.mxu0 %v1954
          %v1956 = vand.u32 %v425, 4294901760
          %1957 = vmatmul.mubr.f32.gmra.mrb[0].mxu0 %v1956
          %v1958 = vpop.f32.mrb[0].mxu0
          %v1959 = vadd.f32 %v1680, %v1958
          %v1960 = vpop.f32.mrb[0].mxu0
          %v1961 = vand.u32 %v499, 4294901760
          %1962 = vmatprep.mubr.f32.mxu0 %v1961
          %v1963 = vand.u32 %v427, 4294901760
          %1964 = vmatmul.mubr.f32.gmra.mrb[0].mxu0 %v1963
          %v1965 = vpop.f32.mrb[0].mxu0
          %v1966 = vadd.f32 %v1691, %v1965
          %v1967 = vpop.f32.mrb[0].mxu0
          %v1968 = vand.u32 %v502, 4294901760
          %1969 = vmatprep.mubr.f32.mxu0 %v1968
          %v1970 = vand.u32 %v429, 4294901760
          %1971 = vmatmul.mubr.f32.gmra.mrb[0].mxu0 %v1970
          %v1972 = vpop.f32.mrb[0].mxu0
          %v1973 = vadd.f32 %v1702, %v1972
          %v1974 = vpop.f32.mrb[0].mxu0
          %v1975 = vand.u32 %v505, 4294901760
          %1976 = vmatprep.mubr.f32.mxu0 %v1975
          %v1977 = vand.u32 %v431, 4294901760
          %1978 = vmatmul.mubr.f32.gmra.mrb[0].mxu0 %v1977
          %v1979 = vpop.f32.mrb[0].mxu0
          %v1980 = vadd.f32 %v1713, %v1979
          %v1981 = vpop.f32.mrb[0].mxu0
          %v1982 = vand.u32 %v508, 4294901760
          %1983 = vmatprep.mubr.f32.mxu0 %v1982
          %v1984 = vand.u32 %v433, 4294901760
          %1985 = vmatmul.mubr.f32.gmra.mrb[0].mxu0 %v1984
          %v1986 = vpop.f32.mrb[0].mxu0
          %v1987 = vadd.f32 %v1724, %v1986
          %v1988 = vpop.f32.mrb[0].mxu0
          %v1989 = vand.u32 %v511, 4294901760
          %1990 = vmatprep.mubr.f32.mxu0 %v1989
          %v1991 = vand.u32 %v435, 4294901760
          %1992 = vmatmul.mubr.f32.gmra.mrb[0].mxu0 %v1991
          %v1993 = vpop.f32.mrb[0].mxu0
          %v1994 = vadd.f32 %v1735, %v1993
          %v1995 = vpop.f32.mrb[0].mxu0
          %v1996 = vand.u32 %v514, 4294901760
          %1997 = vmatprep.mubr.f32.mxu0 %v1996
          %v1998 = vand.u32 %v437, 4294901760
          %1999 = vmatmul.mubr.f32.gmra.mrb[0].mxu0 %v1998
          %v2000 = vpop.f32.mrb[0].mxu0
          %v2001 = vadd.f32 %v1746, %v2000
          %v2002 = vpop.f32.mrb[0].mxu0
          %2003 = vdwg.mxu0
          %2004 = vmatprep.subr.mxu0 0.0
          %v2005 = vand.u32 %v439, 4294901760
          %2006 = vmatpush1.msra.mxu0 %v2005
          %2007 = vmatprep.subr.mxu0 0.0
          %v2008 = vand.u32 %v440, 4294901760
          %2009 = vmatpush1.msra.mxu0 %v2008
          %2010 = vmatprep.subr.mxu0 0.0
          %v2011 = vand.u32 %v441, 4294901760
          %2012 = vmatpush1.msra.mxu0 %v2011
          %2013 = vmatprep.subr.mxu0 0.0
          %v2014 = vand.u32 %v442, 4294901760
          %2015 = vmatpush1.msra.mxu0 %v2014
          %2016 = vmatprep.subr.mxu0 0.0
          %v2017 = vand.u32 %v443, 4294901760
          %2018 = vmatpush1.msra.mxu0 %v2017
          %2019 = vmatprep.subr.mxu0 0.0
          %v2020 = vand.u32 %v444, 4294901760
          %2021 = vmatpush1.msra.mxu0 %v2020
          %2022 = vmatprep.subr.mxu0 0.0
          %v2023 = vand.u32 %v445, 4294901760
          %2024 = vmatpush1.msra.mxu0 %v2023
          %2025 = vmatprep.subr.mxu0 0.0
          %v2026 = vand.u32 %v446, 4294901760
          %2027 = vmatpush1.msra.mxu0 %v2026
          %2028 = vmatprep.subr.mxu0 0.0
          %v2029 = vand.u32 %v447, 4294901760
          %2030 = vmatpush1.msra.mxu0 %v2029
          %2031 = vmatprep.subr.mxu0 0.0
          %v2032 = vand.u32 %v448, 4294901760
          %2033 = vmatpush1.msra.mxu0 %v2032
          %2034 = vmatprep.subr.mxu0 0.0
          %v2035 = vand.u32 %v449, 4294901760
          %2036 = vmatpush1.msra.mxu0 %v2035
          %2037 = vmatprep.subr.mxu0 0.0
          %v2038 = vand.u32 %v450, 4294901760
          %2039 = vmatpush1.msra.mxu0 %v2038
          %2040 = vmatprep.subr.mxu0 0.0
          %v2041 = vand.u32 %v451, 4294901760
          %2042 = vmatpush1.msra.mxu0 %v2041
          %2043 = vmatprep.subr.mxu0 0.0
          %v2044 = vand.u32 %v452, 4294901760
          %2045 = vmatpush1.msra.mxu0 %v2044
          %2046 = vmatprep.subr.mxu0 0.0
          %v2047 = vand.u32 %v453, 4294901760
          %2048 = vmatpush1.msra.mxu0 %v2047
          %2049 = vmatprep.subr.mxu0 0.0
          %v2050 = vand.u32 %v454, 4294901760
          %2051 = vmatpush1.msra.mxu0 %v2050
          %2052 = vmatprep.subr.mxu0 0.0
          %v2053 = vand.u32 %v455, 4294901760
          %2054 = vmatpush1.msra.mxu0 %v2053
          %2055 = vmatprep.subr.mxu0 0.0
          %v2056 = vand.u32 %v456, 4294901760
          %2057 = vmatpush1.msra.mxu0 %v2056
          %2058 = vmatprep.subr.mxu0 0.0
          %v2059 = vand.u32 %v518, 4294901760
          %2060 = vmatpush1.msra.mxu0 %v2059
          %2061 = vmatprep.subr.mxu0 0.0
          %2062 = vmatpush1.msra.mxu0 0.0
          %2063 = vmatprep.subr.mxu0 0.0
          %2064 = vmatpush1.msra.mxu0 0.0
          %2065 = vmatprep.subr.mxu0 0.0
          %2066 = vmatpush1.msra.mxu0 0.0
          %2067 = vmatprep.subr.mxu0 0.0
          %2068 = vmatpush1.msra.mxu0 0.0
          %2069 = vmatprep.subr.mxu0 0.0
          %2070 = vmatpush1.msra.mxu0 0.0
          %2071 = vmatprep.subr.mxu0 0.0
          %2072 = vmatpush1.msra.mxu0 0.0
          %2073 = vmatprep.subr.mxu0 0.0
          %2074 = vmatpush1.msra.mxu0 0.0
          %2075 = vmatprep.subr.mxu0 0.0
          %2076 = vmatpush1.msra.mxu0 0.0
          %2077 = vmatprep.subr.mxu0 0.0
          %2078 = vmatpush1.msra.mxu0 0.0
          %2079 = vmatprep.subr.mxu0 0.0
          %2080 = vmatpush1.msra.mxu0 0.0
          %2081 = vmatprep.subr.mxu0 0.0
          %2082 = vmatpush1.msra.mxu0 0.0
          %2083 = vmatprep.subr.mxu0 0.0
          %2084 = vmatpush1.msra.mxu0 0.0
          %2085 = vmatprep.subr.mxu0 0.0
          %2086 = vmatpush1.msra.mxu0 0.0
          %v2087 = vand.u32 %v460, 4294901760
          %2088 = vmatprep.mubr.f32.mxu0 %v2087
          %v2089 = vand.u32 %v401, 4294901760
          %2090 = vmatmul.mubr.f32.gmra.mrb[0].mxu0 %v2089
          %v2091 = vpop.f32.mrb[0].mxu0
          %v2092 = vadd.f32 %v1875, %v2091
          %v2093 = vpop.f32.mrb[0].mxu0
          %v2094 = vand.u32 %v463, 4294901760
          %2095 = vmatprep.mubr.f32.mxu0 %v2094
          %v2096 = vand.u32 %v403, 4294901760
          %2097 = vmatmul.mubr.f32.gmra.mrb[0].mxu0 %v2096
          %v2098 = vpop.f32.mrb[0].mxu0
          %v2099 = vadd.f32 %v1882, %v2098
          %v2100 = vpop.f32.mrb[0].mxu0
          %v2101 = vand.u32 %v466, 4294901760
          %2102 = vmatprep.mubr.f32.mxu0 %v2101
          %v2103 = vand.u32 %v405, 4294901760
          %2104 = vmatmul.mubr.f32.gmra.mrb[0].mxu0 %v2103
          %v2105 = vpop.f32.mrb[0].mxu0
          %v2106 = vadd.f32 %v1889, %v2105
          %v2107 = vpop.f32.mrb[0].mxu0
          %v2108 = vand.u32 %v469, 4294901760
          %2109 = vmatprep.mubr.f32.mxu0 %v2108
          %v2110 = vand.u32 %v407, 4294901760
          %2111 = vmatmul.mubr.f32.gmra.mrb[0].mxu0 %v2110
          %v2112 = vpop.f32.mrb[0].mxu0
          %v2113 = vadd.f32 %v1896, %v2112
          %v2114 = vpop.f32.mrb[0].mxu0
          %v2115 = vand.u32 %v472, 4294901760
          %2116 = vmatprep.mubr.f32.mxu0 %v2115
          %v2117 = vand.u32 %v409, 4294901760
          %2118 = vmatmul.mubr.f32.gmra.mrb[0].mxu0 %v2117
          %v2119 = vpop.f32.mrb[0].mxu0
          %v2120 = vadd.f32 %v1903, %v2119
          %v2121 = vpop.f32.mrb[0].mxu0
          %v2122 = vand.u32 %v475, 4294901760
          %2123 = vmatprep.mubr.f32.mxu0 %v2122
          %v2124 = vand.u32 %v411, 4294901760
          %2125 = vmatmul.mubr.f32.gmra.mrb[0].mxu0 %v2124
          %v2126 = vpop.f32.mrb[0].mxu0
          %v2127 = vadd.f32 %v1910, %v2126
          %v2128 = vpop.f32.mrb[0].mxu0
          %v2129 = vand.u32 %v478, 4294901760
          %2130 = vmatprep.mubr.f32.mxu0 %v2129
          %v2131 = vand.u32 %v413, 4294901760
          %2132 = vmatmul.mubr.f32.gmra.mrb[0].mxu0 %v2131
          %v2133 = vpop.f32.mrb[0].mxu0
          %v2134 = vadd.f32 %v1917, %v2133
          %v2135 = vpop.f32.mrb[0].mxu0
          %v2136 = vand.u32 %v481, 4294901760
          %2137 = vmatprep.mubr.f32.mxu0 %v2136
          %v2138 = vand.u32 %v415, 4294901760
          %2139 = vmatmul.mubr.f32.gmra.mrb[0].mxu0 %v2138
          %v2140 = vpop.f32.mrb[0].mxu0
          %v2141 = vadd.f32 %v1924, %v2140
          %v2142 = vpop.f32.mrb[0].mxu0
          %v2143 = vand.u32 %v484, 4294901760
          %2144 = vmatprep.mubr.f32.mxu0 %v2143
          %v2145 = vand.u32 %v417, 4294901760
          %2146 = vmatmul.mubr.f32.gmra.mrb[0].mxu0 %v2145
          %v2147 = vpop.f32.mrb[0].mxu0
          %v2148 = vadd.f32 %v1931, %v2147
          %v2149 = vpop.f32.mrb[0].mxu0
          %v2150 = vand.u32 %v487, 4294901760
          %2151 = vmatprep.mubr.f32.mxu0 %v2150
          %v2152 = vand.u32 %v419, 4294901760
          %2153 = vmatmul.mubr.f32.gmra.mrb[0].mxu0 %v2152
          %v2154 = vpop.f32.mrb[0].mxu0
          %v2155 = vadd.f32 %v1938, %v2154
          %v2156 = vpop.f32.mrb[0].mxu0
          %v2157 = vand.u32 %v490, 4294901760
          %2158 = vmatprep.mubr.f32.mxu0 %v2157
          %v2159 = vand.u32 %v421, 4294901760
          %2160 = vmatmul.mubr.f32.gmra.mrb[0].mxu0 %v2159
          %v2161 = vpop.f32.mrb[0].mxu0
          %v2162 = vadd.f32 %v1945, %v2161
          %v2163 = vpop.f32.mrb[0].mxu0
          %v2164 = vand.u32 %v493, 4294901760
          %2165 = vmatprep.mubr.f32.mxu0 %v2164
          %v2166 = vand.u32 %v423, 4294901760
          %2167 = vmatmul.mubr.f32.gmra.mrb[0].mxu0 %v2166
          %v2168 = vpop.f32.mrb[0].mxu0
          %v2169 = vadd.f32 %v1952, %v2168
          %v2170 = vpop.f32.mrb[0].mxu0
          %v2171 = vand.u32 %v496, 4294901760
          %2172 = vmatprep.mubr.f32.mxu0 %v2171
          %v2173 = vand.u32 %v425, 4294901760
          %2174 = vmatmul.mubr.f32.gmra.mrb[0].mxu0 %v2173
          %v2175 = vpop.f32.mrb[0].mxu0
          %v2176 = vadd.f32 %v1959, %v2175
          %v2177 = vpop.f32.mrb[0].mxu0
          %v2178 = vand.u32 %v499, 4294901760
          %2179 = vmatprep.mubr.f32.mxu0 %v2178
          %v2180 = vand.u32 %v427, 4294901760
          %2181 = vmatmul.mubr.f32.gmra.mrb[0].mxu0 %v2180
          %v2182 = vpop.f32.mrb[0].mxu0
          %v2183 = vadd.f32 %v1966, %v2182
          %v2184 = vpop.f32.mrb[0].mxu0
          %v2185 = vand.u32 %v502, 4294901760
          %2186 = vmatprep.mubr.f32.mxu0 %v2185
          %v2187 = vand.u32 %v429, 4294901760
          %2188 = vmatmul.mubr.f32.gmra.mrb[0].mxu0 %v2187
          %v2189 = vpop.f32.mrb[0].mxu0
          %v2190 = vadd.f32 %v1973, %v2189
          %v2191 = vpop.f32.mrb[0].mxu0
          %v2192 = vand.u32 %v505, 4294901760
          %2193 = vmatprep.mubr.f32.mxu0 %v2192
          %v2194 = vand.u32 %v431, 4294901760
          %2195 = vmatmul.mubr.f32.gmra.mrb[0].mxu0 %v2194
          %v2196 = vpop.f32.mrb[0].mxu0
          %v2197 = vadd.f32 %v1980, %v2196
          %v2198 = vpop.f32.mrb[0].mxu0
          %v2199 = vand.u32 %v508, 4294901760
          %2200 = vmatprep.mubr.f32.mxu0 %v2199
          %v2201 = vand.u32 %v433, 4294901760
          %2202 = vmatmul.mubr.f32.gmra.mrb[0].mxu0 %v2201
          %v2203 = vpop.f32.mrb[0].mxu0
          %v2204 = vadd.f32 %v1987, %v2203
          %v2205 = vpop.f32.mrb[0].mxu0
          %v2206 = vand.u32 %v511, 4294901760
          %2207 = vmatprep.mubr.f32.mxu0 %v2206
          %v2208 = vand.u32 %v435, 4294901760
          %2209 = vmatmul.mubr.f32.gmra.mrb[0].mxu0 %v2208
          %v2210 = vpop.f32.mrb[0].mxu0
          %v2211 = vadd.f32 %v1994, %v2210
          %v2212 = vpop.f32.mrb[0].mxu0
          %v2213 = vand.u32 %v514, 4294901760
          %2214 = vmatprep.mubr.f32.mxu0 %v2213
          %v2215 = vand.u32 %v437, 4294901760
          %2216 = vmatmul.mubr.f32.gmra.mrb[0].mxu0 %v2215
          %v2217 = vpop.f32.mrb[0].mxu0
          %v2218 = vadd.f32 %v2001, %v2217
          %v2219 = vpop.f32.mrb[0].mxu0
          %2220 = vdwg.mxu0
          %v2221 = vld [vmem:[%s3] sm:$0xff]
          %v2222 = vld [vmem:[%s3 + $0x8] sm:$0xff]
          %v2223 = vld [vmem:[%s3 + $0x10] sm:$0xff]
          %v2224 = vld [vmem:[%s3 + $0x18] sm:$0xff]
          %v2225 = vld [vmem:[%s3 + $0x20] sm:$0xff]
          %v2226 = vld [vmem:[%s3 + $0x28] sm:$0xff]
          %v2227 = vld [vmem:[%s3 + $0x30] sm:$0xff]
          %v2228 = vld [vmem:[%s3 + $0x38] sm:$0xff]
          %v2229 = vld [vmem:[%s3 + $0x40] sm:$0xff]
          %v2230 = vld [vmem:[%s3 + $0x48] sm:$0xff]
          %v2231 = vld [vmem:[%s3 + $0x50] sm:$0xff]
          %v2232 = vld [vmem:[%s3 + $0x58] sm:$0xff]
          %v2233 = vld [vmem:[%s3 + $0x60] sm:$0xff]
          %v2234 = vld [vmem:[%s3 + $0x68] sm:$0xff]
          %v2235 = vld [vmem:[%s3 + $0x70] sm:$0xff]
          %v2236 = vld [vmem:[%s3 + $0x78] sm:$0xff]
          %v2237 = vld [vmem:[%s3 + $0x80] sm:$0xff]
          %v2238 = vld [vmem:[%s3 + $0x88] sm:$0xff]
          %v2239 = vld [vmem:[%s3 + $0x90] sm:$0x3]
          %2241 = vset.pattern.permute.xlu0 0
          %2242 = vperm.xlu0 %2241, %v2221
          %v2243 = vpop.permute.xlu0 %2242
          %2246 = vset.pattern.permute.xlu0 0
          %2247 = vperm.xlu0 %2246, %v2222
          %v2248 = vpop.permute.xlu0 %2247
          %2251 = vset.pattern.permute.xlu0 0
          %2252 = vperm.xlu0 %2251, %v2223
          %v2253 = vpop.permute.xlu0 %2252
          %2256 = vset.pattern.permute.xlu0 0
          %2257 = vperm.xlu0 %2256, %v2224
          %v2258 = vpop.permute.xlu0 %2257
          %2261 = vset.pattern.permute.xlu0 0
          %2262 = vperm.xlu0 %2261, %v2225
          %v2263 = vpop.permute.xlu0 %2262
          %2266 = vset.pattern.permute.xlu0 0
          %2267 = vperm.xlu0 %2266, %v2226
          %v2268 = vpop.permute.xlu0 %2267
          %2271 = vset.pattern.permute.xlu0 0
          %2272 = vperm.xlu0 %2271, %v2227
          %v2273 = vpop.permute.xlu0 %2272
          %2276 = vset.pattern.permute.xlu0 0
          %2277 = vperm.xlu0 %2276, %v2228
          %v2278 = vpop.permute.xlu0 %2277
          %2281 = vset.pattern.permute.xlu0 0
          %2282 = vperm.xlu0 %2281, %v2229
          %v2283 = vpop.permute.xlu0 %2282
          %2286 = vset.pattern.permute.xlu0 0
          %2287 = vperm.xlu0 %2286, %v2230
          %v2288 = vpop.permute.xlu0 %2287
          %2291 = vset.pattern.permute.xlu0 0
          %2292 = vperm.xlu0 %2291, %v2231
          %v2293 = vpop.permute.xlu0 %2292
          %2296 = vset.pattern.permute.xlu0 0
          %2297 = vperm.xlu0 %2296, %v2232
          %v2298 = vpop.permute.xlu0 %2297
          %2301 = vset.pattern.permute.xlu0 0
          %2302 = vperm.xlu0 %2301, %v2233
          %v2303 = vpop.permute.xlu0 %2302
          %2306 = vset.pattern.permute.xlu0 0
          %2307 = vperm.xlu0 %2306, %v2234
          %v2308 = vpop.permute.xlu0 %2307
          %2311 = vset.pattern.permute.xlu0 0
          %2312 = vperm.xlu0 %2311, %v2235
          %v2313 = vpop.permute.xlu0 %2312
          %2316 = vset.pattern.permute.xlu0 0
          %2317 = vperm.xlu0 %2316, %v2236
          %v2318 = vpop.permute.xlu0 %2317
          %2321 = vset.pattern.permute.xlu0 0
          %2322 = vperm.xlu0 %2321, %v2237
          %v2323 = vpop.permute.xlu0 %2322
          %2326 = vset.pattern.permute.xlu0 0
          %2327 = vperm.xlu0 %2326, %v2238
          %v2328 = vpop.permute.xlu0 %2327
          %2331 = vset.pattern.permute.xlu0 0
          %2332 = vperm.xlu0 %2331, %v2239
          %v2333 = vpop.permute.xlu0 %2332
          %v2335 = vmul.f32 %v2092, %v2243
          %v2336 = vmul.f32 %v2099, %v2248
          %v2337 = vmul.f32 %v2106, %v2253
          %v2338 = vmul.f32 %v2113, %v2258
          %v2339 = vmul.f32 %v2120, %v2263
          %v2340 = vmul.f32 %v2127, %v2268
          %v2341 = vmul.f32 %v2134, %v2273
          %v2342 = vmul.f32 %v2141, %v2278
          %v2343 = vmul.f32 %v2148, %v2283
          %v2344 = vmul.f32 %v2155, %v2288
          %v2345 = vmul.f32 %v2162, %v2293
          %v2346 = vmul.f32 %v2169, %v2298
          %v2347 = vmul.f32 %v2176, %v2303
          %v2348 = vmul.f32 %v2183, %v2308
          %v2349 = vmul.f32 %v2190, %v2313
          %v2350 = vmul.f32 %v2197, %v2318
          %v2351 = vmul.f32 %v2204, %v2323
          %v2352 = vmul.f32 %v2211, %v2328
          %v2353 = vmul.f32 %v2218, %v2333
          %v2354 = vld [vmem:[%s4] sm:$0xff]
          %v2355 = vld [vmem:[%s4 + $0x8] sm:$0xff]
          %v2356 = vld [vmem:[%s4 + $0x10] sm:$0xff]
          %v2357 = vld [vmem:[%s4 + $0x18] sm:$0xff]
          %v2358 = vld [vmem:[%s4 + $0x20] sm:$0xff]
          %v2359 = vld [vmem:[%s4 + $0x28] sm:$0xff]
          %v2360 = vld [vmem:[%s4 + $0x30] sm:$0xff]
          %v2361 = vld [vmem:[%s4 + $0x38] sm:$0xff]
          %v2362 = vld [vmem:[%s4 + $0x40] sm:$0xff]
          %v2363 = vld [vmem:[%s4 + $0x48] sm:$0xff]
          %v2364 = vld [vmem:[%s4 + $0x50] sm:$0xff]
          %v2365 = vld [vmem:[%s4 + $0x58] sm:$0xff]
          %v2366 = vld [vmem:[%s4 + $0x60] sm:$0xff]
          %v2367 = vld [vmem:[%s4 + $0x68] sm:$0xff]
          %v2368 = vld [vmem:[%s4 + $0x70] sm:$0xff]
          %v2369 = vld [vmem:[%s4 + $0x78] sm:$0xff]
          %v2370 = vld [vmem:[%s4 + $0x80] sm:$0xff]
          %v2371 = vld [vmem:[%s4 + $0x88] sm:$0xff]
          %v2372 = vld [vmem:[%s4 + $0x90] sm:$0x3]
          %2374 = vset.pattern.permute.xlu0 0
          %2375 = vperm.xlu0 %2374, %v2354
          %v2376 = vpop.permute.xlu0 %2375
          %2379 = vset.pattern.permute.xlu0 0
          %2380 = vperm.xlu0 %2379, %v2355
          %v2381 = vpop.permute.xlu0 %2380
          %2384 = vset.pattern.permute.xlu0 0
          %2385 = vperm.xlu0 %2384, %v2356
          %v2386 = vpop.permute.xlu0 %2385
          %2389 = vset.pattern.permute.xlu0 0
          %2390 = vperm.xlu0 %2389, %v2357
          %v2391 = vpop.permute.xlu0 %2390
          %2394 = vset.pattern.permute.xlu0 0
          %2395 = vperm.xlu0 %2394, %v2358
          %v2396 = vpop.permute.xlu0 %2395
          %2399 = vset.pattern.permute.xlu0 0
          %2400 = vperm.xlu0 %2399, %v2359
          %v2401 = vpop.permute.xlu0 %2400
          %2404 = vset.pattern.permute.xlu0 0
          %2405 = vperm.xlu0 %2404, %v2360
          %v2406 = vpop.permute.xlu0 %2405
          %2409 = vset.pattern.permute.xlu0 0
          %2410 = vperm.xlu0 %2409, %v2361
          %v2411 = vpop.permute.xlu0 %2410
          %2414 = vset.pattern.permute.xlu0 0
          %2415 = vperm.xlu0 %2414, %v2362
          %v2416 = vpop.permute.xlu0 %2415
          %2419 = vset.pattern.permute.xlu0 0
          %2420 = vperm.xlu0 %2419, %v2363
          %v2421 = vpop.permute.xlu0 %2420
          %2424 = vset.pattern.permute.xlu0 0
          %2425 = vperm.xlu0 %2424, %v2364
          %v2426 = vpop.permute.xlu0 %2425
          %2429 = vset.pattern.permute.xlu0 0
          %2430 = vperm.xlu0 %2429, %v2365
          %v2431 = vpop.permute.xlu0 %2430
          %2434 = vset.pattern.permute.xlu0 0
          %2435 = vperm.xlu0 %2434, %v2366
          %v2436 = vpop.permute.xlu0 %2435
          %2439 = vset.pattern.permute.xlu0 0
          %2440 = vperm.xlu0 %2439, %v2367
          %v2441 = vpop.permute.xlu0 %2440
          %2444 = vset.pattern.permute.xlu0 0
          %2445 = vperm.xlu0 %2444, %v2368
          %v2446 = vpop.permute.xlu0 %2445
          %2449 = vset.pattern.permute.xlu0 0
          %2450 = vperm.xlu0 %2449, %v2369
          %v2451 = vpop.permute.xlu0 %2450
          %2454 = vset.pattern.permute.xlu0 0
          %2455 = vperm.xlu0 %2454, %v2370
          %v2456 = vpop.permute.xlu0 %2455
          %2459 = vset.pattern.permute.xlu0 0
          %2460 = vperm.xlu0 %2459, %v2371
          %v2461 = vpop.permute.xlu0 %2460
          %2464 = vset.pattern.permute.xlu0 0
          %2465 = vperm.xlu0 %2464, %v2372
          %v2466 = vpop.permute.xlu0 %2465
          %v2468 = vadd.f32 %v2335, %v2376
          %v2469 = vadd.f32 %v2336, %v2381
          %v2470 = vadd.f32 %v2337, %v2386
          %v2471 = vadd.f32 %v2338, %v2391
          %v2472 = vadd.f32 %v2339, %v2396
          %v2473 = vadd.f32 %v2340, %v2401
          %v2474 = vadd.f32 %v2341, %v2406
          %v2475 = vadd.f32 %v2342, %v2411
          %v2476 = vadd.f32 %v2343, %v2416
          %v2477 = vadd.f32 %v2344, %v2421
          %v2478 = vadd.f32 %v2345, %v2426
          %v2479 = vadd.f32 %v2346, %v2431
          %v2480 = vadd.f32 %v2347, %v2436
          %v2481 = vadd.f32 %v2348, %v2441
          %v2482 = vadd.f32 %v2349, %v2446
          %v2483 = vadd.f32 %v2350, %v2451
          %v2484 = vadd.f32 %v2351, %v2456
          %v2485 = vadd.f32 %v2352, %v2461
          %v2486 = vadd.f32 %v2353, %v2466
          %v2487 = vmax.f32 %v2468, 0.0
          %v2488 = vmax.f32 %v2469, 0.0
          %v2489 = vmax.f32 %v2470, 0.0
          %v2490 = vmax.f32 %v2471, 0.0
          %v2491 = vmax.f32 %v2472, 0.0
          %v2492 = vmax.f32 %v2473, 0.0
          %v2493 = vmax.f32 %v2474, 0.0
          %v2494 = vmax.f32 %v2475, 0.0
          %v2495 = vmax.f32 %v2476, 0.0
          %v2496 = vmax.f32 %v2477, 0.0
          %v2497 = vmax.f32 %v2478, 0.0
          %v2498 = vmax.f32 %v2479, 0.0
          %v2499 = vmax.f32 %v2480, 0.0
          %v2500 = vmax.f32 %v2481, 0.0
          %v2501 = vmax.f32 %v2482, 0.0
          %v2502 = vmax.f32 %v2483, 0.0
          %v2503 = vmax.f32 %v2484, 0.0
          %v2504 = vmax.f32 %v2485, 0.0
          %v2505 = vmax.f32 %v2486, 0.0
          %v2506 = vld [vmem:[%s0] sm:$0x3]
          %2526 = vrot.lane.b32.xlu0 %v2487, 1
          %v2527 = vpop.permute.xlu0 %2526
          %2528 = vrot.lane.b32.xlu0 %v2488, 1
          %v2529 = vpop.permute.xlu0 %2528
          %2530 = vrot.lane.b32.xlu0 %v2489, 1
          %v2531 = vpop.permute.xlu0 %2530
          %2532 = vrot.lane.b32.xlu0 %v2490, 1
          %v2533 = vpop.permute.xlu0 %2532
          %2534 = vrot.lane.b32.xlu0 %v2491, 1
          %v2535 = vpop.permute.xlu0 %2534
          %2536 = vrot.lane.b32.xlu0 %v2492, 1
          %v2537 = vpop.permute.xlu0 %2536
          %2538 = vrot.lane.b32.xlu0 %v2493, 1
          %v2539 = vpop.permute.xlu0 %2538
          %2540 = vrot.lane.b32.xlu0 %v2494, 1
          %v2541 = vpop.permute.xlu0 %2540
          %2542 = vrot.lane.b32.xlu0 %v2495, 1
          %v2543 = vpop.permute.xlu0 %2542
          %2544 = vrot.lane.b32.xlu0 %v2496, 1
          %v2545 = vpop.permute.xlu0 %2544
          %2546 = vrot.lane.b32.xlu0 %v2497, 1
          %v2547 = vpop.permute.xlu0 %2546
          %2548 = vrot.lane.b32.xlu0 %v2498, 1
          %v2549 = vpop.permute.xlu0 %2548
          %2550 = vrot.lane.b32.xlu0 %v2499, 1
          %v2551 = vpop.permute.xlu0 %2550
          %2552 = vrot.lane.b32.xlu0 %v2500, 1
          %v2553 = vpop.permute.xlu0 %2552
          %2554 = vrot.lane.b32.xlu0 %v2501, 1
          %v2555 = vpop.permute.xlu0 %2554
          %2556 = vrot.lane.b32.xlu0 %v2502, 1
          %v2557 = vpop.permute.xlu0 %2556
          %2558 = vrot.lane.b32.xlu0 %v2503, 1
          %v2559 = vpop.permute.xlu0 %2558
          %2560 = vrot.lane.b32.xlu0 %v2504, 1
          %v2561 = vpop.permute.xlu0 %2560
          %2562 = vrot.lane.b32.xlu0 %v2505, 1
          %v2563 = vpop.permute.xlu0 %2562
          %vm2583 = vcmask 7168
          %v2584 = vsel %vm2583, %v2487, %v2527
          %v2585 = vsel %vm2583, %v2488, %v2529
          %v2586 = vsel %vm2583, %v2489, %v2531
          %v2587 = vsel %vm2583, %v2490, %v2533
          %v2588 = vsel %vm2583, %v2491, %v2535
          %v2589 = vsel %vm2583, %v2492, %v2537
          %v2590 = vsel %vm2583, %v2493, %v2539
          %v2591 = vsel %vm2583, %v2494, %v2541
          %v2592 = vsel %vm2583, %v2495, %v2543
          %v2593 = vsel %vm2583, %v2496, %v2545
          %v2594 = vsel %vm2583, %v2497, %v2547
          %v2595 = vsel %vm2583, %v2498, %v2549
          %v2596 = vsel %vm2583, %v2499, %v2551
          %v2597 = vsel %vm2583, %v2500, %v2553
          %v2598 = vsel %vm2583, %v2501, %v2555
          %v2599 = vsel %vm2583, %v2502, %v2557
          %v2600 = vsel %vm2583, %v2503, %v2559
          %v2601 = vsel %vm2583, %v2504, %v2561
          %v2602 = vsel %vm2583, %v2505, %v2563
          %2603 = vrot.lane.b32.xlu0 %v2487, 127
          %v2604 = vpop.permute.xlu0 %2603
          %2605 = vrot.lane.b32.xlu0 %v2488, 127
          %v2606 = vpop.permute.xlu0 %2605
          %2607 = vrot.lane.b32.xlu0 %v2489, 127
          %v2608 = vpop.permute.xlu0 %2607
          %2609 = vrot.lane.b32.xlu0 %v2490, 127
          %v2610 = vpop.permute.xlu0 %2609
          %2611 = vrot.lane.b32.xlu0 %v2491, 127
          %v2612 = vpop.permute.xlu0 %2611
          %2613 = vrot.lane.b32.xlu0 %v2492, 127
          %v2614 = vpop.permute.xlu0 %2613
          %2615 = vrot.lane.b32.xlu0 %v2493, 127
          %v2616 = vpop.permute.xlu0 %2615
          %2617 = vrot.lane.b32.xlu0 %v2494, 127
          %v2618 = vpop.permute.xlu0 %2617
          %2619 = vrot.lane.b32.xlu0 %v2495, 127
          %v2620 = vpop.permute.xlu0 %2619
          %2621 = vrot.lane.b32.xlu0 %v2496, 127
          %v2622 = vpop.permute.xlu0 %2621
          %2623 = vrot.lane.b32.xlu0 %v2497, 127
          %v2624 = vpop.permute.xlu0 %2623
          %2625 = vrot.lane.b32.xlu0 %v2498, 127
          %v2626 = vpop.permute.xlu0 %2625
          %2627 = vrot.lane.b32.xlu0 %v2499, 127
          %v2628 = vpop.permute.xlu0 %2627
          %2629 = vrot.lane.b32.xlu0 %v2500, 127
          %v2630 = vpop.permute.xlu0 %2629
          %2631 = vrot.lane.b32.xlu0 %v2501, 127
          %v2632 = vpop.permute.xlu0 %2631
          %2633 = vrot.lane.b32.xlu0 %v2502, 127
          %v2634 = vpop.permute.xlu0 %2633
          %2635 = vrot.lane.b32.xlu0 %v2503, 127
          %v2636 = vpop.permute.xlu0 %2635
          %2637 = vrot.lane.b32.xlu0 %v2504, 127
          %v2638 = vpop.permute.xlu0 %2637
          %2639 = vrot.lane.b32.xlu0 %v2505, 127
          %v2640 = vpop.permute.xlu0 %2639
          %vm2660 = vcmask 1039360
          %v2661 = vsel %vm2660, %v2604, %v2487
          %v2662 = vsel %vm2660, %v2606, %v2488
          %v2663 = vsel %vm2660, %v2608, %v2489
          %v2664 = vsel %vm2660, %v2610, %v2490
          %v2665 = vsel %vm2660, %v2612, %v2491
          %v2666 = vsel %vm2660, %v2614, %v2492
          %v2667 = vsel %vm2660, %v2616, %v2493
          %v2668 = vsel %vm2660, %v2618, %v2494
          %v2669 = vsel %vm2660, %v2620, %v2495
          %v2670 = vsel %vm2660, %v2622, %v2496
          %v2671 = vsel %vm2660, %v2624, %v2497
          %v2672 = vsel %vm2660, %v2626, %v2498
          %v2673 = vsel %vm2660, %v2628, %v2499
          %v2674 = vsel %vm2660, %v2630, %v2500
          %v2675 = vsel %vm2660, %v2632, %v2501
          %v2676 = vsel %vm2660, %v2634, %v2502
          %v2677 = vsel %vm2660, %v2636, %v2503
          %v2678 = vsel %vm2660, %v2638, %v2504
          %v2679 = vsel %vm2660, %v2640, %v2505
          %v2680 = vlaneseq
          %v2681 = vshrl.u32 %v2680, 7
          %v2682 = vsub.s32 0, %v2681
          %v2683 = vrot.slane %v2506, %v2682
          %v2684 = vmul.f32 %v2584, %v2683
          %v2685 = vmul.f32 %v2585, %v2683
          %v2686 = vmul.f32 %v2586, %v2683
          %v2687 = vmul.f32 %v2587, %v2683
          %v2688 = vmul.f32 %v2588, %v2683
          %v2689 = vmul.f32 %v2589, %v2683
          %v2690 = vmul.f32 %v2590, %v2683
          %v2691 = vmul.f32 %v2591, %v2683
          %v2692 = vmul.f32 %v2592, %v2683
          %v2693 = vmul.f32 %v2593, %v2683
          %v2694 = vmul.f32 %v2594, %v2683
          %v2695 = vmul.f32 %v2595, %v2683
          %v2696 = vmul.f32 %v2596, %v2683
          %v2697 = vmul.f32 %v2597, %v2683
          %v2698 = vmul.f32 %v2598, %v2683
          %v2699 = vmul.f32 %v2599, %v2683
          %v2700 = vmul.f32 %v2600, %v2683
          %v2701 = vmul.f32 %v2601, %v2683
          %v2702 = vmul.f32 %v2602, %v2683
          %v2703 = vadd.f32 %v2487, %v2684
          %v2704 = vadd.f32 %v2488, %v2685
          %v2705 = vadd.f32 %v2489, %v2686
          %v2706 = vadd.f32 %v2490, %v2687
          %v2707 = vadd.f32 %v2491, %v2688
          %v2708 = vadd.f32 %v2492, %v2689
          %v2709 = vadd.f32 %v2493, %v2690
          %v2710 = vadd.f32 %v2494, %v2691
          %v2711 = vadd.f32 %v2495, %v2692
          %v2712 = vadd.f32 %v2496, %v2693
          %v2713 = vadd.f32 %v2497, %v2694
          %v2714 = vadd.f32 %v2498, %v2695
          %v2715 = vadd.f32 %v2499, %v2696
          %v2716 = vadd.f32 %v2500, %v2697
          %v2717 = vadd.f32 %v2501, %v2698
          %v2718 = vadd.f32 %v2502, %v2699
          %v2719 = vadd.f32 %v2503, %v2700
          %v2720 = vadd.f32 %v2504, %v2701
          %v2721 = vadd.f32 %v2505, %v2702
          %v2722 = vlaneseq
          %v2723 = vshrl.u32 %v2722, 7
          %v2724 = vsub.s32 1, %v2723
          %v2725 = vrot.slane %v2506, %v2724
          %v2726 = vmul.f32 %v2661, %v2725
          %v2727 = vmul.f32 %v2662, %v2725
          %v2728 = vmul.f32 %v2663, %v2725
          %v2729 = vmul.f32 %v2664, %v2725
          %v2730 = vmul.f32 %v2665, %v2725
          %v2731 = vmul.f32 %v2666, %v2725
          %v2732 = vmul.f32 %v2667, %v2725
          %v2733 = vmul.f32 %v2668, %v2725
          %v2734 = vmul.f32 %v2669, %v2725
          %v2735 = vmul.f32 %v2670, %v2725
          %v2736 = vmul.f32 %v2671, %v2725
          %v2737 = vmul.f32 %v2672, %v2725
          %v2738 = vmul.f32 %v2673, %v2725
          %v2739 = vmul.f32 %v2674, %v2725
          %v2740 = vmul.f32 %v2675, %v2725
          %v2741 = vmul.f32 %v2676, %v2725
          %v2742 = vmul.f32 %v2677, %v2725
          %v2743 = vmul.f32 %v2678, %v2725
          %v2744 = vmul.f32 %v2679, %v2725
          %v2745 = vadd.f32 %v2703, %v2726
          %v2746 = vadd.f32 %v2704, %v2727
          %v2747 = vadd.f32 %v2705, %v2728
          %v2748 = vadd.f32 %v2706, %v2729
          %v2749 = vadd.f32 %v2707, %v2730
          %v2750 = vadd.f32 %v2708, %v2731
          %v2751 = vadd.f32 %v2709, %v2732
          %v2752 = vadd.f32 %v2710, %v2733
          %v2753 = vadd.f32 %v2711, %v2734
          %v2754 = vadd.f32 %v2712, %v2735
          %v2755 = vadd.f32 %v2713, %v2736
          %v2756 = vadd.f32 %v2714, %v2737
          %v2757 = vadd.f32 %v2715, %v2738
          %v2758 = vadd.f32 %v2716, %v2739
          %v2759 = vadd.f32 %v2717, %v2740
          %v2760 = vadd.f32 %v2718, %v2741
          %v2761 = vadd.f32 %v2719, %v2742
          %v2762 = vadd.f32 %v2720, %v2743
          %v2763 = vadd.f32 %v2721, %v2744
          %s2764 = smul.u32 %s371, 152
          %s2765 = scalar_lea.vmem [#allocation2], %s2764
          %2766 = vst [vmem:[%s2765] sm:$0xff] %v2745
          %2767 = vst [vmem:[%s2765 + $0x8] sm:$0xff] %v2746
          %2768 = vst [vmem:[%s2765 + $0x10] sm:$0xff] %v2747
          %2769 = vst [vmem:[%s2765 + $0x18] sm:$0xff] %v2748
          %2770 = vst [vmem:[%s2765 + $0x20] sm:$0xff] %v2749
          %2771 = vst [vmem:[%s2765 + $0x28] sm:$0xff] %v2750
          %2772 = vst [vmem:[%s2765 + $0x30] sm:$0xff] %v2751
          %2773 = vst [vmem:[%s2765 + $0x38] sm:$0xff] %v2752
          %2774 = vst [vmem:[%s2765 + $0x40] sm:$0xff] %v2753
          %2775 = vst [vmem:[%s2765 + $0x48] sm:$0xff] %v2754
          %2776 = vst [vmem:[%s2765 + $0x50] sm:$0xff] %v2755
          %2777 = vst [vmem:[%s2765 + $0x58] sm:$0xff] %v2756
          %2778 = vst [vmem:[%s2765 + $0x60] sm:$0xff] %v2757
          %2779 = vst [vmem:[%s2765 + $0x68] sm:$0xff] %v2758
          %2780 = vst [vmem:[%s2765 + $0x70] sm:$0xff] %v2759
          %2781 = vst [vmem:[%s2765 + $0x78] sm:$0xff] %v2760
          %2782 = vst [vmem:[%s2765 + $0x80] sm:$0xff] %v2761
          %2783 = vst [vmem:[%s2765 + $0x88] sm:$0xff] %v2762
          %2784 = vst [vmem:[%s2765 + $0x90] sm:$0x3] %v2763
        $region86: #{tpu_custom_call.1} parent=73 // pred_fallthru
          _
        %p2785 = scmp.gt.s32.totalorder %s21, 0
        // Predicated region
        $region87: #{tpu_custom_call.1} parent=73 // pred_check
          %p2786 = pneg %p2785
        $region88: #{tpu_custom_call.1} parent=73 // pred_check_branch
          %2788 = sbr.rel (%p2786) target = $region90
        $region89: #{tpu_custom_call.1} parent=73 // pred_region
          %s2789 = ssub.s32 1, %s371
          %s2790 = smul.u32 %s2789, 152
          %s2791 = scalar_lea.vmem [#allocation2], %s2790
          %v2792 = vld [vmem:[%s2791] sm:$0xff]
          %v2793 = vld [vmem:[%s2791 + $0x8] sm:$0xff]
          %v2794 = vld [vmem:[%s2791 + $0x10] sm:$0xff]
          %v2795 = vld [vmem:[%s2791 + $0x18] sm:$0xff]
          %v2796 = vld [vmem:[%s2791 + $0x20] sm:$0xff]
          %v2797 = vld [vmem:[%s2791 + $0x28] sm:$0xff]
          %v2798 = vld [vmem:[%s2791 + $0x30] sm:$0xff]
          %v2799 = vld [vmem:[%s2791 + $0x38] sm:$0xff]
          %v2800 = vld [vmem:[%s2791 + $0x40] sm:$0xff]
          %v2801 = vld [vmem:[%s2791 + $0x48] sm:$0xff]
          %v2802 = vld [vmem:[%s2791 + $0x50] sm:$0xff]
          %v2803 = vld [vmem:[%s2791 + $0x58] sm:$0xff]
          %v2804 = vld [vmem:[%s2791 + $0x60] sm:$0xff]
          %v2805 = vld [vmem:[%s2791 + $0x68] sm:$0xff]
          %v2806 = vld [vmem:[%s2791 + $0x70] sm:$0xff]
          %v2807 = vld [vmem:[%s2791 + $0x78] sm:$0xff]
          %v2808 = vld [vmem:[%s2791 + $0x80] sm:$0xff]
          %v2809 = vld [vmem:[%s2791 + $0x88] sm:$0xff]
          %v2810 = vld [vmem:[%s2791 + $0x90] sm:$0x3]
          %v2811 = vld [vmem:[#allocation3] sm:$0xff]
          %v2812 = vld [vmem:[#allocation3 + $0x8] sm:$0xff]
          %v2813 = vld [vmem:[#allocation3 + $0x10] sm:$0xff]
          %v2814 = vld [vmem:[#allocation3 + $0x18] sm:$0xff]
          %v2815 = vld [vmem:[#allocation3 + $0x20] sm:$0xff]
          %v2816 = vld [vmem:[#allocation3 + $0x28] sm:$0xff]
          %v2817 = vld [vmem:[#allocation3 + $0x30] sm:$0xff]
          %v2818 = vld [vmem:[#allocation3 + $0x38] sm:$0xff]
          %v2819 = vld [vmem:[#allocation3 + $0x40] sm:$0xff]
          %v2820 = vld [vmem:[#allocation3 + $0x48] sm:$0xff]
          %v2821 = vld [vmem:[#allocation3 + $0x50] sm:$0xff]
          %v2822 = vld [vmem:[#allocation3 + $0x58] sm:$0xff]
          %v2823 = vld [vmem:[#allocation3 + $0x60] sm:$0xff]
          %v2824 = vld [vmem:[#allocation3 + $0x68] sm:$0xff]
          %v2825 = vld [vmem:[#allocation3 + $0x70] sm:$0xff]
          %v2826 = vld [vmem:[#allocation3 + $0x78] sm:$0xff]
          %v2827 = vld [vmem:[#allocation3 + $0x80] sm:$0xff]
          %v2828 = vld [vmem:[#allocation3 + $0x88] sm:$0xff]
          %v2829 = vld [vmem:[#allocation3 + $0x90] sm:$0x3]
          %s2830 = scalar_select %p397, 1, 0
          %s2831 = scvt.s32.f32 %s2830
          %s2832 = smul.u32 %s371, 152
          %s2833 = scalar_lea.vmem [#allocation2], %s2832
          %v2834 = vld [vmem:[%s2833] sm:$0xff]
          %v2835 = vld [vmem:[%s2833 + $0x8] sm:$0xff]
          %v2836 = vld [vmem:[%s2833 + $0x10] sm:$0xff]
          %v2837 = vld [vmem:[%s2833 + $0x18] sm:$0xff]
          %v2838 = vld [vmem:[%s2833 + $0x20] sm:$0xff]
          %v2839 = vld [vmem:[%s2833 + $0x28] sm:$0xff]
          %v2840 = vld [vmem:[%s2833 + $0x30] sm:$0xff]
          %v2841 = vld [vmem:[%s2833 + $0x38] sm:$0xff]
          %v2842 = vld [vmem:[%s2833 + $0x40] sm:$0xff]
          %v2843 = vld [vmem:[%s2833 + $0x48] sm:$0xff]
          %v2844 = vld [vmem:[%s2833 + $0x50] sm:$0xff]
          %v2845 = vld [vmem:[%s2833 + $0x58] sm:$0xff]
          %v2846 = vld [vmem:[%s2833 + $0x60] sm:$0xff]
          %v2847 = vld [vmem:[%s2833 + $0x68] sm:$0xff]
          %v2848 = vld [vmem:[%s2833 + $0x70] sm:$0xff]
          %v2849 = vld [vmem:[%s2833 + $0x78] sm:$0xff]
          %v2850 = vld [vmem:[%s2833 + $0x80] sm:$0xff]
          %v2851 = vld [vmem:[%s2833 + $0x88] sm:$0xff]
          %v2852 = vld [vmem:[%s2833 + $0x90] sm:$0x3]
          %v2853 = vstv %s2831
          %v2854 = vmul.f32 %v2834, %v2853
          %v2855 = vmul.f32 %v2835, %v2853
          %v2856 = vmul.f32 %v2836, %v2853
          %v2857 = vmul.f32 %v2837, %v2853
          %v2858 = vmul.f32 %v2838, %v2853
          %v2859 = vmul.f32 %v2839, %v2853
          %v2860 = vmul.f32 %v2840, %v2853
          %v2861 = vmul.f32 %v2841, %v2853
          %v2862 = vmul.f32 %v2842, %v2853
          %v2863 = vmul.f32 %v2843, %v2853
          %v2864 = vmul.f32 %v2844, %v2853
          %v2865 = vmul.f32 %v2845, %v2853
          %v2866 = vmul.f32 %v2846, %v2853
          %v2867 = vmul.f32 %v2847, %v2853
          %v2868 = vmul.f32 %v2848, %v2853
          %v2869 = vmul.f32 %v2849, %v2853
          %v2870 = vmul.f32 %v2850, %v2853
          %v2871 = vmul.f32 %v2851, %v2853
          %v2872 = vmul.f32 %v2852, %v2853
          %2892 = vrot.lane.b32.xlu0 %v2792, 16
          %v2893 = vpop.permute.xlu0 %2892
          %2894 = vrot.lane.b32.xlu0 %v2793, 16
          %v2895 = vpop.permute.xlu0 %2894
          %2896 = vrot.lane.b32.xlu0 %v2794, 16
          %v2897 = vpop.permute.xlu0 %2896
          %2898 = vrot.lane.b32.xlu0 %v2795, 16
          %v2899 = vpop.permute.xlu0 %2898
          %2900 = vrot.lane.b32.xlu0 %v2796, 16
          %v2901 = vpop.permute.xlu0 %2900
          %2902 = vrot.lane.b32.xlu0 %v2797, 16
          %v2903 = vpop.permute.xlu0 %2902
          %2904 = vrot.lane.b32.xlu0 %v2798, 16
          %v2905 = vpop.permute.xlu0 %2904
          %2906 = vrot.lane.b32.xlu0 %v2799, 16
          %v2907 = vpop.permute.xlu0 %2906
          %2908 = vrot.lane.b32.xlu0 %v2800, 16
          %v2909 = vpop.permute.xlu0 %2908
          %2910 = vrot.lane.b32.xlu0 %v2801, 16
          %v2911 = vpop.permute.xlu0 %2910
          %2912 = vrot.lane.b32.xlu0 %v2802, 16
          %v2913 = vpop.permute.xlu0 %2912
          %2914 = vrot.lane.b32.xlu0 %v2803, 16
          %v2915 = vpop.permute.xlu0 %2914
          %2916 = vrot.lane.b32.xlu0 %v2804, 16
          %v2917 = vpop.permute.xlu0 %2916
          %2918 = vrot.lane.b32.xlu0 %v2805, 16
          %v2919 = vpop.permute.xlu0 %2918
          %2920 = vrot.lane.b32.xlu0 %v2806, 16
          %v2921 = vpop.permute.xlu0 %2920
          %2922 = vrot.lane.b32.xlu0 %v2807, 16
          %v2923 = vpop.permute.xlu0 %2922
          %2924 = vrot.lane.b32.xlu0 %v2808, 16
          %v2925 = vpop.permute.xlu0 %2924
          %2926 = vrot.lane.b32.xlu0 %v2809, 16
          %v2927 = vpop.permute.xlu0 %2926
          %2928 = vrot.lane.b32.xlu0 %v2810, 16
          %v2929 = vpop.permute.xlu0 %2928
          %vm2949 = vcmask 130048
          %v2950 = vsel %vm2949, %v2811, %v2893
          %v2951 = vsel %vm2949, %v2812, %v2895
          %v2952 = vsel %vm2949, %v2813, %v2897
          %v2953 = vsel %vm2949, %v2814, %v2899
          %v2954 = vsel %vm2949, %v2815, %v2901
          %v2955 = vsel %vm2949, %v2816, %v2903
          %v2956 = vsel %vm2949, %v2817, %v2905
          %v2957 = vsel %vm2949, %v2818, %v2907
          %v2958 = vsel %vm2949, %v2819, %v2909
          %v2959 = vsel %vm2949, %v2820, %v2911
          %v2960 = vsel %vm2949, %v2821, %v2913
          %v2961 = vsel %vm2949, %v2822, %v2915
          %v2962 = vsel %vm2949, %v2823, %v2917
          %v2963 = vsel %vm2949, %v2824, %v2919
          %v2964 = vsel %vm2949, %v2825, %v2921
          %v2965 = vsel %vm2949, %v2826, %v2923
          %v2966 = vsel %vm2949, %v2827, %v2925
          %v2967 = vsel %vm2949, %v2828, %v2927
          %v2968 = vsel %vm2949, %v2829, %v2929
          %2969 = vrot.lane.b32.xlu0 %v2792, 112
          %v2970 = vpop.permute.xlu0 %2969
          %2971 = vrot.lane.b32.xlu0 %v2793, 112
          %v2972 = vpop.permute.xlu0 %2971
          %2973 = vrot.lane.b32.xlu0 %v2794, 112
          %v2974 = vpop.permute.xlu0 %2973
          %2975 = vrot.lane.b32.xlu0 %v2795, 112
          %v2976 = vpop.permute.xlu0 %2975
          %2977 = vrot.lane.b32.xlu0 %v2796, 112
          %v2978 = vpop.permute.xlu0 %2977
          %2979 = vrot.lane.b32.xlu0 %v2797, 112
          %v2980 = vpop.permute.xlu0 %2979
          %2981 = vrot.lane.b32.xlu0 %v2798, 112
          %v2982 = vpop.permute.xlu0 %2981
          %2983 = vrot.lane.b32.xlu0 %v2799, 112
          %v2984 = vpop.permute.xlu0 %2983
          %2985 = vrot.lane.b32.xlu0 %v2800, 112
          %v2986 = vpop.permute.xlu0 %2985
          %2987 = vrot.lane.b32.xlu0 %v2801, 112
          %v2988 = vpop.permute.xlu0 %2987
          %2989 = vrot.lane.b32.xlu0 %v2802, 112
          %v2990 = vpop.permute.xlu0 %2989
          %2991 = vrot.lane.b32.xlu0 %v2803, 112
          %v2992 = vpop.permute.xlu0 %2991
          %2993 = vrot.lane.b32.xlu0 %v2804, 112
          %v2994 = vpop.permute.xlu0 %2993
          %2995 = vrot.lane.b32.xlu0 %v2805, 112
          %v2996 = vpop.permute.xlu0 %2995
          %2997 = vrot.lane.b32.xlu0 %v2806, 112
          %v2998 = vpop.permute.xlu0 %2997
          %2999 = vrot.lane.b32.xlu0 %v2807, 112
          %v3000 = vpop.permute.xlu0 %2999
          %3001 = vrot.lane.b32.xlu0 %v2808, 112
          %v3002 = vpop.permute.xlu0 %3001
          %3003 = vrot.lane.b32.xlu0 %v2809, 112
          %v3004 = vpop.permute.xlu0 %3003
          %3005 = vrot.lane.b32.xlu0 %v2810, 112
          %v3006 = vpop.permute.xlu0 %3005
          %3045 = vrot.lane.b32.xlu0 %v2854, 112
          %v3046 = vpop.permute.xlu0 %3045
          %3047 = vrot.lane.b32.xlu0 %v2855, 112
          %v3048 = vpop.permute.xlu0 %3047
          %3049 = vrot.lane.b32.xlu0 %v2856, 112
          %v3050 = vpop.permute.xlu0 %3049
          %3051 = vrot.lane.b32.xlu0 %v2857, 112
          %v3052 = vpop.permute.xlu0 %3051
          %3053 = vrot.lane.b32.xlu0 %v2858, 112
          %v3054 = vpop.permute.xlu0 %3053
          %3055 = vrot.lane.b32.xlu0 %v2859, 112
          %v3056 = vpop.permute.xlu0 %3055
          %3057 = vrot.lane.b32.xlu0 %v2860, 112
          %v3058 = vpop.permute.xlu0 %3057
          %3059 = vrot.lane.b32.xlu0 %v2861, 112
          %v3060 = vpop.permute.xlu0 %3059
          %3061 = vrot.lane.b32.xlu0 %v2862, 112
          %v3062 = vpop.permute.xlu0 %3061
          %3063 = vrot.lane.b32.xlu0 %v2863, 112
          %v3064 = vpop.permute.xlu0 %3063
          %3065 = vrot.lane.b32.xlu0 %v2864, 112
          %v3066 = vpop.permute.xlu0 %3065
          %3067 = vrot.lane.b32.xlu0 %v2865, 112
          %v3068 = vpop.permute.xlu0 %3067
          %3069 = vrot.lane.b32.xlu0 %v2866, 112
          %v3070 = vpop.permute.xlu0 %3069
          %3071 = vrot.lane.b32.xlu0 %v2867, 112
          %v3072 = vpop.permute.xlu0 %3071
          %3073 = vrot.lane.b32.xlu0 %v2868, 112
          %v3074 = vpop.permute.xlu0 %3073
          %3075 = vrot.lane.b32.xlu0 %v2869, 112
          %v3076 = vpop.permute.xlu0 %3075
          %3077 = vrot.lane.b32.xlu0 %v2870, 112
          %v3078 = vpop.permute.xlu0 %3077
          %3079 = vrot.lane.b32.xlu0 %v2871, 112
          %v3080 = vpop.permute.xlu0 %3079
          %3081 = vrot.lane.b32.xlu0 %v2872, 112
          %v3082 = vpop.permute.xlu0 %3081
          %vm3102 = vcmask 916480
          %v3103 = vsel %vm3102, %v2970, %v3046
          %v3104 = vsel %vm3102, %v2972, %v3048
          %v3105 = vsel %vm3102, %v2974, %v3050
          %v3106 = vsel %vm3102, %v2976, %v3052
          %v3107 = vsel %vm3102, %v2978, %v3054
          %v3108 = vsel %vm3102, %v2980, %v3056
          %v3109 = vsel %vm3102, %v2982, %v3058
          %v3110 = vsel %vm3102, %v2984, %v3060
          %v3111 = vsel %vm3102, %v2986, %v3062
          %v3112 = vsel %vm3102, %v2988, %v3064
          %v3113 = vsel %vm3102, %v2990, %v3066
          %v3114 = vsel %vm3102, %v2992, %v3068
          %v3115 = vsel %vm3102, %v2994, %v3070
          %v3116 = vsel %vm3102, %v2996, %v3072
          %v3117 = vsel %vm3102, %v2998, %v3074
          %v3118 = vsel %vm3102, %v3000, %v3076
          %v3119 = vsel %vm3102, %v3002, %v3078
          %v3120 = vsel %vm3102, %v3004, %v3080
          %v3121 = vsel %vm3102, %v3006, %v3082
          %v3122 = vadd.f32 %v2792, %v2950
          %v3123 = vadd.f32 %v2793, %v2951
          %v3124 = vadd.f32 %v2794, %v2952
          %v3125 = vadd.f32 %v2795, %v2953
          %v3126 = vadd.f32 %v2796, %v2954
          %v3127 = vadd.f32 %v2797, %v2955
          %v3128 = vadd.f32 %v2798, %v2956
          %v3129 = vadd.f32 %v2799, %v2957
          %v3130 = vadd.f32 %v2800, %v2958
          %v3131 = vadd.f32 %v2801, %v2959
          %v3132 = vadd.f32 %v2802, %v2960
          %v3133 = vadd.f32 %v2803, %v2961
          %v3134 = vadd.f32 %v2804, %v2962
          %v3135 = vadd.f32 %v2805, %v2963
          %v3136 = vadd.f32 %v2806, %v2964
          %v3137 = vadd.f32 %v2807, %v2965
          %v3138 = vadd.f32 %v2808, %v2966
          %v3139 = vadd.f32 %v2809, %v2967
          %v3140 = vadd.f32 %v2810, %v2968
          %v3141 = vadd.f32 %v3122, %v3103
          %v3142 = vadd.f32 %v3123, %v3104
          %v3143 = vadd.f32 %v3124, %v3105
          %v3144 = vadd.f32 %v3125, %v3106
          %v3145 = vadd.f32 %v3126, %v3107
          %v3146 = vadd.f32 %v3127, %v3108
          %v3147 = vadd.f32 %v3128, %v3109
          %v3148 = vadd.f32 %v3129, %v3110
          %v3149 = vadd.f32 %v3130, %v3111
          %v3150 = vadd.f32 %v3131, %v3112
          %v3151 = vadd.f32 %v3132, %v3113
          %v3152 = vadd.f32 %v3133, %v3114
          %v3153 = vadd.f32 %v3134, %v3115
          %v3154 = vadd.f32 %v3135, %v3116
          %v3155 = vadd.f32 %v3136, %v3117
          %v3156 = vadd.f32 %v3137, %v3118
          %v3157 = vadd.f32 %v3138, %v3119
          %v3158 = vadd.f32 %v3139, %v3120
          %v3159 = vadd.f32 %v3140, %v3121
          %3160 = vst [vmem:[%s354] sm:$0xff] %v3141
          %3161 = vst [vmem:[%s354 + $0x8] sm:$0xff] %v3142
          %3162 = vst [vmem:[%s354 + $0x10] sm:$0xff] %v3143
          %3163 = vst [vmem:[%s354 + $0x18] sm:$0xff] %v3144
          %3164 = vst [vmem:[%s354 + $0x20] sm:$0xff] %v3145
          %3165 = vst [vmem:[%s354 + $0x28] sm:$0xff] %v3146
          %3166 = vst [vmem:[%s354 + $0x30] sm:$0xff] %v3147
          %3167 = vst [vmem:[%s354 + $0x38] sm:$0xff] %v3148
          %3168 = vst [vmem:[%s354 + $0x40] sm:$0xff] %v3149
          %3169 = vst [vmem:[%s354 + $0x48] sm:$0xff] %v3150
          %3170 = vst [vmem:[%s354 + $0x50] sm:$0xff] %v3151
          %3171 = vst [vmem:[%s354 + $0x58] sm:$0xff] %v3152
          %3172 = vst [vmem:[%s354 + $0x60] sm:$0xff] %v3153
          %3173 = vst [vmem:[%s354 + $0x68] sm:$0xff] %v3154
          %3174 = vst [vmem:[%s354 + $0x70] sm:$0xff] %v3155
          %3175 = vst [vmem:[%s354 + $0x78] sm:$0xff] %v3156
          %3176 = vst [vmem:[%s354 + $0x80] sm:$0xff] %v3157
          %3177 = vst [vmem:[%s354 + $0x88] sm:$0xff] %v3158
          %3178 = vst [vmem:[%s354 + $0x90] sm:$0x3] %v3159
          %3179 = vst.msk [vmem:[#allocation3] sm:$0xff] %vm2949, %v2893
          %3180 = vst.msk [vmem:[#allocation3 + $0x8] sm:$0xff] %vm2949, %v2895
          %3181 = vst.msk [vmem:[#allocation3 + $0x10] sm:$0xff] %vm2949, %v2897
          %3182 = vst.msk [vmem:[#allocation3 + $0x18] sm:$0xff] %vm2949, %v2899
          %3183 = vst.msk [vmem:[#allocation3 + $0x20] sm:$0xff] %vm2949, %v2901
          %3184 = vst.msk [vmem:[#allocation3 + $0x28] sm:$0xff] %vm2949, %v2903
          %3185 = vst.msk [vmem:[#allocation3 + $0x30] sm:$0xff] %vm2949, %v2905
          %3186 = vst.msk [vmem:[#allocation3 + $0x38] sm:$0xff] %vm2949, %v2907
          %3187 = vst.msk [vmem:[#allocation3 + $0x40] sm:$0xff] %vm2949, %v2909
          %3188 = vst.msk [vmem:[#allocation3 + $0x48] sm:$0xff] %vm2949, %v2911
          %3189 = vst.msk [vmem:[#allocation3 + $0x50] sm:$0xff] %vm2949, %v2913
          %3190 = vst.msk [vmem:[#allocation3 + $0x58] sm:$0xff] %vm2949, %v2915
          %3191 = vst.msk [vmem:[#allocation3 + $0x60] sm:$0xff] %vm2949, %v2917
          %3192 = vst.msk [vmem:[#allocation3 + $0x68] sm:$0xff] %vm2949, %v2919
          %3193 = vst.msk [vmem:[#allocation3 + $0x70] sm:$0xff] %vm2949, %v2921
          %3194 = vst.msk [vmem:[#allocation3 + $0x78] sm:$0xff] %vm2949, %v2923
          %3195 = vst.msk [vmem:[#allocation3 + $0x80] sm:$0xff] %vm2949, %v2925
          %3196 = vst.msk [vmem:[#allocation3 + $0x88] sm:$0xff] %vm2949, %v2927
          %vm3197 = vcmask 123904
          %3198 = vst.msk [vmem:[#allocation3 + $0x90] sm:$0x3] %vm3197, %v2929
        $region90: #{tpu_custom_call.1} parent=73 // pred_fallthru
          _
        %s3199 = sand.u32 %s160, 1
        %s3200 = sand.u32 %s160, 1
        %s3201 = smul.addr %s3200, 152
        %s3202 = scalar_lea.vmem [#allocation5], %s3201
        // Predicated region
        $region91: #{tpu_custom_call.1} parent=73 // pred_check
          %p3203 = pneg %p170
        $region92: #{tpu_custom_call.1} parent=73 // pred_check_branch
          %3205 = sbr.rel (%p3203) target = $region94
        $region93: #{tpu_custom_call.1} parent=73 // pred_region
          %s3206 = ssub.s32 %s21, 1
          %p3207 = scmp.gt.s32.totalorder %s3206, 0
          %s3208 = scalar_select %p3207, %s3206, 0
          %s3209 = smul.addr %s20, 38
          %s3210 = sadd.s32 %s3208, %s3209
          %s3211 = smul.addr %s3210, 8
          %s3212 = scalar_lea.vmem %s5, %s3211
          // Predicated region
          $region95: #{tpu_custom_call.1} parent=93 // pred_check
            _
          $region96: #{tpu_custom_call.1} parent=93 // pred_check_branch
            %3214 = sbr.rel (0) target = $region98
          $region97: #{tpu_custom_call.1} parent=93 // pred_region
            // Predicated region
            $region99: #{tpu_custom_call.1} parent=97 // pred_check
              _
            $region100: #{tpu_custom_call.1} parent=97 // pred_check_branch
              %3216 = sbr.rel (0) target = $region102
            $region101: #{tpu_custom_call.1} parent=97 // pred_region
              // Predicated region
              $region114: #{tpu_custom_call.1} parent=101 // pred_check
                _
              $region115: #{tpu_custom_call.1} parent=101 // pred_check_branch
                %3267 = sbr.rel (0) target = $region117
              $region116: #{tpu_custom_call.1} parent=101 // pred_region
                loop: start=0, step=1, limit=1
                $region118: #{tpu_custom_call.1} parent=116 // loop_pre_header
                  _
                $region119: #{tpu_custom_call.1} parent=116 // loop_header
                  %s3269 = sphi 0, %s3273
                  %p3270 = scmp.ge.s32.totalorder %s3269, 1
                  %s3274 = sphi %s3202, %s3202
                  %s3275 = sphi %s3212, %s3212
                $region120: #{tpu_custom_call.1} parent=116 // loop_header_branch
                  %3272 = sbr.rel (%p3270) target = $region124
                $region121: #{tpu_custom_call.1} parent=116 // loop_body
                  %v3276 = vld [vmem:[%s3274] sm:$0xff]
                  %3277 = vst [vmem:[%s3275] sm:$0xff] %v3276
                  %v3278 = vld [vmem:[%s3274 + $0x8] sm:$0xff]
                  %3279 = vst [vmem:[%s3275 + $0x10] sm:$0xff] %v3278
                  %v3280 = vld [vmem:[%s3274 + $0x10] sm:$0xff]
                  %3281 = vst [vmem:[%s3275 + $0x20] sm:$0xff] %v3280
                  %v3282 = vld [vmem:[%s3274 + $0x18] sm:$0xff]
                  %3283 = vst [vmem:[%s3275 + $0x30] sm:$0xff] %v3282
                  %v3284 = vld [vmem:[%s3274 + $0x20] sm:$0xff]
                  %3285 = vst [vmem:[%s3275 + $0x40] sm:$0xff] %v3284
                  %v3286 = vld [vmem:[%s3274 + $0x28] sm:$0xff]
                  %3287 = vst [vmem:[%s3275 + $0x50] sm:$0xff] %v3286
                  %v3288 = vld [vmem:[%s3274 + $0x30] sm:$0xff]
                  %3289 = vst [vmem:[%s3275 + $0x60] sm:$0xff] %v3288
                  %v3290 = vld [vmem:[%s3274 + $0x38] sm:$0xff]
                  %3291 = vst [vmem:[%s3275 + $0x70] sm:$0xff] %v3290
                  %v3292 = vld [vmem:[%s3274 + $0x40] sm:$0xff]
                  %3293 = vst [vmem:[%s3275 + $0x80] sm:$0xff] %v3292
                  %v3294 = vld [vmem:[%s3274 + $0x48] sm:$0xff]
                  %3295 = vst [vmem:[%s3275 + $0x90] sm:$0xff] %v3294
                  %v3296 = vld [vmem:[%s3274 + $0x50] sm:$0xff]
                  %3297 = vst [vmem:[%s3275 + $0xa0] sm:$0xff] %v3296
                  %v3298 = vld [vmem:[%s3274 + $0x58] sm:$0xff]
                  %3299 = vst [vmem:[%s3275 + $0xb0] sm:$0xff] %v3298
                  %v3300 = vld [vmem:[%s3274 + $0x60] sm:$0xff]
                  %3301 = vst [vmem:[%s3275 + $0xc0] sm:$0xff] %v3300
                  %v3302 = vld [vmem:[%s3274 + $0x68] sm:$0xff]
                  %3303 = vst [vmem:[%s3275 + $0xd0] sm:$0xff] %v3302
                  %v3304 = vld [vmem:[%s3274 + $0x70] sm:$0xff]
                  %3305 = vst [vmem:[%s3275 + $0xe0] sm:$0xff] %v3304
                  %v3306 = vld [vmem:[%s3274 + $0x78] sm:$0xff]
                  %3307 = vst [vmem:[%s3275 + $0xf0] sm:$0xff] %v3306
                  %v3308 = vld [vmem:[%s3274 + $0x80] sm:$0xff]
                  %3309 = vst [vmem:[%s3275 + $0x100] sm:$0xff] %v3308
                  %v3310 = vld [vmem:[%s3274 + $0x88] sm:$0xff]
                  %3311 = vst [vmem:[%s3275 + $0x110] sm:$0xff] %v3310
                  %v3312 = vld [vmem:[%s3274 + $0x90] sm:$0xff]
                  %3313 = vst [vmem:[%s3275 + $0x120] sm:$0xff] %v3312
                $region122: #{tpu_custom_call.1} parent=116 // loop_footer
                  %s3273 = sadd.s32 1, %s3269
                $region123: #{tpu_custom_call.1} parent=116 // loop_footer_branch
                  %3268 = sbr.rel target = $region119
                $region124: #{tpu_custom_call.1} parent=116 // loop_exit
                  _
              $region117: #{tpu_custom_call.1} parent=101 // pred_fallthru
                _
              // Predicated region
              $region125: #{tpu_custom_call.1} parent=101 // pred_check
                _
              $region126: #{tpu_custom_call.1} parent=101 // pred_check_branch
                %3315 = sbr.rel target = $region128
              $region127: #{tpu_custom_call.1} parent=101 // pred_region
                _
              $region128: #{tpu_custom_call.1} parent=101 // pred_fallthru
                _
            $region102: #{tpu_custom_call.1} parent=97 // pred_fallthru
              _
            // Predicated region
            $region103: #{tpu_custom_call.1} parent=97 // pred_check
              _
            $region104: #{tpu_custom_call.1} parent=97 // pred_check_branch
              %3218 = sbr.rel target = $region106
            $region105: #{tpu_custom_call.1} parent=97 // pred_region
              loop: start=0, step=1, limit=1
              $region107: #{tpu_custom_call.1} parent=105 // loop_pre_header
                _
              $region108: #{tpu_custom_call.1} parent=105 // loop_header
                %s3221 = sphi 0, %s3225
                %p3222 = scmp.ge.s32.totalorder %s3221, 1
                %s3226 = sphi %s3202, %s3202
                %s3227 = sphi %s3212, %s3212
              $region109: #{tpu_custom_call.1} parent=105 // loop_header_branch
                %3224 = sbr.rel (%p3222) target = $region113
              $region110: #{tpu_custom_call.1} parent=105 // loop_body
                %v3228 = vld [vmem:[%s3226] sm:$0xff]
                %3229 = vst [vmem:[%s3227] sm:$0xff] %v3228
                %v3230 = vld [vmem:[%s3226 + $0x8] sm:$0xff]
                %3231 = vst [vmem:[%s3227 + $0x10] sm:$0xff] %v3230
                %v3232 = vld [vmem:[%s3226 + $0x10] sm:$0xff]
                %3233 = vst [vmem:[%s3227 + $0x20] sm:$0xff] %v3232
                %v3234 = vld [vmem:[%s3226 + $0x18] sm:$0xff]
                %3235 = vst [vmem:[%s3227 + $0x30] sm:$0xff] %v3234
                %v3236 = vld [vmem:[%s3226 + $0x20] sm:$0xff]
                %3237 = vst [vmem:[%s3227 + $0x40] sm:$0xff] %v3236
                %v3238 = vld [vmem:[%s3226 + $0x28] sm:$0xff]
                %3239 = vst [vmem:[%s3227 + $0x50] sm:$0xff] %v3238
                %v3240 = vld [vmem:[%s3226 + $0x30] sm:$0xff]
                %3241 = vst [vmem:[%s3227 + $0x60] sm:$0xff] %v3240
                %v3242 = vld [vmem:[%s3226 + $0x38] sm:$0xff]
                %3243 = vst [vmem:[%s3227 + $0x70] sm:$0xff] %v3242
                %v3244 = vld [vmem:[%s3226 + $0x40] sm:$0xff]
                %3245 = vst [vmem:[%s3227 + $0x80] sm:$0xff] %v3244
                %v3246 = vld [vmem:[%s3226 + $0x48] sm:$0xff]
                %3247 = vst [vmem:[%s3227 + $0x90] sm:$0xff] %v3246
                %v3248 = vld [vmem:[%s3226 + $0x50] sm:$0xff]
                %3249 = vst [vmem:[%s3227 + $0xa0] sm:$0xff] %v3248
                %v3250 = vld [vmem:[%s3226 + $0x58] sm:$0xff]
                %3251 = vst [vmem:[%s3227 + $0xb0] sm:$0xff] %v3250
                %v3252 = vld [vmem:[%s3226 + $0x60] sm:$0xff]
                %3253 = vst [vmem:[%s3227 + $0xc0] sm:$0xff] %v3252
                %v3254 = vld [vmem:[%s3226 + $0x68] sm:$0xff]
                %3255 = vst [vmem:[%s3227 + $0xd0] sm:$0xff] %v3254
                %v3256 = vld [vmem:[%s3226 + $0x70] sm:$0xff]
                %3257 = vst [vmem:[%s3227 + $0xe0] sm:$0xff] %v3256
                %v3258 = vld [vmem:[%s3226 + $0x78] sm:$0xff]
                %3259 = vst [vmem:[%s3227 + $0xf0] sm:$0xff] %v3258
                %v3260 = vld [vmem:[%s3226 + $0x80] sm:$0xff]
                %3261 = vst [vmem:[%s3227 + $0x100] sm:$0xff] %v3260
                %v3262 = vld [vmem:[%s3226 + $0x88] sm:$0xff]
                %3263 = vst [vmem:[%s3227 + $0x110] sm:$0xff] %v3262
                %v3264 = vld [vmem:[%s3226 + $0x90] sm:$0xff]
                %3265 = vst [vmem:[%s3227 + $0x120] sm:$0xff] %v3264
              $region111: #{tpu_custom_call.1} parent=105 // loop_footer
                %s3225 = sadd.s32 1, %s3221
              $region112: #{tpu_custom_call.1} parent=105 // loop_footer_branch
                %3220 = sbr.rel target = $region108
              $region113: #{tpu_custom_call.1} parent=105 // loop_exit
                _
            $region106: #{tpu_custom_call.1} parent=97 // pred_fallthru
              _
          $region98: #{tpu_custom_call.1} parent=93 // pred_fallthru
            _
          %3316 = vnop
        $region94: #{tpu_custom_call.1} parent=73 // pred_fallthru
          _
      $region74: #{tpu_custom_call.1} parent=5 // pred_fallthru
        _
      %p3317 = scmp.le.s32.totalorder 2, %s11
      // Predicated region
      $region129: #{tpu_custom_call.1} parent=5 // pred_check
        %p3318 = pneg %p3317
      $region130: #{tpu_custom_call.1} parent=5 // pred_check_branch
        %3320 = sbr.rel (%p3318) target = $region132
      $region131: #{tpu_custom_call.1} parent=5 // pred_region
        %s3321 = ssub.s32 %s11, 2
        // Predicated region
        $region133: #{tpu_custom_call.1} parent=131 // pred_check
          %p3322 = pneg %p176
        $region134: #{tpu_custom_call.1} parent=131 // pred_check_branch
          %3324 = sbr.rel (%p3322) target = $region136
        $region135: #{tpu_custom_call.1} parent=131 // pred_region
          %s3325 = sand.u32 %s161, 1
          %s3326 = sand.u32 %s161, 1
          %s3327 = smul.addr %s3326, 152
          %s3328 = scalar_lea.vmem [#allocation5], %s3327
        $region136: #{tpu_custom_call.1} parent=131 // pred_fallthru
          _
      $region132: #{tpu_custom_call.1} parent=5 // pred_fallthru
        _
    $region6: #{tpu_custom_call.1} parent=1 // loop_footer
      %s15 = sadd.s32 1, %s11
    $region7: #{tpu_custom_call.1} parent=1 // loop_footer_branch
      %10 = sbr.rel target = $region3
    $region8: #{tpu_custom_call.1} parent=1 // loop_exit
      _

</llo_original>
